<compile_context>
chip_gen: v7x
topology: tpu7x:2x2x1
jax: 0.10.0
libtpu: 0.0.40
codegen_flags: <defaults>
</compile_context>

<pallas_src>
from functools import partial

import jax
import jax.numpy as jnp
from jax import lax
from jax.experimental import pallas as pl
from jax.experimental.pallas import tpu as pltpu

# contract last dim of activation with last dim of a torch-layout (N, K) weight
_DN = (((1,), (1,)), ((), ()))
# standard a @ b contraction
_DN_STD = (((1,), (0,)), ((), ()))
_BF16 = jnp.bfloat16
_VMEM_LIMIT = 32 * 1024 * 1024   # explicit scoped-VMEM budget (raises v5e's 16 MiB default)


# ----------------------------------------------------------------------------
# Pallas kernels
# ----------------------------------------------------------------------------

def _qkv_proj_kernel(x0_ref, x1_ref, wqkv_ref, qkv_ref):
    # qkv_ref: (3, TM, C) bf16; wqkv_ref: (3, C, C) bf16 torch layout (out, in).
    # Wq already carries the 1/sqrt(C) attention scale.
    x0 = x0_ref[...].astype(_BF16)
    x1 = x1_ref[...].astype(_BF16)
    qkv_ref[0] = lax.dot_general(x0, wqkv_ref[0], _DN,
                                 preferred_element_type=jnp.float32).astype(qkv_ref.dtype)
    qkv_ref[1] = lax.dot_general(x1, wqkv_ref[1], _DN,
                                 preferred_element_type=jnp.float32).astype(qkv_ref.dtype)
    qkv_ref[2] = lax.dot_general(x1, wqkv_ref[2], _DN,
                                 preferred_element_type=jnp.float32).astype(qkv_ref.dtype)


def _window_attn_kernel(*refs, use_mask):
    # refs: (qkv_ref[, mask_ref], o_ref)
    # qkv_ref: (3, wblk, S, C) bf16; mask_ref: (wblk, S, S) f32; o_ref: (wblk, S, C) bf16
    if use_mask:
        qkv_ref, mask_ref, o_ref = refs
    else:
        (qkv_ref, o_ref), mask_ref = refs, None
    q = qkv_ref[0]
    k = qkv_ref[1]
    v = qkv_ref[2]
    s = jnp.einsum("bqd,bkd->bqk", q, k, preferred_element_type=jnp.float32)
    if use_mask:
        s = s + mask_ref[...]
    s = s - jnp.max(s, axis=-1, keepdims=True)
    p = jnp.exp(s)
    # approx reciprocal on the EUP: small relative error vs exact softmax.
    p = p * pl.reciprocal(jnp.sum(p, axis=-1, keepdims=True), approx=True)
    o = jnp.einsum("bqk,bkd->bqd", p.astype(_BF16), v,
                   preferred_element_type=jnp.float32)
    o_ref[...] = o.astype(o_ref.dtype)


def _layernorm(x, g, b, eps):
    mu = jnp.mean(x, axis=-1, keepdims=True)
    var = jnp.mean((x - mu) ** 2, axis=-1, keepdims=True)
    return (x - mu) * lax.rsqrt(var + eps) * g + b


def _tail_kernel(f0_ref, attn_ref, wfc_ref, lng_ref, lnb_ref,
                 w1a_ref, w1b_ref, w2t_ref, ffg_ref, ffb_ref, o_ref,
                 *, eps, h_chunk, n_chunks):
    # out = feat0 + LN( GELU( feat0 @ W1a.T + LN(attn @ Wfc.T) @ W1b.T ) @ W2.T )
    # The MLP hidden dim is processed in (tm, h_chunk) slices so the live
    # intermediate stays small (no vreg->VMEM spill at large H).
    f0 = f0_ref[...]                                   # (tm, C) f32
    f0_bf = f0.astype(_BF16)

    y = lax.dot_general(attn_ref[...], wfc_ref[...], _DN,
                        preferred_element_type=jnp.float32)
    y = _layernorm(y, lng_ref[...], lnb_ref[...], eps)
    y_bf = y.astype(_BF16)

    tm, C = f0.shape

    def body(j, z):
        hs = pl.multiple_of(j * h_chunk, h_chunk)
        w1a = w1a_ref[pl.ds(hs, h_chunk), :]           # (Hc, C) bf16
        w1b = w1b_ref[pl.ds(hs, h_chunk), :]
        h = (lax.dot_general(f0_bf, w1a, _DN, preferred_element_type=jnp.float32)
             + lax.dot_general(y_bf, w1b, _DN, preferred_element_type=jnp.float32))
        # exact (erf-based) GELU, matching torch.nn.GELU default
        h = 0.5 * h * (1.0 + lax.erf(h * 0.7071067811865476))
        w2t = w2t_ref[pl.ds(hs, h_chunk), :]           # (Hc, C) bf16 (pre-transposed)
        return z + lax.dot_general(h.astype(_BF16), w2t, _DN_STD,
                                   preferred_element_type=jnp.float32)

    z = lax.fori_loop(0, n_chunks, body,
                      jnp.zeros((tm, C), jnp.float32), unroll=True)
    z = _layernorm(z, ffg_ref[...], ffb_ref[...], eps)
    o_ref[...] = (f0 + z).astype(o_ref.dtype)


# ----------------------------------------------------------------------------
# Tiling helpers
# ----------------------------------------------------------------------------

def _choose_tile(M, cap):
    for t in (512, 256, 128, 64, 32, 16, 8):
        if t <= cap and M % t == 0:
            return t
    return M


def _choose_h_chunk(H):
    for t in (512, 256, 128):
        if H % t == 0:
            return t
    return H


def _choose_window_block(nw2):
    for t in (8, 4, 2, 1):
        if t <= nw2 and nw2 % t == 0:
            return t
    return 1


# ----------------------------------------------------------------------------
# Pallas wrappers
# ----------------------------------------------------------------------------

def qkv_projection(feat0, feat1, params, tm):
    """feat0/feat1: (B, L, C) f32; returns stacked (3, B*L, C) bf16."""
    b, L, C = feat0.shape
    M = b * L
    x0 = feat0.reshape(M, C)
    x1 = feat1.reshape(M, C)
    inv_scale = 1.0 / (float(C) ** 0.5)
    # fold 1/sqrt(C) into Wq; cast all weights to bf16 once here.
    wqkv = jnp.stack([params["wq"] * inv_scale, params["wk"], params["wv"]],
                     axis=0).astype(_BF16)             # (3, C, C)
    row = pl.BlockSpec((tm, C), lambda i: (i, 0))
    return pl.pallas_call(
        _qkv_proj_kernel,
        out_shape=jax.ShapeDtypeStruct((3, M, C), _BF16),
        grid=(M // tm,),
        in_specs=[row, row,
                  pl.BlockSpec((3, C, C), lambda i: (0, 0, 0),
                               pipeline_mode=pl.Buffered(1))],   # resident weights
        out_specs=pl.BlockSpec((3, tm, C), lambda i: (0, i, 0)),
        compiler_params=pltpu.CompilerParams(
            dimension_semantics=("parallel",),
            vmem_limit_bytes=_VMEM_LIMIT),
    )(x0, x1, wqkv)


def window_attention(qkv_windows, mask_attn, *, nw2, use_mask):
    """qkv_windows: (3, B*nw^2, S, C) bf16; mask_attn: (nw^2, S, S) f32 or None."""
    _, BW, S, C = qkv_windows.shape
    wblk = _choose_window_block(nw2)                   # windows per grid step
    mrep = nw2 // wblk

    in_specs = [pl.BlockSpec((3, wblk, S, C), lambda i: (0, i, 0, 0))]
    args = [qkv_windows]
    if use_mask:
        if mrep == 1:
            mask_map = lambda i: (0, 0, 0)
        else:
            mask_map = lambda i: (i % mrep, 0, 0)      # no jnp.tile / HBM duplication
        in_specs.append(pl.BlockSpec((wblk, S, S), mask_map))
        args.append(mask_attn)

    return pl.pallas_call(
        partial(_window_attn_kernel, use_mask=use_mask),
        out_shape=jax.ShapeDtypeStruct((BW, S, C), _BF16),
        grid=(BW // wblk,),
        in_specs=in_specs,
        out_specs=pl.BlockSpec((wblk, S, C), lambda i: (i, 0, 0)),
        compiler_params=pltpu.CompilerParams(
            dimension_semantics=("parallel",),
            vmem_limit_bytes=_VMEM_LIMIT),
    )(*args)


def attn_mlp_tail(feat0_2d, attn_2d, params, tm, eps=1e-5):
    """Fused fc + LayerNorm + MLP (concat removed via W1 split) + LayerNorm + residual."""
    M, C = feat0_2d.shape
    w1 = params["w1"]                                  # (H, 2C) torch layout
    H = w1.shape[0]
    # bf16 weights, cast/transposed ONCE here (not per grid step).
    w1a = w1[:, :C].astype(_BF16)                      # acts on feat0
    w1b = w1[:, C:].astype(_BF16)                      # acts on normalized attn features
    w2t = jnp.transpose(params["w2"]).astype(_BF16)    # (H, C): h_chunk @ w2t_chunk
    wfc = params["wfc"].astype(_BF16)

    h_chunk = _choose_h_chunk(H)
    n_chunks = H // h_chunk

    row = pl.BlockSpec((tm, C), lambda i: (i, 0))

    def wspec(shape):
        return pl.BlockSpec(shape, lambda i: (0, 0), pipeline_mode=pl.Buffered(1))

    return pl.pallas_call(
        partial(_tail_kernel, eps=eps, h_chunk=h_chunk, n_chunks=n_chunks),
        out_shape=jax.ShapeDtypeStruct((M, C), feat0_2d.dtype),
        grid=(M // tm,),
        in_specs=[row, row,
                  wspec((C, C)),     # wfc  (bf16, torch layout)
                  wspec((1, C)),     # ln gamma (f32)
                  wspec((1, C)),     # ln beta
                  wspec((H, C)),     # w1a  (bf16)
                  wspec((H, C)),     # w1b  (bf16)
                  wspec((H, C)),     # w2^T (bf16)
                  wspec((1, C)),     # ffn gamma
                  wspec((1, C))],    # ffn beta
        out_specs=row,
        compiler_params=pltpu.CompilerParams(
            dimension_semantics=("parallel",),
            vmem_limit_bytes=_VMEM_LIMIT),
    )(feat0_2d, attn_2d, wfc, params["ln_g"], params["ln_b"],
      w1a, w1b, w2t, params["ffn_g"], params["ffn_b"])


# ----------------------------------------------------------------------------
# MaxSA_Transformer forward (only inter_attn is used by the PyTorch forward)
# ----------------------------------------------------------------------------

def maxsa_transformer_forward(params, feat0, feat1, width, height, mask_attn,
                              n_window, is_shift=True):
    b, L, c = feat0.shape
    assert L == width * height
    M = b * L
    tm_qkv = _choose_tile(M, 512)
    tm_tail = _choose_tile(M, 256)   # smaller tail tile: keeps spill/VMEM pressure low

    wh = height // n_window
    ww = width // n_window
    S = wh * ww
    sh, sw = wh // 2, ww // 2

    # Fused q/k/v projection -> stacked (3, M, c) in bf16 (1/sqrt(c) folded into Wq).
    qkv = qkv_projection(feat0, feat1, params, tm_qkv)

    # Single shift/partition layout pass on the stacked bf16 tensor.
    # TODO(synk): fold roll + window partition/merge into the projection out_specs /
    # attention index_maps to avoid these HBM layout passes at large resolutions.
    x = qkv.reshape(3, b, height, width, c)
    if is_shift:
        x = jnp.roll(x, shift=(-sh, -sw), axis=(2, 3))
    x = x.reshape(3, b, n_window, wh, n_window, ww, c)
    x = jnp.transpose(x, (0, 1, 2, 4, 3, 5, 6))
    x = x.reshape(3, b * n_window ** 2, S, c)

    # Windowed attention; mask only applied on the shifted path (matches PyTorch).
    out = window_attention(x, mask_attn if is_shift else None,
                           nw2=n_window ** 2, use_mask=is_shift)   # (b*nw^2, S, c) bf16

    # Window merge + un-shift (bf16 layout pass).
    out = out.reshape(b, n_window, n_window, wh, ww, c)
    out = jnp.transpose(out, (0, 1, 3, 2, 4, 5)).reshape(b, height, width, c)
    if is_shift:
        out = jnp.roll(out, shift=(sh, sw), axis=(1, 2))
    attn_2d = out.reshape(M, c)

    # Fused fc + LayerNorm + MLP (H-chunked) + LayerNorm + residual.
    out = attn_mlp_tail(feat0.reshape(M, c), attn_2d, params, tm_tail)
    return out.reshape(b, L, c)


# ----------------------------------------------------------------------------
# Deterministic parameter init + example run
# ----------------------------------------------------------------------------

def init_params(key, dim, ffn_dim=4):
    ks = jax.random.split(key, 10)
    s = 0.05
    f32 = jnp.float32
    return {
        "wq": jax.random.normal(ks[0], (dim, dim), f32) * s,
        "wk": jax.random.normal(ks[1], (dim, dim), f32) * s,
        "wv": jax.random.normal(ks[2], (dim, dim), f32) * s,
        "wfc": jax.random.normal(ks[3], (dim, dim), f32) * s,
        "ln_g": jnp.ones((1, dim), f32) + 0.01 * jax.random.normal(ks[4], (1, dim), f32),
        "ln_b": 0.01 * jax.random.normal(ks[5], (1, dim), f32),
        "w1": jax.random.normal(ks[6], (2 * dim * ffn_dim, 2 * dim), f32) * s,
        "w2": jax.random.normal(ks[7], (dim, 2 * dim * ffn_dim), f32) * s,
        "ffn_g": jnp.ones((1, dim), f32) + 0.01 * jax.random.normal(ks[8], (1, dim), f32),
        "ffn_b": 0.01 * jax.random.normal(ks[9], (1, dim), f32),
    }


if __name__ == "__main__":
    dim = 32
    batch = 2
    height = width = 8
    n_window = 2
    L = height * width
    wh, ww = height // n_window, width // n_window
    S = wh * ww

    key = jax.random.PRNGKey(0)
    kp, k0, k1, km = jax.random.split(key, 4)

    params = init_params(kp, dim)
    feat0 = jax.random.normal(k0, (batch, L, dim), jnp.float32)
    feat1 = jax.random.normal(k1, (batch, L, dim), jnp.float32)
    # shifted-window attention bias, one per window: (n_window**2, S, S)
    mask_attn = 0.5 * jax.random.normal(km, (n_window ** 2, S, S), jnp.float32)

    fwd = jax.jit(partial(maxsa_transformer_forward,
                          width=width, height=height, n_window=n_window))
    out = fwd(params, feat0, feat1, mask_attn=mask_attn)
    out = jax.block_until_ready(out)
    assert out.shape == (batch, L, dim)
    assert bool(jnp.all(jnp.isfinite(out)))
    print("KERNEL_OK")
</pallas_src>

<mosaic_0001>
module attributes {stable_mosaic.version = 11 : i64} {
  func.func @_qkv_proj_kernel(%arg0: i32, %arg1: memref<128x32xf32, #tpu.memory_space<vmem>>, %arg2: memref<128x32xf32, #tpu.memory_space<vmem>>, %arg3: memref<3x32x32xbf16, #tpu.memory_space<vmem>>, %arg4: memref<3x128x32xbf16, #tpu.memory_space<vmem>>) attributes {dimension_semantics = [#tpu.dimension_semantics<parallel>], iteration_bounds = array<i64: 1>, scalar_prefetch = 0 : i64, scratch_operands = 0 : i64, tpu.core_type = #tpu.core_type<tc>, window_params = [{transform_indices = @transform_0, window_bounds = array<i64: 128, 32>}, {transform_indices = @transform_1, window_bounds = array<i64: 128, 32>}, {pipeline_mode = #tpu.pipeline_mode<synchronous>, transform_indices = @transform_2, window_bounds = array<i64: 3, 32, 32>}, {transform_indices = @transform_3, window_bounds = array<i64: 3, 128, 32>}]} {
    %c0 = arith.constant 0 : index
    %c0_0 = arith.constant 0 : index
    %0 = vector.load %arg1[%c0, %c0_0] : memref<128x32xf32, #tpu.memory_space<vmem>>, vector<128x32xf32>
    %1 = arith.truncf %0 : vector<128x32xf32> to vector<128x32xbf16>
    %c0_1 = arith.constant 0 : index
    %c0_2 = arith.constant 0 : index
    %2 = vector.load %arg2[%c0_1, %c0_2] : memref<128x32xf32, #tpu.memory_space<vmem>>, vector<128x32xf32>
    %3 = arith.truncf %2 : vector<128x32xf32> to vector<128x32xbf16>
    %c0_3 = arith.constant 0 : index
    %c0_4 = arith.constant 0 : index
    %c0_5 = arith.constant 0 : index
    %4 = vector.load %arg3[%c0_3, %c0_4, %c0_5] : memref<3x32x32xbf16, #tpu.memory_space<vmem>>, vector<1x32x32xbf16>
    %5 = vector.shape_cast %4 : vector<1x32x32xbf16> to vector<32x32xbf16>
    %cst = arith.constant dense<0.000000e+00> : vector<128x32xf32>
    %6 = tpu.matmul %1, %5, %cst {dimension_numbers = #tpu.dot_dimension_numbers<[1], [1], [0], [0], [0, 0, 1, 0], [], []>} : vector<128x32xbf16>, vector<32x32xbf16>, vector<128x32xf32> -> vector<128x32xf32>
    %7 = arith.truncf %6 : vector<128x32xf32> to vector<128x32xbf16>
    %c0_6 = arith.constant 0 : index
    %c0_7 = arith.constant 0 : index
    %c0_8 = arith.constant 0 : index
    %8 = vector.load %arg4[%c0_6, %c0_7, %c0_8] : memref<3x128x32xbf16, #tpu.memory_space<vmem>>, vector<1x128x32xbf16>
    %9 = vector.shape_cast %8 : vector<1x128x32xbf16> to vector<128x32xbf16>
    %10 = vector.shape_cast %7 : vector<128x32xbf16> to vector<1x128x32xbf16>
    tpu.vector_store %arg4[%c0_6, %c0_7, %c0_8], %10 {strides = array<i32>} : memref<3x128x32xbf16, #tpu.memory_space<vmem>>, vector<1x128x32xbf16>,
    %c1 = arith.constant 1 : index
    %c0_9 = arith.constant 0 : index
    %c0_10 = arith.constant 0 : index
    %11 = vector.load %arg3[%c1, %c0_9, %c0_10] : memref<3x32x32xbf16, #tpu.memory_space<vmem>>, vector<1x32x32xbf16>
    %12 = vector.shape_cast %11 : vector<1x32x32xbf16> to vector<32x32xbf16>
    %cst_11 = arith.constant dense<0.000000e+00> : vector<128x32xf32>
    %13 = tpu.matmul %3, %12, %cst_11 {dimension_numbers = #tpu.dot_dimension_numbers<[1], [1], [0], [0], [0, 0, 1, 0], [], []>} : vector<128x32xbf16>, vector<32x32xbf16>, vector<128x32xf32> -> vector<128x32xf32>
    %14 = arith.truncf %13 : vector<128x32xf32> to vector<128x32xbf16>
    %c1_12 = arith.constant 1 : index
    %c0_13 = arith.constant 0 : index
    %c0_14 = arith.constant 0 : index
    %15 = vector.load %arg4[%c1_12, %c0_13, %c0_14] : memref<3x128x32xbf16, #tpu.memory_space<vmem>>, vector<1x128x32xbf16>
    %16 = vector.shape_cast %15 : vector<1x128x32xbf16> to vector<128x32xbf16>
    %17 = vector.shape_cast %14 : vector<128x32xbf16> to vector<1x128x32xbf16>
    tpu.vector_store %arg4[%c1_12, %c0_13, %c0_14], %17 {strides = array<i32>} : memref<3x128x32xbf16, #tpu.memory_space<vmem>>, vector<1x128x32xbf16>,
    %c2 = arith.constant 2 : index
    %c0_15 = arith.constant 0 : index
    %c0_16 = arith.constant 0 : index
    %18 = vector.load %arg3[%c2, %c0_15, %c0_16] : memref<3x32x32xbf16, #tpu.memory_space<vmem>>, vector<1x32x32xbf16>
    %19 = vector.shape_cast %18 : vector<1x32x32xbf16> to vector<32x32xbf16>
    %cst_17 = arith.constant dense<0.000000e+00> : vector<128x32xf32>
    %20 = tpu.matmul %3, %19, %cst_17 {dimension_numbers = #tpu.dot_dimension_numbers<[1], [1], [0], [0], [0, 0, 1, 0], [], []>} : vector<128x32xbf16>, vector<32x32xbf16>, vector<128x32xf32> -> vector<128x32xf32>
    %21 = arith.truncf %20 : vector<128x32xf32> to vector<128x32xbf16>
    %c2_18 = arith.constant 2 : index
    %c0_19 = arith.constant 0 : index
    %c0_20 = arith.constant 0 : index
    %22 = vector.load %arg4[%c2_18, %c0_19, %c0_20] : memref<3x128x32xbf16, #tpu.memory_space<vmem>>, vector<1x128x32xbf16>
    %23 = vector.shape_cast %22 : vector<1x128x32xbf16> to vector<128x32xbf16>
    %24 = vector.shape_cast %21 : vector<128x32xbf16> to vector<1x128x32xbf16>
    tpu.vector_store %arg4[%c2_18, %c0_19, %c0_20], %24 {strides = array<i32>} : memref<3x128x32xbf16, #tpu.memory_space<vmem>>, vector<1x128x32xbf16>,
    return
  }
  func.func @transform_0(%arg0: i32) -> (i32, i32) {
    %c0_i32 = arith.constant 0 : i32
    %c0_i32_0 = arith.constant 0 : i32
    return %arg0, %c0_i32 : i32, i32
  }
  func.func @transform_1(%arg0: i32) -> (i32, i32) {
    %c0_i32 = arith.constant 0 : i32
    %c0_i32_0 = arith.constant 0 : i32
    return %arg0, %c0_i32 : i32, i32
  }
  func.func @transform_2(%arg0: i32) -> (i32, i32, i32) {
    %c0_i32 = arith.constant 0 : i32
    %c0_i32_0 = arith.constant 0 : i32
    %c0_i32_1 = arith.constant 0 : i32
    %c0_i32_2 = arith.constant 0 : i32
    return %c0_i32, %c0_i32_0, %c0_i32_1 : i32, i32, i32
  }
  func.func @transform_3(%arg0: i32) -> (i32, i32, i32) {
    %c0_i32 = arith.constant 0 : i32
    %c0_i32_0 = arith.constant 0 : i32
    %c0_i32_1 = arith.constant 0 : i32
    return %c0_i32, %arg0, %c0_i32_0 : i32, i32, i32
  }
}

module attributes {stable_mosaic.version = 11 : i64} {
  func.func @_window_attn_kernel(%arg0: i32, %arg1: memref<3x4x16x32xbf16, #tpu.memory_space<vmem>>, %arg2: memref<4x16x16xf32, #tpu.memory_space<vmem>>, %arg3: memref<4x16x32xbf16, #tpu.memory_space<vmem>>) attributes {dimension_semantics = [#tpu.dimension_semantics<parallel>], iteration_bounds = array<i64: 2>, scalar_prefetch = 0 : i64, scratch_operands = 0 : i64, tpu.core_type = #tpu.core_type<tc>, window_params = [{transform_indices = @transform_0, window_bounds = array<i64: 3, 4, 16, 32>}, {pipeline_mode = #tpu.pipeline_mode<synchronous>, transform_indices = @transform_1, window_bounds = array<i64: 4, 16, 16>}, {transform_indices = @transform_2, window_bounds = array<i64: 4, 16, 32>}]} {
    %c0 = arith.constant 0 : index
    %c0_0 = arith.constant 0 : index
    %c0_1 = arith.constant 0 : index
    %c0_2 = arith.constant 0 : index
    %0 = vector.load %arg1[%c0, %c0_0, %c0_1, %c0_2] : memref<3x4x16x32xbf16, #tpu.memory_space<vmem>>, vector<1x4x16x32xbf16>
    %1 = vector.shape_cast %0 : vector<1x4x16x32xbf16> to vector<4x16x32xbf16>
    %c1 = arith.constant 1 : index
    %c0_3 = arith.constant 0 : index
    %c0_4 = arith.constant 0 : index
    %c0_5 = arith.constant 0 : index
    %2 = vector.load %arg1[%c1, %c0_3, %c0_4, %c0_5] : memref<3x4x16x32xbf16, #tpu.memory_space<vmem>>, vector<1x4x16x32xbf16>
    %3 = vector.shape_cast %2 : vector<1x4x16x32xbf16> to vector<4x16x32xbf16>
    %c2 = arith.constant 2 : index
    %c0_6 = arith.constant 0 : index
    %c0_7 = arith.constant 0 : index
    %c0_8 = arith.constant 0 : index
    %4 = vector.load %arg1[%c2, %c0_6, %c0_7, %c0_8] : memref<3x4x16x32xbf16, #tpu.memory_space<vmem>>, vector<1x4x16x32xbf16>
    %5 = vector.shape_cast %4 : vector<1x4x16x32xbf16> to vector<4x16x32xbf16>
    "tpu.trace_start"() <{level = 10 : i32, message = "bqd,bkd->bqk"}> : () -> ()
    %cst = arith.constant dense<0.000000e+00> : vector<4x16x16xf32>
    %6 = tpu.matmul %1, %3, %cst {dimension_numbers = #tpu.dot_dimension_numbers<[2], [2], [1], [1], [0, 0, 0, 1, 1, 1], [0], [0]>} : vector<4x16x32xbf16>, vector<4x16x32xbf16>, vector<4x16x16xf32> -> vector<4x16x16xf32>
    "tpu.trace_stop"() : () -> ()
    %c0_9 = arith.constant 0 : index
    %c0_10 = arith.constant 0 : index
    %c0_11 = arith.constant 0 : index
    %7 = vector.load %arg2[%c0_9, %c0_10, %c0_11] : memref<4x16x16xf32, #tpu.memory_space<vmem>>, vector<4x16x16xf32>
    %8 = arith.addf %6, %7 : vector<4x16x16xf32>
    %cst_12 = arith.constant dense<0xFF800000> : vector<4x16xf32>
    %9 = vector.multi_reduction <maximumf>, %8, %cst_12 [2] : vector<4x16x16xf32> to vector<4x16xf32>
    %10 = vector.shape_cast %9 : vector<4x16xf32> to vector<4x16x1xf32>
    %11 = vector.broadcast %10 : vector<4x16x1xf32> to vector<4x16x16xf32>
    %12 = arith.subf %8, %11 : vector<4x16x16xf32>
    %13 = math.exp %12 : vector<4x16x16xf32>
    %cst_13 = arith.constant dense<0.000000e+00> : vector<4x16xf32>
    %14 = vector.multi_reduction <add>, %13, %cst_13 [2] : vector<4x16x16xf32> to vector<4x16xf32>
    %15 = vector.shape_cast %14 : vector<4x16xf32> to vector<4x16x1xf32>
    %16 = tpu.reciprocal %15 {approx = true} : vector<4x16x1xf32> -> vector<4x16x1xf32>
    %17 = vector.broadcast %16 : vector<4x16x1xf32> to vector<4x16x16xf32>
    %18 = arith.mulf %13, %17 : vector<4x16x16xf32>
    %19 = arith.truncf %18 : vector<4x16x16xf32> to vector<4x16x16xbf16>
    "tpu.trace_start"() <{level = 10 : i32, message = "bqk,bkd->bqd"}> : () -> ()
    %cst_14 = arith.constant dense<0.000000e+00> : vector<4x16x32xf32>
    %20 = tpu.matmul %19, %5, %cst_14 {dimension_numbers = #tpu.dot_dimension_numbers<[2], [1], [1], [2], [0, 0, 0, 1, 1, 2], [0], [0]>} : vector<4x16x16xbf16>, vector<4x16x32xbf16>, vector<4x16x32xf32> -> vector<4x16x32xf32>
    "tpu.trace_stop"() : () -> ()
    %21 = arith.truncf %20 : vector<4x16x32xf32> to vector<4x16x32xbf16>
    %c0_15 = arith.constant 0 : index
    %c0_16 = arith.constant 0 : index
    %c0_17 = arith.constant 0 : index
    %22 = vector.load %arg3[%c0_15, %c0_16, %c0_17] : memref<4x16x32xbf16, #tpu.memory_space<vmem>>, vector<4x16x32xbf16>
    tpu.vector_store %arg3[%c0_15, %c0_16, %c0_17], %21 {strides = array<i32>} : memref<4x16x32xbf16, #tpu.memory_space<vmem>>, vector<4x16x32xbf16>,
    return
  }
  func.func @transform_0(%arg0: i32) -> (i32, i32, i32, i32) {
    %c0_i32 = arith.constant 0 : i32
    %c0_i32_0 = arith.constant 0 : i32
    %c0_i32_1 = arith.constant 0 : i32
    %c0_i32_2 = arith.constant 0 : i32
    return %c0_i32, %arg0, %c0_i32_0, %c0_i32_1 : i32, i32, i32, i32
  }
  func.func @transform_1(%arg0: i32) -> (i32, i32, i32) {
    %c0_i32 = arith.constant 0 : i32
    %c0_i32_0 = arith.constant 0 : i32
    %c0_i32_1 = arith.constant 0 : i32
    %c0_i32_2 = arith.constant 0 : i32
    return %c0_i32, %c0_i32_0, %c0_i32_1 : i32, i32, i32
  }
  func.func @transform_2(%arg0: i32) -> (i32, i32, i32) {
    %c0_i32 = arith.constant 0 : i32
    %c0_i32_0 = arith.constant 0 : i32
    %c0_i32_1 = arith.constant 0 : i32
    return %arg0, %c0_i32, %c0_i32_0 : i32, i32, i32
  }
}

module attributes {stable_mosaic.version = 11 : i64} {
  func.func @_tail_kernel(%arg0: i32, %arg1: memref<128x32xf32, #tpu.memory_space<vmem>>, %arg2: memref<128x32xbf16, #tpu.memory_space<vmem>>, %arg3: memref<32x32xbf16, #tpu.memory_space<vmem>>, %arg4: memref<1x32xf32, #tpu.memory_space<vmem>>, %arg5: memref<1x32xf32, #tpu.memory_space<vmem>>, %arg6: memref<256x32xbf16, #tpu.memory_space<vmem>>, %arg7: memref<256x32xbf16, #tpu.memory_space<vmem>>, %arg8: memref<256x32xbf16, #tpu.memory_space<vmem>>, %arg9: memref<1x32xf32, #tpu.memory_space<vmem>>, %arg10: memref<1x32xf32, #tpu.memory_space<vmem>>, %arg11: memref<128x32xf32, #tpu.memory_space<vmem>>) attributes {dimension_semantics = [#tpu.dimension_semantics<parallel>], iteration_bounds = array<i64: 1>, scalar_prefetch = 0 : i64, scratch_operands = 0 : i64, tpu.core_type = #tpu.core_type<tc>, window_params = [{transform_indices = @transform_0, window_bounds = array<i64: 128, 32>}, {transform_indices = @transform_1, window_bounds = array<i64: 128, 32>}, {pipeline_mode = #tpu.pipeline_mode<synchronous>, transform_indices = @transform_2, window_bounds = array<i64: 32, 32>}, {pipeline_mode = #tpu.pipeline_mode<synchronous>, transform_indices = @transform_3, window_bounds = array<i64: 1, 32>}, {pipeline_mode = #tpu.pipeline_mode<synchronous>, transform_indices = @transform_4, window_bounds = array<i64: 1, 32>}, {pipeline_mode = #tpu.pipeline_mode<synchronous>, transform_indices = @transform_5, window_bounds = array<i64: 256, 32>}, {pipeline_mode = #tpu.pipeline_mode<synchronous>, transform_indices = @transform_6, window_bounds = array<i64: 256, 32>}, {pipeline_mode = #tpu.pipeline_mode<synchronous>, transform_indices = @transform_7, window_bounds = array<i64: 256, 32>}, {pipeline_mode = #tpu.pipeline_mode<synchronous>, transform_indices = @transform_8, window_bounds = array<i64: 1, 32>}, {pipeline_mode = #tpu.pipeline_mode<synchronous>, transform_indices = @transform_9, window_bounds = array<i64: 1, 32>}, {transform_indices = @transform_10, window_bounds = array<i64: 128, 32>}]} {
    %c0 = arith.constant 0 : index
    %c0_0 = arith.constant 0 : index
    %0 = vector.load %arg1[%c0, %c0_0] : memref<128x32xf32, #tpu.memory_space<vmem>>, vector<128x32xf32>
    %1 = arith.truncf %0 : vector<128x32xf32> to vector<128x32xbf16>
    %c0_1 = arith.constant 0 : index
    %c0_2 = arith.constant 0 : index
    %2 = vector.load %arg2[%c0_1, %c0_2] : memref<128x32xbf16, #tpu.memory_space<vmem>>, vector<128x32xbf16>
    %c0_3 = arith.constant 0 : index
    %c0_4 = arith.constant 0 : index
    %3 = vector.load %arg3[%c0_3, %c0_4] : memref<32x32xbf16, #tpu.memory_space<vmem>>, vector<32x32xbf16>
    %cst = arith.constant dense<0.000000e+00> : vector<128x32xf32>
    %4 = tpu.matmul %2, %3, %cst {dimension_numbers = #tpu.dot_dimension_numbers<[1], [1], [0], [0], [0, 0, 1, 0], [], []>} : vector<128x32xbf16>, vector<32x32xbf16>, vector<128x32xf32> -> vector<128x32xf32>
    %c0_5 = arith.constant 0 : index
    %c0_6 = arith.constant 0 : index
    %5 = vector.load %arg4[%c0_5, %c0_6] : memref<1x32xf32, #tpu.memory_space<vmem>>, vector<1x32xf32>
    %c0_7 = arith.constant 0 : index
    %c0_8 = arith.constant 0 : index
    %6 = vector.load %arg5[%c0_7, %c0_8] : memref<1x32xf32, #tpu.memory_space<vmem>>, vector<1x32xf32>
    %cst_9 = arith.constant dense<0.000000e+00> : vector<128xf32>
    %7 = vector.multi_reduction <add>, %4, %cst_9 [1] : vector<128x32xf32> to vector<128xf32>
    %8 = vector.shape_cast %7 : vector<128xf32> to vector<128x1xf32>
    %cst_10 = arith.constant 3.200000e+01 : f32
    %9 = vector.broadcast %cst_10 : f32 to vector<128x1xf32>
    %10 = arith.divf %8, %9 : vector<128x1xf32>
    %11 = vector.broadcast %10 : vector<128x1xf32> to vector<128x32xf32>
    %12 = arith.subf %4, %11 : vector<128x32xf32>
    %13 = arith.mulf %12, %12 : vector<128x32xf32>
    %cst_11 = arith.constant dense<0.000000e+00> : vector<128xf32>
    %14 = vector.multi_reduction <add>, %13, %cst_11 [1] : vector<128x32xf32> to vector<128xf32>
    %15 = vector.shape_cast %14 : vector<128xf32> to vector<128x1xf32>
    %cst_12 = arith.constant 3.200000e+01 : f32
    %16 = vector.broadcast %cst_12 : f32 to vector<128x1xf32>
    %17 = arith.divf %15, %16 : vector<128x1xf32>
    %18 = vector.broadcast %10 : vector<128x1xf32> to vector<128x32xf32>
    %19 = arith.subf %4, %18 : vector<128x32xf32>
    %cst_13 = arith.constant 9.99999974E-6 : f32
    %20 = vector.broadcast %cst_13 : f32 to vector<128x1xf32>
    %21 = arith.addf %17, %20 : vector<128x1xf32>
    %22 = math.rsqrt %21 : vector<128x1xf32>
    %23 = vector.broadcast %22 : vector<128x1xf32> to vector<128x32xf32>
    %24 = arith.mulf %19, %23 : vector<128x32xf32>
    %25 = vector.broadcast %5 : vector<1x32xf32> to vector<128x32xf32>
    %26 = arith.mulf %24, %25 : vector<128x32xf32>
    %27 = vector.broadcast %6 : vector<1x32xf32> to vector<128x32xf32>
    %28 = arith.addf %26, %27 : vector<128x32xf32>
    %29 = arith.truncf %28 : vector<128x32xf32> to vector<128x32xbf16>
    %cst_14 = arith.constant 0.000000e+00 : f32
    %30 = vector.broadcast %cst_14 : f32 to vector<128x32xf32>
    %c0_i32 = arith.constant 0 : i32
    %c256_i32 = arith.constant 256 : i32
    %31 = arith.muli %c0_i32, %c256_i32 : i32
    %32 = tpu.assume_multiple %31, 256 : i32
    %33 = arith.index_cast %32 : i32 to index
    %c0_15 = arith.constant 0 : index
    %34 = vector.load %arg6[%33, %c0_15] : memref<256x32xbf16, #tpu.memory_space<vmem>>, vector<256x32xbf16>
    %35 = arith.index_cast %32 : i32 to index
    %c0_16 = arith.constant 0 : index
    %36 = vector.load %arg7[%35, %c0_16] : memref<256x32xbf16, #tpu.memory_space<vmem>>, vector<256x32xbf16>
    %cst_17 = arith.constant dense<0.000000e+00> : vector<128x256xf32>
    %37 = tpu.matmul %1, %34, %cst_17 {dimension_numbers = #tpu.dot_dimension_numbers<[1], [1], [0], [0], [0, 0, 1, 0], [], []>} : vector<128x32xbf16>, vector<256x32xbf16>, vector<128x256xf32> -> vector<128x256xf32>
    %cst_18 = arith.constant dense<0.000000e+00> : vector<128x256xf32>
    %38 = tpu.matmul %29, %36, %cst_18 {dimension_numbers = #tpu.dot_dimension_numbers<[1], [1], [0], [0], [0, 0, 1, 0], [], []>} : vector<128x32xbf16>, vector<256x32xbf16>, vector<128x256xf32> -> vector<128x256xf32>
    %39 = arith.addf %37, %38 : vector<128x256xf32>
    %cst_19 = arith.constant 5.000000e-01 : f32
    %40 = vector.broadcast %cst_19 : f32 to vector<128x256xf32>
    %41 = arith.mulf %40, %39 : vector<128x256xf32>
    %cst_20 = arith.constant 0.707106769 : f32
    %42 = vector.broadcast %cst_20 : f32 to vector<128x256xf32>
    %43 = arith.mulf %39, %42 : vector<128x256xf32>
    %44 = math.erf %43 : vector<128x256xf32>
    %cst_21 = arith.constant 1.000000e+00 : f32
    %45 = vector.broadcast %cst_21 : f32 to vector<128x256xf32>
    %46 = arith.addf %45, %44 : vector<128x256xf32>
    %47 = arith.mulf %41, %46 : vector<128x256xf32>
    %48 = arith.index_cast %32 : i32 to index
    %c0_22 = arith.constant 0 : index
    %49 = vector.load %arg8[%48, %c0_22] : memref<256x32xbf16, #tpu.memory_space<vmem>>, vector<256x32xbf16>
    %50 = arith.truncf %47 : vector<128x256xf32> to vector<128x256xbf16>
    %cst_23 = arith.constant dense<0.000000e+00> : vector<128x32xf32>
    %51 = tpu.matmul %50, %49, %cst_23 {dimension_numbers = #tpu.dot_dimension_numbers<[1], [0], [0], [1], [0, 0, 1, 1], [], []>} : vector<128x256xbf16>, vector<256x32xbf16>, vector<128x32xf32> -> vector<128x32xf32>
    %52 = arith.addf %30, %51 : vector<128x32xf32>
    %c1_i32 = arith.constant 1 : i32
    %c0_24 = arith.constant 0 : index
    %c0_25 = arith.constant 0 : index
    %53 = vector.load %arg9[%c0_24, %c0_25] : memref<1x32xf32, #tpu.memory_space<vmem>>, vector<1x32xf32>
    %c0_26 = arith.constant 0 : index
    %c0_27 = arith.constant 0 : index
    %54 = vector.load %arg10[%c0_26, %c0_27] : memref<1x32xf32, #tpu.memory_space<vmem>>, vector<1x32xf32>
    %cst_28 = arith.constant dense<0.000000e+00> : vector<128xf32>
    %55 = vector.multi_reduction <add>, %52, %cst_28 [1] : vector<128x32xf32> to vector<128xf32>
    %56 = vector.shape_cast %55 : vector<128xf32> to vector<128x1xf32>
    %cst_29 = arith.constant 3.200000e+01 : f32
    %57 = vector.broadcast %cst_29 : f32 to vector<128x1xf32>
    %58 = arith.divf %56, %57 : vector<128x1xf32>
    %59 = vector.broadcast %58 : vector<128x1xf32> to vector<128x32xf32>
    %60 = arith.subf %52, %59 : vector<128x32xf32>
    %61 = arith.mulf %60, %60 : vector<128x32xf32>
    %cst_30 = arith.constant dense<0.000000e+00> : vector<128xf32>
    %62 = vector.multi_reduction <add>, %61, %cst_30 [1] : vector<128x32xf32> to vector<128xf32>
    %63 = vector.shape_cast %62 : vector<128xf32> to vector<128x1xf32>
    %cst_31 = arith.constant 3.200000e+01 : f32
    %64 = vector.broadcast %cst_31 : f32 to vector<128x1xf32>
    %65 = arith.divf %63, %64 : vector<128x1xf32>
    %66 = vector.broadcast %58 : vector<128x1xf32> to vector<128x32xf32>
    %67 = arith.subf %52, %66 : vector<128x32xf32>
    %cst_32 = arith.constant 9.99999974E-6 : f32
    %68 = vector.broadcast %cst_32 : f32 to vector<128x1xf32>
    %69 = arith.addf %65, %68 : vector<128x1xf32>
    %70 = math.rsqrt %69 : vector<128x1xf32>
    %71 = vector.broadcast %70 : vector<128x1xf32> to vector<128x32xf32>
    %72 = arith.mulf %67, %71 : vector<128x32xf32>
    %73 = vector.broadcast %53 : vector<1x32xf32> to vector<128x32xf32>
    %74 = arith.mulf %72, %73 : vector<128x32xf32>
    %75 = vector.broadcast %54 : vector<1x32xf32> to vector<128x32xf32>
    %76 = arith.addf %74, %75 : vector<128x32xf32>
    %77 = arith.addf %0, %76 : vector<128x32xf32>
    %c0_33 = arith.constant 0 : index
    %c0_34 = arith.constant 0 : index
    %78 = vector.load %arg11[%c0_33, %c0_34] : memref<128x32xf32, #tpu.memory_space<vmem>>, vector<128x32xf32>
    tpu.vector_store %arg11[%c0_33, %c0_34], %77 {strides = array<i32>} : memref<128x32xf32, #tpu.memory_space<vmem>>, vector<128x32xf32>,
    return
  }
  func.func @transform_0(%arg0: i32) -> (i32, i32) {
    %c0_i32 = arith.constant 0 : i32
    %c0_i32_0 = arith.constant 0 : i32
    return %arg0, %c0_i32 : i32, i32
  }
  func.func @transform_1(%arg0: i32) -> (i32, i32) {
    %c0_i32 = arith.constant 0 : i32
    %c0_i32_0 = arith.constant 0 : i32
    return %arg0, %c0_i32 : i32, i32
  }
  func.func @transform_2(%arg0: i32) -> (i32, i32) {
    %c0_i32 = arith.constant 0 : i32
    %c0_i32_0 = arith.constant 0 : i32
    %c0_i32_1 = arith.constant 0 : i32
    return %c0_i32, %c0_i32_0 : i32, i32
  }
  func.func @transform_3(%arg0: i32) -> (i32, i32) {
    %c0_i32 = arith.constant 0 : i32
    %c0_i32_0 = arith.constant 0 : i32
    %c0_i32_1 = arith.constant 0 : i32
    return %c0_i32, %c0_i32_0 : i32, i32
  }
  func.func @transform_4(%arg0: i32) -> (i32, i32) {
    %c0_i32 = arith.constant 0 : i32
    %c0_i32_0 = arith.constant 0 : i32
    %c0_i32_1 = arith.constant 0 : i32
    return %c0_i32, %c0_i32_0 : i32, i32
  }
  func.func @transform_5(%arg0: i32) -> (i32, i32) {
    %c0_i32 = arith.constant 0 : i32
    %c0_i32_0 = arith.constant 0 : i32
    %c0_i32_1 = arith.constant 0 : i32
    return %c0_i32, %c0_i32_0 : i32, i32
  }
  func.func @transform_6(%arg0: i32) -> (i32, i32) {
    %c0_i32 = arith.constant 0 : i32
    %c0_i32_0 = arith.constant 0 : i32
    %c0_i32_1 = arith.constant 0 : i32
    return %c0_i32, %c0_i32_0 : i32, i32
  }
  func.func @transform_7(%arg0: i32) -> (i32, i32) {
    %c0_i32 = arith.constant 0 : i32
    %c0_i32_0 = arith.constant 0 : i32
    %c0_i32_1 = arith.constant 0 : i32
    return %c0_i32, %c0_i32_0 : i32, i32
  }
  func.func @transform_8(%arg0: i32) -> (i32, i32) {
    %c0_i32 = arith.constant 0 : i32
    %c0_i32_0 = arith.constant 0 : i32
    %c0_i32_1 = arith.constant 0 : i32
    return %c0_i32, %c0_i32_0 : i32, i32
  }
  func.func @transform_9(%arg0: i32) -> (i32, i32) {
    %c0_i32 = arith.constant 0 : i32
    %c0_i32_0 = arith.constant 0 : i32
    %c0_i32_1 = arith.constant 0 : i32
    return %c0_i32, %c0_i32_0 : i32, i32
  }
  func.func @transform_10(%arg0: i32) -> (i32, i32) {
    %c0_i32 = arith.constant 0 : i32
    %c0_i32_0 = arith.constant 0 : i32
    return %arg0, %c0_i32 : i32, i32
  }
}

</mosaic_0001>

<llo_original>
// kernel: maxsa_transformer_forward.4
$region0: #{maxsa_transformer_forward.4}
  #allocation0 [shape = 'u32[]', space=smem, size = 0x4, offset = 0x4, fixed_abs, tag = 'smem constant byte address 0x4 - core index']
  #allocation1 [shape = 'u32[144,128]{1,0:T(1,128)}', space=vmem, size = 0x12000, scoped, tag = 'internal scratch']
  %s0 = inlined_call_operand.vmem [shape: bf16[3,8,16,32], index: 0, kind: input, shape index: {}]
  %s1 = inlined_call_operand.vmem [shape: f32[4,16,16], index: 1, kind: input, shape index: {}]
  %s2 = inlined_call_operand.vmem [shape: bf16[8,16,32], index: 2, kind: output, shape index: {}]
  %s3 = sld [smem:[#allocation0]]
  $region82: #{maxsa_transformer_forward.4} parent=0
    _
  %s5 = ssub.s32 1, %s3
  %s6 = scalar_select 0, %s5, %s3
  $region1: #{maxsa_transformer_forward.4} parent=0
    #allocation2 [shape = 'u8[98304]{0}', space=vmem, size = 0x18000, scoped, tag = 'input window, operand 0']
    loop: start=0, step=1, limit=4
    $region2: #{maxsa_transformer_forward.4} parent=1 // loop_pre_header
      _
    $region3: #{maxsa_transformer_forward.4} parent=1 // loop_header
      %s8 = sphi 0, %s12
      %p9 = scmp.ge.s32.totalorder %s8, 4
      %s18 = sphi 0, %s20
      %s21 = sphi 0, %s18
      %s22 = sphi 0, %s21
      %s38 = sphi 0, %s22
      %s42 = sphi 0, %s42
      %s44 = sphi 0, %s42
      %s45 = sphi 0, %s44
      %s59 = sphi 0, %s45
      %s65 = sphi 0, %s67
      %s68 = sphi 0, %s65
      %s69 = sphi 0, %s68
      %s85 = sphi 0, %s69
    $region4: #{maxsa_transformer_forward.4} parent=1 // loop_header_branch
      %11 = sbr.rel (%p9) target = $region8
    $region5: #{maxsa_transformer_forward.4} parent=1 // loop_body
      %s13 = ssub.s32 %s8, 1
      %s14 = ssub.s32 %s8, 2
      %s15 = sadd.s32 %s8, 1
      %s16 = ssub.s32 %s8, %s15
      %p17 = scmp.eq.s32.totalorder %s16, 0
      %s19 = sadd.s32 %s18, 1
      %s20 = scalar_select %p17, %s18, %s19
      %p23 = pneg %p17
      %p24 = scmp.eq.s32.totalorder %s8, 1
      %p25 = por %p23, %p24
      %p26 = scmp.ne.s32.totalorder %s18, %s21
      %p27 = scmp.eq.s32.totalorder %s8, 0
      %p28 = por %p26, %p27
      %p29 = scmp.ne.s32.totalorder %s18, %s21
      %p30 = scmp.eq.s32.totalorder %s13, 1
      %p31 = por %p29, %p30
      %p32 = scmp.ne.s32.totalorder %s21, %s22
      %p33 = scmp.eq.s32.totalorder %s13, 0
      %p34 = por %p32, %p33
      %p35 = scmp.ne.s32.totalorder %s21, %s22
      %p36 = scmp.eq.s32.totalorder %s14, 1
      %p37 = por %p35, %p36
      %p39 = scmp.ne.s32.totalorder %s22, %s38
      %p40 = scmp.eq.s32.totalorder %s14, 0
      %p41 = por %p39, %p40
      %s43 = sadd.s32 %s42, 1
      %p46 = scmp.eq.s32.totalorder %s8, 1
      %p47 = scmp.ne.s32.totalorder %s42, %s44
      %p48 = scmp.eq.s32.totalorder %s8, 0
      %p49 = por %p47, %p48
      %p50 = scmp.ne.s32.totalorder %s42, %s44
      %p51 = scmp.eq.s32.totalorder %s13, 1
      %p52 = por %p50, %p51
      %p53 = scmp.ne.s32.totalorder %s44, %s45
      %p54 = scmp.eq.s32.totalorder %s13, 0
      %p55 = por %p53, %p54
      %p56 = scmp.ne.s32.totalorder %s44, %s45
      %p57 = scmp.eq.s32.totalorder %s14, 1
      %p58 = por %p56, %p57
      %p60 = scmp.ne.s32.totalorder %s45, %s59
      %p61 = scmp.eq.s32.totalorder %s14, 0
      %p62 = por %p60, %p61
      %s63 = ssub.s32 %s8, %s15
      %p64 = scmp.eq.s32.totalorder %s63, 0
      %s66 = sadd.s32 %s65, 1
      %s67 = scalar_select %p64, %s65, %s66
      %p70 = pneg %p64
      %p71 = scmp.eq.s32.totalorder %s8, 1
      %p72 = por %p70, %p71
      %p73 = scmp.ne.s32.totalorder %s65, %s68
      %p74 = scmp.eq.s32.totalorder %s8, 0
      %p75 = por %p73, %p74
      %p76 = scmp.ne.s32.totalorder %s65, %s68
      %p77 = scmp.eq.s32.totalorder %s13, 1
      %p78 = por %p76, %p77
      %p79 = scmp.ne.s32.totalorder %s68, %s69
      %p80 = scmp.eq.s32.totalorder %s13, 0
      %p81 = por %p79, %p80
      %p82 = scmp.ne.s32.totalorder %s68, %s69
      %p83 = scmp.eq.s32.totalorder %s14, 1
      %p84 = por %p82, %p83
      %p86 = scmp.ne.s32.totalorder %s69, %s85
      %p87 = scmp.eq.s32.totalorder %s14, 0
      %p88 = por %p86, %p87
      %p89 = scmp.le.s32.totalorder 1, %s8
      %p90 = scmp.lt.s32.totalorder %s8, 3
      %p91 = pnand %p89, %p90
      %p92 = pneg %p91
      // Predicated region
      $region9: #{maxsa_transformer_forward.4} parent=5 // pred_check
        _
      $region10: #{maxsa_transformer_forward.4} parent=5 // pred_check_branch
        %94 = sbr.rel (%p91) target = $region12
      $region11: #{maxsa_transformer_forward.4} parent=5 // pred_region
        %s95 = ssub.s32 %s8, 1
        // Predicated region
        $region13: #{maxsa_transformer_forward.4} parent=11 // pred_check
          %p96 = pneg %p55
        $region14: #{maxsa_transformer_forward.4} parent=11 // pred_check_branch
          %98 = sbr.rel (%p96) target = $region16
        $region15: #{maxsa_transformer_forward.4} parent=11 // pred_region
          _
        $region16: #{maxsa_transformer_forward.4} parent=11 // pred_fallthru
          _
      $region12: #{maxsa_transformer_forward.4} parent=5 // pred_fallthru
        _
      %p99 = scmp.lt.s32.totalorder %s8, 2
      // Predicated region
      $region17: #{maxsa_transformer_forward.4} parent=5 // pred_check
        %p100 = pneg %p99
      $region18: #{maxsa_transformer_forward.4} parent=5 // pred_check_branch
        %102 = sbr.rel (%p100) target = $region20
      $region19: #{maxsa_transformer_forward.4} parent=5 // pred_region
        // Predicated region
        $region21: #{maxsa_transformer_forward.4} parent=19 // pred_check
          %p103 = pneg %p28
        $region22: #{maxsa_transformer_forward.4} parent=19 // pred_check_branch
          %105 = sbr.rel (%p103) target = $region24
        $region23: #{maxsa_transformer_forward.4} parent=19 // pred_region
          %s106 = sand.u32 %s18, 1
          %s107 = sand.u32 %s18, 1
          %s108 = smul.addr %s107, 96
          %s109 = scalar_lea.vmem [#allocation2], %s108
          %s110 = smul.u32 4, %s8
          %s111 = smul.addr %s110, 2
          %s112 = smul.addr %s111, 4
          %s113 = scalar_lea.vmem %s0, %s112
          // Predicated region
          $region25: #{maxsa_transformer_forward.4} parent=23 // pred_check
            _
          $region26: #{maxsa_transformer_forward.4} parent=23 // pred_check_branch
            %115 = sbr.rel (0) target = $region28
          $region27: #{maxsa_transformer_forward.4} parent=23 // pred_region
            // Predicated region
            $region29: #{maxsa_transformer_forward.4} parent=27 // pred_check
              _
            $region30: #{maxsa_transformer_forward.4} parent=27 // pred_check_branch
              %117 = sbr.rel target = $region32
            $region31: #{maxsa_transformer_forward.4} parent=27 // pred_region
              // Predicated region
              $region44: #{maxsa_transformer_forward.4} parent=31 // pred_check
                _
              $region45: #{maxsa_transformer_forward.4} parent=31 // pred_check_branch
                %178 = sbr.rel (0) target = $region47
              $region46: #{maxsa_transformer_forward.4} parent=31 // pred_region
                loop: start=0, step=1, limit=1
                $region48: #{maxsa_transformer_forward.4} parent=46 // loop_pre_header
                  _
                $region49: #{maxsa_transformer_forward.4} parent=46 // loop_header
                  %s180 = sphi 0, %s184
                  %p181 = scmp.ge.s32.totalorder %s180, 1
                  %s185 = sphi %s113, %s113
                  %s186 = sphi %s109, %s109
                $region50: #{maxsa_transformer_forward.4} parent=46 // loop_header_branch
                  %183 = sbr.rel (%p181) target = $region54
                $region51: #{maxsa_transformer_forward.4} parent=46 // loop_body
                  _
                $region52: #{maxsa_transformer_forward.4} parent=46 // loop_footer
                  %s184 = sadd.s32 1, %s180
                $region53: #{maxsa_transformer_forward.4} parent=46 // loop_footer_branch
                  %179 = sbr.rel target = $region49
                $region54: #{maxsa_transformer_forward.4} parent=46 // loop_exit
                  _
                loop: start=0, step=1, limit=1
                $region55: #{maxsa_transformer_forward.4} parent=46 // loop_pre_header
                  _
                $region56: #{maxsa_transformer_forward.4} parent=46 // loop_header
                  %s189 = sphi 0, %s193
                  %p190 = scmp.ge.s32.totalorder %s189, 1
                  %s194 = sphi %s113, %s113
                  %s195 = sphi %s109, %s109
                $region57: #{maxsa_transformer_forward.4} parent=46 // loop_header_branch
                  %192 = sbr.rel (%p190) target = $region61
                $region58: #{maxsa_transformer_forward.4} parent=46 // loop_body
                  %v196 = vld [vmem:[%s194] sm:$0xf]
                  %197 = vst [vmem:[%s195] sm:$0xf] %v196
                  %v198 = vld [vmem:[%s194 + $0x4] sm:$0xf]
                  %199 = vst [vmem:[%s195 + $0x4] sm:$0xf] %v198
                  %v200 = vld [vmem:[%s194 + $0x8] sm:$0xf]
                  %201 = vst [vmem:[%s195 + $0x8] sm:$0xf] %v200
                  %v202 = vld [vmem:[%s194 + $0xc] sm:$0xf]
                  %203 = vst [vmem:[%s195 + $0xc] sm:$0xf] %v202
                  %v204 = vld [vmem:[%s194 + $0x10] sm:$0xf]
                  %205 = vst [vmem:[%s195 + $0x10] sm:$0xf] %v204
                  %v206 = vld [vmem:[%s194 + $0x14] sm:$0xf]
                  %207 = vst [vmem:[%s195 + $0x14] sm:$0xf] %v206
                  %v208 = vld [vmem:[%s194 + $0x18] sm:$0xf]
                  %209 = vst [vmem:[%s195 + $0x18] sm:$0xf] %v208
                  %v210 = vld [vmem:[%s194 + $0x1c] sm:$0xf]
                  %211 = vst [vmem:[%s195 + $0x1c] sm:$0xf] %v210
                  %v212 = vld [vmem:[%s194 + $0x40] sm:$0xf]
                  %213 = vst [vmem:[%s195 + $0x20] sm:$0xf] %v212
                  %v214 = vld [vmem:[%s194 + $0x44] sm:$0xf]
                  %215 = vst [vmem:[%s195 + $0x24] sm:$0xf] %v214
                  %v216 = vld [vmem:[%s194 + $0x48] sm:$0xf]
                  %217 = vst [vmem:[%s195 + $0x28] sm:$0xf] %v216
                  %v218 = vld [vmem:[%s194 + $0x4c] sm:$0xf]
                  %219 = vst [vmem:[%s195 + $0x2c] sm:$0xf] %v218
                  %v220 = vld [vmem:[%s194 + $0x50] sm:$0xf]
                  %221 = vst [vmem:[%s195 + $0x30] sm:$0xf] %v220
                  %v222 = vld [vmem:[%s194 + $0x54] sm:$0xf]
                  %223 = vst [vmem:[%s195 + $0x34] sm:$0xf] %v222
                  %v224 = vld [vmem:[%s194 + $0x58] sm:$0xf]
                  %225 = vst [vmem:[%s195 + $0x38] sm:$0xf] %v224
                  %v226 = vld [vmem:[%s194 + $0x5c] sm:$0xf]
                  %227 = vst [vmem:[%s195 + $0x3c] sm:$0xf] %v226
                  %v228 = vld [vmem:[%s194 + $0x80] sm:$0xf]
                  %229 = vst [vmem:[%s195 + $0x40] sm:$0xf] %v228
                  %v230 = vld [vmem:[%s194 + $0x84] sm:$0xf]
                  %231 = vst [vmem:[%s195 + $0x44] sm:$0xf] %v230
                  %v232 = vld [vmem:[%s194 + $0x88] sm:$0xf]
                  %233 = vst [vmem:[%s195 + $0x48] sm:$0xf] %v232
                  %v234 = vld [vmem:[%s194 + $0x8c] sm:$0xf]
                  %235 = vst [vmem:[%s195 + $0x4c] sm:$0xf] %v234
                  %v236 = vld [vmem:[%s194 + $0x90] sm:$0xf]
                  %237 = vst [vmem:[%s195 + $0x50] sm:$0xf] %v236
                  %v238 = vld [vmem:[%s194 + $0x94] sm:$0xf]
                  %239 = vst [vmem:[%s195 + $0x54] sm:$0xf] %v238
                  %v240 = vld [vmem:[%s194 + $0x98] sm:$0xf]
                  %241 = vst [vmem:[%s195 + $0x58] sm:$0xf] %v240
                  %v242 = vld [vmem:[%s194 + $0x9c] sm:$0xf]
                  %243 = vst [vmem:[%s195 + $0x5c] sm:$0xf] %v242
                $region59: #{maxsa_transformer_forward.4} parent=46 // loop_footer
                  %s193 = sadd.s32 1, %s189
                $region60: #{maxsa_transformer_forward.4} parent=46 // loop_footer_branch
                  %188 = sbr.rel target = $region56
                $region61: #{maxsa_transformer_forward.4} parent=46 // loop_exit
                  _
              $region47: #{maxsa_transformer_forward.4} parent=31 // pred_fallthru
                _
            $region32: #{maxsa_transformer_forward.4} parent=27 // pred_fallthru
              _
            // Predicated region
            $region33: #{maxsa_transformer_forward.4} parent=27 // pred_check
              _
            $region34: #{maxsa_transformer_forward.4} parent=27 // pred_check_branch
              %119 = sbr.rel (0) target = $region36
            $region35: #{maxsa_transformer_forward.4} parent=27 // pred_region
              loop: start=0, step=1, limit=1
              $region37: #{maxsa_transformer_forward.4} parent=35 // loop_pre_header
                _
              $region38: #{maxsa_transformer_forward.4} parent=35 // loop_header
                %s122 = sphi 0, %s126
                %p123 = scmp.ge.s32.totalorder %s122, 1
                %s127 = sphi %s113, %s113
                %s128 = sphi %s109, %s109
              $region39: #{maxsa_transformer_forward.4} parent=35 // loop_header_branch
                %125 = sbr.rel (%p123) target = $region43
              $region40: #{maxsa_transformer_forward.4} parent=35 // loop_body
                %v129 = vld [vmem:[%s127] sm:$0xf]
                %130 = vst [vmem:[%s128] sm:$0xf] %v129
                %v131 = vld [vmem:[%s127 + $0x4] sm:$0xf]
                %132 = vst [vmem:[%s128 + $0x4] sm:$0xf] %v131
                %v133 = vld [vmem:[%s127 + $0x8] sm:$0xf]
                %134 = vst [vmem:[%s128 + $0x8] sm:$0xf] %v133
                %v135 = vld [vmem:[%s127 + $0xc] sm:$0xf]
                %136 = vst [vmem:[%s128 + $0xc] sm:$0xf] %v135
                %v137 = vld [vmem:[%s127 + $0x10] sm:$0xf]
                %138 = vst [vmem:[%s128 + $0x10] sm:$0xf] %v137
                %v139 = vld [vmem:[%s127 + $0x14] sm:$0xf]
                %140 = vst [vmem:[%s128 + $0x14] sm:$0xf] %v139
                %v141 = vld [vmem:[%s127 + $0x18] sm:$0xf]
                %142 = vst [vmem:[%s128 + $0x18] sm:$0xf] %v141
                %v143 = vld [vmem:[%s127 + $0x1c] sm:$0xf]
                %144 = vst [vmem:[%s128 + $0x1c] sm:$0xf] %v143
                %v145 = vld [vmem:[%s127 + $0x40] sm:$0xf]
                %146 = vst [vmem:[%s128 + $0x20] sm:$0xf] %v145
                %v147 = vld [vmem:[%s127 + $0x44] sm:$0xf]
                %148 = vst [vmem:[%s128 + $0x24] sm:$0xf] %v147
                %v149 = vld [vmem:[%s127 + $0x48] sm:$0xf]
                %150 = vst [vmem:[%s128 + $0x28] sm:$0xf] %v149
                %v151 = vld [vmem:[%s127 + $0x4c] sm:$0xf]
                %152 = vst [vmem:[%s128 + $0x2c] sm:$0xf] %v151
                %v153 = vld [vmem:[%s127 + $0x50] sm:$0xf]
                %154 = vst [vmem:[%s128 + $0x30] sm:$0xf] %v153
                %v155 = vld [vmem:[%s127 + $0x54] sm:$0xf]
                %156 = vst [vmem:[%s128 + $0x34] sm:$0xf] %v155
                %v157 = vld [vmem:[%s127 + $0x58] sm:$0xf]
                %158 = vst [vmem:[%s128 + $0x38] sm:$0xf] %v157
                %v159 = vld [vmem:[%s127 + $0x5c] sm:$0xf]
                %160 = vst [vmem:[%s128 + $0x3c] sm:$0xf] %v159
                %v161 = vld [vmem:[%s127 + $0x80] sm:$0xf]
                %162 = vst [vmem:[%s128 + $0x40] sm:$0xf] %v161
                %v163 = vld [vmem:[%s127 + $0x84] sm:$0xf]
                %164 = vst [vmem:[%s128 + $0x44] sm:$0xf] %v163
                %v165 = vld [vmem:[%s127 + $0x88] sm:$0xf]
                %166 = vst [vmem:[%s128 + $0x48] sm:$0xf] %v165
                %v167 = vld [vmem:[%s127 + $0x8c] sm:$0xf]
                %168 = vst [vmem:[%s128 + $0x4c] sm:$0xf] %v167
                %v169 = vld [vmem:[%s127 + $0x90] sm:$0xf]
                %170 = vst [vmem:[%s128 + $0x50] sm:$0xf] %v169
                %v171 = vld [vmem:[%s127 + $0x94] sm:$0xf]
                %172 = vst [vmem:[%s128 + $0x54] sm:$0xf] %v171
                %v173 = vld [vmem:[%s127 + $0x98] sm:$0xf]
                %174 = vst [vmem:[%s128 + $0x58] sm:$0xf] %v173
                %v175 = vld [vmem:[%s127 + $0x9c] sm:$0xf]
                %176 = vst [vmem:[%s128 + $0x5c] sm:$0xf] %v175
              $region41: #{maxsa_transformer_forward.4} parent=35 // loop_footer
                %s126 = sadd.s32 1, %s122
              $region42: #{maxsa_transformer_forward.4} parent=35 // loop_footer_branch
                %121 = sbr.rel target = $region38
              $region43: #{maxsa_transformer_forward.4} parent=35 // loop_exit
                _
            $region36: #{maxsa_transformer_forward.4} parent=27 // pred_fallthru
              _
          $region28: #{maxsa_transformer_forward.4} parent=23 // pred_fallthru
            _
          %244 = vnop
        $region24: #{maxsa_transformer_forward.4} parent=19 // pred_fallthru
          _
      $region20: #{maxsa_transformer_forward.4} parent=5 // pred_fallthru
        _
      %p245 = scmp.le.s32.totalorder 1, %s8
      %p246 = scmp.lt.s32.totalorder %s8, 3
      %p247 = pnand %p245, %p246
      %p248 = pneg %p247
      // Predicated region
      $region62: #{maxsa_transformer_forward.4} parent=5 // pred_check
        _
      $region63: #{maxsa_transformer_forward.4} parent=5 // pred_check_branch
        %250 = sbr.rel (%p247) target = $region65
      $region64: #{maxsa_transformer_forward.4} parent=5 // pred_region
        %s251 = ssub.s32 %s8, 1
        %s252 = sand.u32 %s21, 1
        %s253 = sand.u32 %s21, 1
        %s254 = smul.addr %s253, 96
        %s255 = scalar_lea.vmem [#allocation2], %s254
        // Predicated region
        $region66: #{maxsa_transformer_forward.4} parent=64 // pred_check
          %p256 = pneg %p34
        $region67: #{maxsa_transformer_forward.4} parent=64 // pred_check_branch
          %258 = sbr.rel (%p256) target = $region69
        $region68: #{maxsa_transformer_forward.4} parent=64 // pred_region
          _
        $region69: #{maxsa_transformer_forward.4} parent=64 // pred_fallthru
          _
        %s259 = sand.u32 %s21, 1
        %s260 = sand.u32 %s21, 1
        %s261 = smul.addr %s260, 96
        %s262 = scalar_lea.vmem [#allocation2], %s261
        %p263 = pneg %p34
        %p264 = pneg %p31
        %p265 = pneg %p55
        %p266 = pneg %p52
        %p267 = pneg %p81
        %p268 = pneg %p78
        %s269 = smul.u32 4, %s13
        %p270 = scmp.lt.s32.totalorder %s269, 7
        %s271 = scalar_select %p270, %s269, 7
        %s272 = smul.addr %s271, 2
        %s273 = smul.addr %s272, 4
        %s274 = scalar_lea.vmem %s2, %s273
        %s275 = smul.u32 4, %s13
        %s276 = smul.u32 4, %s13
        %p277 = scmp.lt.s32.totalorder %s276, 7
        %s278 = scalar_select %p277, %s276, 7
        %s279 = smul.addr %s278, 2
        %s280 = smul.addr %s279, 4
        %s281 = scalar_lea.vmem %s2, %s280
        %s282 = smul.u32 4, %s13
        %v284 = vld [vmem:[%s255] sm:$0xf]
        %v285 = vld [vmem:[%s255 + $0x4] sm:$0xf]
        %v286 = vld [vmem:[%s255 + $0x8] sm:$0xf]
        %v287 = vld [vmem:[%s255 + $0xc] sm:$0xf]
        %v288 = vld [vmem:[%s255 + $0x10] sm:$0xf]
        %v289 = vld [vmem:[%s255 + $0x14] sm:$0xf]
        %v290 = vld [vmem:[%s255 + $0x18] sm:$0xf]
        %v291 = vld [vmem:[%s255 + $0x1c] sm:$0xf]
        %s292 = scalar_lea.vmem %s255, 32 [#allocation2]
        %v293 = vld [vmem:[%s292] sm:$0xf]
        %v294 = vld [vmem:[%s292 + $0x4] sm:$0xf]
        %v295 = vld [vmem:[%s292 + $0x8] sm:$0xf]
        %v296 = vld [vmem:[%s292 + $0xc] sm:$0xf]
        %v297 = vld [vmem:[%s292 + $0x10] sm:$0xf]
        %v298 = vld [vmem:[%s292 + $0x14] sm:$0xf]
        %v299 = vld [vmem:[%s292 + $0x18] sm:$0xf]
        %v300 = vld [vmem:[%s292 + $0x1c] sm:$0xf]
        %s301 = scalar_lea.vmem %s255, 64 [#allocation2]
        %v302 = vld [vmem:[%s301] sm:$0xf]
        %v303 = vld [vmem:[%s301 + $0x4] sm:$0xf]
        %v304 = vld [vmem:[%s301 + $0x8] sm:$0xf]
        %v305 = vld [vmem:[%s301 + $0xc] sm:$0xf]
        %v306 = vld [vmem:[%s301 + $0x10] sm:$0xf]
        %v307 = vld [vmem:[%s301 + $0x14] sm:$0xf]
        %v308 = vld [vmem:[%s301 + $0x18] sm:$0xf]
        %v309 = vld [vmem:[%s301 + $0x1c] sm:$0xf]
        %v310 = vld [vmem:[%s1] sm:$0xff]
        %v311 = vld [vmem:[%s1 + $0x8] sm:$0xff]
        %v312 = vld [vmem:[%s1 + $0x10] sm:$0xff]
        %v313 = vld [vmem:[%s1 + $0x18] sm:$0xff]
        %v314 = vld [vmem:[%s1 + $0x20] sm:$0xff]
        %v315 = vld [vmem:[%s1 + $0x28] sm:$0xff]
        %v316 = vld [vmem:[%s1 + $0x30] sm:$0xff]
        %v317 = vld [vmem:[%s1 + $0x38] sm:$0xff]
        %v320 = vunpack.c.l.b16 %v284
        %v321 = vunpack.c.l.b16 %v285
        %v322 = vpack.c.b16 %v321, %v320
        %v325 = vunpack.c.l.b16 %v293
        %v326 = vunpack.c.l.b16 %v294
        %v327 = vpack.c.b16 %v326, %v325
        %vm328 = vcmask 261120
        %v330 = vsel %vm328, %v322, 0
        %v333 = vsel %vm328, %v327, 0
        %335 = vmatprep.subr.bf16.mxu0 0
        %336 = vmatpush1.bf16.xpose.msra.mxu0 %v333
        %337 = vmatprep.subr.bf16.mxu0 0
        %338 = vmatpush1.bf16.xpose.msra.mxu0 0
        %339 = vmatprep.subr.bf16.mxu0 0
        %340 = vmatpush1.bf16.xpose.msra.mxu0 0
        %341 = vmatprep.subr.bf16.mxu0 0
        %342 = vmatpush1.bf16.xpose.msra.mxu0 0
        %343 = vmatprep.subr.bf16.mxu0 0
        %344 = vmatpush1.bf16.xpose.msra.mxu0 0
        %345 = vmatprep.subr.bf16.mxu0 0
        %346 = vmatpush1.bf16.xpose.msra.mxu0 0
        %347 = vmatprep.subr.bf16.mxu0 0
        %348 = vmatpush1.bf16.xpose.msra.mxu0 0
        %349 = vmatprep.subr.bf16.mxu0 0
        %350 = vmatpush1.bf16.xpose.msra.mxu0 0
        %351 = vmatprep.subr.bf16.mxu0 0
        %352 = vmatpush1.bf16.xpose.msra.mxu0 0
        %353 = vmatprep.subr.bf16.mxu0 0
        %354 = vmatpush1.bf16.xpose.msra.mxu0 0
        %355 = vmatprep.subr.bf16.mxu0 0
        %356 = vmatpush1.bf16.xpose.msra.mxu0 0
        %357 = vmatprep.subr.bf16.mxu0 0
        %358 = vmatpush1.bf16.xpose.msra.mxu0 0
        %359 = vmatprep.subr.bf16.mxu0 0
        %360 = vmatpush1.bf16.xpose.msra.mxu0 0
        %361 = vmatprep.subr.bf16.mxu0 0
        %362 = vmatpush1.bf16.xpose.msra.mxu0 0
        %363 = vmatprep.subr.bf16.mxu0 0
        %364 = vmatpush1.bf16.xpose.msra.mxu0 0
        %365 = vmatprep.subr.bf16.mxu0 0
        %366 = vmatpush1.bf16.xpose.msra.mxu0 0
        %367 = vmatprep.mubr.bf16.mxu0 0
        %368 = vmatmul.mubr.bf16.gmra.mrb[0].mxu0 %v330
        %v369 = vpop.f32.mrb[0].mxu0
        %v370 = vadd.f32 %v310, %v369
        %v371 = vpop.f32.mrb[0].mxu0
        %v372 = vpop.f32.mrb[0].mxu0
        %v373 = vadd.f32 %v311, %v372
        %v374 = vpop.f32.mrb[0].mxu0
        %375 = vdwg.mxu0
        %v378 = vunpack.c.l.b16 %v286
        %v379 = vunpack.c.l.b16 %v287
        %v380 = vpack.c.b16 %v379, %v378
        %v383 = vunpack.c.l.b16 %v295
        %v384 = vunpack.c.l.b16 %v296
        %v385 = vpack.c.b16 %v384, %v383
        %v387 = vsel %vm328, %v380, 0
        %v390 = vsel %vm328, %v385, 0
        %392 = vmatprep.subr.bf16.mxu0 0
        %393 = vmatpush1.bf16.xpose.msra.mxu0 %v390
        %394 = vmatprep.subr.bf16.mxu0 0
        %395 = vmatpush1.bf16.xpose.msra.mxu0 0
        %396 = vmatprep.subr.bf16.mxu0 0
        %397 = vmatpush1.bf16.xpose.msra.mxu0 0
        %398 = vmatprep.subr.bf16.mxu0 0
        %399 = vmatpush1.bf16.xpose.msra.mxu0 0
        %400 = vmatprep.subr.bf16.mxu0 0
        %401 = vmatpush1.bf16.xpose.msra.mxu0 0
        %402 = vmatprep.subr.bf16.mxu0 0
        %403 = vmatpush1.bf16.xpose.msra.mxu0 0
        %404 = vmatprep.subr.bf16.mxu0 0
        %405 = vmatpush1.bf16.xpose.msra.mxu0 0
        %406 = vmatprep.subr.bf16.mxu0 0
        %407 = vmatpush1.bf16.xpose.msra.mxu0 0
        %408 = vmatprep.subr.bf16.mxu0 0
        %409 = vmatpush1.bf16.xpose.msra.mxu0 0
        %410 = vmatprep.subr.bf16.mxu0 0
        %411 = vmatpush1.bf16.xpose.msra.mxu0 0
        %412 = vmatprep.subr.bf16.mxu0 0
        %413 = vmatpush1.bf16.xpose.msra.mxu0 0
        %414 = vmatprep.subr.bf16.mxu0 0
        %415 = vmatpush1.bf16.xpose.msra.mxu0 0
        %416 = vmatprep.subr.bf16.mxu0 0
        %417 = vmatpush1.bf16.xpose.msra.mxu0 0
        %418 = vmatprep.subr.bf16.mxu0 0
        %419 = vmatpush1.bf16.xpose.msra.mxu0 0
        %420 = vmatprep.subr.bf16.mxu0 0
        %421 = vmatpush1.bf16.xpose.msra.mxu0 0
        %422 = vmatprep.subr.bf16.mxu0 0
        %423 = vmatpush1.bf16.xpose.msra.mxu0 0
        %424 = vmatprep.mubr.bf16.mxu0 0
        %425 = vmatmul.mubr.bf16.gmra.mrb[0].mxu0 %v387
        %v426 = vpop.f32.mrb[0].mxu0
        %v427 = vadd.f32 %v312, %v426
        %v428 = vpop.f32.mrb[0].mxu0
        %v429 = vpop.f32.mrb[0].mxu0
        %v430 = vadd.f32 %v313, %v429
        %v431 = vpop.f32.mrb[0].mxu0
        %432 = vdwg.mxu0
        %v435 = vunpack.c.l.b16 %v288
        %v436 = vunpack.c.l.b16 %v289
        %v437 = vpack.c.b16 %v436, %v435
        %v440 = vunpack.c.l.b16 %v297
        %v441 = vunpack.c.l.b16 %v298
        %v442 = vpack.c.b16 %v441, %v440
        %v444 = vsel %vm328, %v437, 0
        %v447 = vsel %vm328, %v442, 0
        %449 = vmatprep.subr.bf16.mxu0 0
        %450 = vmatpush1.bf16.xpose.msra.mxu0 %v447
        %451 = vmatprep.subr.bf16.mxu0 0
        %452 = vmatpush1.bf16.xpose.msra.mxu0 0
        %453 = vmatprep.subr.bf16.mxu0 0
        %454 = vmatpush1.bf16.xpose.msra.mxu0 0
        %455 = vmatprep.subr.bf16.mxu0 0
        %456 = vmatpush1.bf16.xpose.msra.mxu0 0
        %457 = vmatprep.subr.bf16.mxu0 0
        %458 = vmatpush1.bf16.xpose.msra.mxu0 0
        %459 = vmatprep.subr.bf16.mxu0 0
        %460 = vmatpush1.bf16.xpose.msra.mxu0 0
        %461 = vmatprep.subr.bf16.mxu0 0
        %462 = vmatpush1.bf16.xpose.msra.mxu0 0
        %463 = vmatprep.subr.bf16.mxu0 0
        %464 = vmatpush1.bf16.xpose.msra.mxu0 0
        %465 = vmatprep.subr.bf16.mxu0 0
        %466 = vmatpush1.bf16.xpose.msra.mxu0 0
        %467 = vmatprep.subr.bf16.mxu0 0
        %468 = vmatpush1.bf16.xpose.msra.mxu0 0
        %469 = vmatprep.subr.bf16.mxu0 0
        %470 = vmatpush1.bf16.xpose.msra.mxu0 0
        %471 = vmatprep.subr.bf16.mxu0 0
        %472 = vmatpush1.bf16.xpose.msra.mxu0 0
        %473 = vmatprep.subr.bf16.mxu0 0
        %474 = vmatpush1.bf16.xpose.msra.mxu0 0
        %475 = vmatprep.subr.bf16.mxu0 0
        %476 = vmatpush1.bf16.xpose.msra.mxu0 0
        %477 = vmatprep.subr.bf16.mxu0 0
        %478 = vmatpush1.bf16.xpose.msra.mxu0 0
        %479 = vmatprep.subr.bf16.mxu0 0
        %480 = vmatpush1.bf16.xpose.msra.mxu0 0
        %481 = vmatprep.mubr.bf16.mxu0 0
        %482 = vmatmul.mubr.bf16.gmra.mrb[0].mxu0 %v444
        %v483 = vpop.f32.mrb[0].mxu0
        %v484 = vadd.f32 %v314, %v483
        %v485 = vpop.f32.mrb[0].mxu0
        %v486 = vpop.f32.mrb[0].mxu0
        %v487 = vadd.f32 %v315, %v486
        %v488 = vpop.f32.mrb[0].mxu0
        %489 = vdwg.mxu0
        %v492 = vunpack.c.l.b16 %v290
        %v493 = vunpack.c.l.b16 %v291
        %v494 = vpack.c.b16 %v493, %v492
        %v497 = vunpack.c.l.b16 %v299
        %v498 = vunpack.c.l.b16 %v300
        %v499 = vpack.c.b16 %v498, %v497
        %v501 = vsel %vm328, %v494, 0
        %v504 = vsel %vm328, %v499, 0
        %506 = vmatprep.subr.bf16.mxu0 0
        %507 = vmatpush1.bf16.xpose.msra.mxu0 %v504
        %508 = vmatprep.subr.bf16.mxu0 0
        %509 = vmatpush1.bf16.xpose.msra.mxu0 0
        %510 = vmatprep.subr.bf16.mxu0 0
        %511 = vmatpush1.bf16.xpose.msra.mxu0 0
        %512 = vmatprep.subr.bf16.mxu0 0
        %513 = vmatpush1.bf16.xpose.msra.mxu0 0
        %514 = vmatprep.subr.bf16.mxu0 0
        %515 = vmatpush1.bf16.xpose.msra.mxu0 0
        %516 = vmatprep.subr.bf16.mxu0 0
        %517 = vmatpush1.bf16.xpose.msra.mxu0 0
        %518 = vmatprep.subr.bf16.mxu0 0
        %519 = vmatpush1.bf16.xpose.msra.mxu0 0
        %520 = vmatprep.subr.bf16.mxu0 0
        %521 = vmatpush1.bf16.xpose.msra.mxu0 0
        %522 = vmatprep.subr.bf16.mxu0 0
        %523 = vmatpush1.bf16.xpose.msra.mxu0 0
        %524 = vmatprep.subr.bf16.mxu0 0
        %525 = vmatpush1.bf16.xpose.msra.mxu0 0
        %526 = vmatprep.subr.bf16.mxu0 0
        %527 = vmatpush1.bf16.xpose.msra.mxu0 0
        %528 = vmatprep.subr.bf16.mxu0 0
        %529 = vmatpush1.bf16.xpose.msra.mxu0 0
        %530 = vmatprep.subr.bf16.mxu0 0
        %531 = vmatpush1.bf16.xpose.msra.mxu0 0
        %532 = vmatprep.subr.bf16.mxu0 0
        %533 = vmatpush1.bf16.xpose.msra.mxu0 0
        %534 = vmatprep.subr.bf16.mxu0 0
        %535 = vmatpush1.bf16.xpose.msra.mxu0 0
        %536 = vmatprep.subr.bf16.mxu0 0
        %537 = vmatpush1.bf16.xpose.msra.mxu0 0
        %538 = vmatprep.mubr.bf16.mxu0 0
        %539 = vmatmul.mubr.bf16.gmra.mrb[0].mxu0 %v501
        %v540 = vpop.f32.mrb[0].mxu0
        %v541 = vadd.f32 %v316, %v540
        %v542 = vpop.f32.mrb[0].mxu0
        %v543 = vpop.f32.mrb[0].mxu0
        %v544 = vadd.f32 %v317, %v543
        %v545 = vpop.f32.mrb[0].mxu0
        %546 = vdwg.mxu0
        %vm547 = vcmask 130048
        %v548 = vsel %vm547, %v370, -inf
        %549 = vmax.xlane.f32.xlu0 %v548
        %v550 = vpop.xlane.xlu0 %549
        %v551 = vsel %vm547, %v373, -inf
        %552 = vmax.xlane.f32.xlu0 %v551
        %v553 = vpop.xlane.xlu0 %552
        %v554 = vsel %vm547, %v427, -inf
        %555 = vmax.xlane.f32.xlu0 %v554
        %v556 = vpop.xlane.xlu0 %555
        %v557 = vsel %vm547, %v430, -inf
        %558 = vmax.xlane.f32.xlu0 %v557
        %v559 = vpop.xlane.xlu0 %558
        %v560 = vsel %vm547, %v484, -inf
        %561 = vmax.xlane.f32.xlu0 %v560
        %v562 = vpop.xlane.xlu0 %561
        %v563 = vsel %vm547, %v487, -inf
        %564 = vmax.xlane.f32.xlu0 %v563
        %v565 = vpop.xlane.xlu0 %564
        %v566 = vsel %vm547, %v541, -inf
        %567 = vmax.xlane.f32.xlu0 %v566
        %v568 = vpop.xlane.xlu0 %567
        %v569 = vsel %vm547, %v544, -inf
        %570 = vmax.xlane.f32.xlu0 %v569
        %v571 = vpop.xlane.xlu0 %570
        %v572 = vsub.f32 %v370, %v550
        %v573 = vsub.f32 %v373, %v553
        %v574 = vsub.f32 %v427, %v556
        %v575 = vsub.f32 %v430, %v559
        %v576 = vsub.f32 %v484, %v562
        %v577 = vsub.f32 %v487, %v565
        %v578 = vsub.f32 %v541, %v568
        %v579 = vsub.f32 %v544, %v571
        %v580 = vmul.f32 %v572, 1.442695
        %v581 = vpow.pop %v580
        %v582 = vmul.f32 %v573, 1.442695
        %v583 = vpow.pop %v582
        %v584 = vmul.f32 %v574, 1.442695
        %v585 = vpow.pop %v584
        %v586 = vmul.f32 %v575, 1.442695
        %v587 = vpow.pop %v586
        %v588 = vmul.f32 %v576, 1.442695
        %v589 = vpow.pop %v588
        %v590 = vmul.f32 %v577, 1.442695
        %v591 = vpow.pop %v590
        %v592 = vmul.f32 %v578, 1.442695
        %v593 = vpow.pop %v592
        %v594 = vmul.f32 %v579, 1.442695
        %v595 = vpow.pop %v594
        %v596 = vsel %vm547, %v581, 0.0
        %597 = vadd.xlane.f32.xlu0 %v596
        %v598 = vpop.xlane.xlu0 %597
        %v599 = vsel %vm547, %v583, 0.0
        %600 = vadd.xlane.f32.xlu0 %v599
        %v601 = vpop.xlane.xlu0 %600
        %v602 = vsel %vm547, %v585, 0.0
        %603 = vadd.xlane.f32.xlu0 %v602
        %v604 = vpop.xlane.xlu0 %603
        %v605 = vsel %vm547, %v587, 0.0
        %606 = vadd.xlane.f32.xlu0 %v605
        %v607 = vpop.xlane.xlu0 %606
        %v608 = vsel %vm547, %v589, 0.0
        %609 = vadd.xlane.f32.xlu0 %v608
        %v610 = vpop.xlane.xlu0 %609
        %v611 = vsel %vm547, %v591, 0.0
        %612 = vadd.xlane.f32.xlu0 %v611
        %v613 = vpop.xlane.xlu0 %612
        %v614 = vsel %vm547, %v593, 0.0
        %615 = vadd.xlane.f32.xlu0 %v614
        %v616 = vpop.xlane.xlu0 %615
        %v617 = vsel %vm547, %v595, 0.0
        %618 = vadd.xlane.f32.xlu0 %v617
        %v619 = vpop.xlane.xlu0 %618
        %v620 = vrcp.pop %v598
        %v621 = vrcp.pop %v601
        %v622 = vrcp.pop %v604
        %v623 = vrcp.pop %v607
        %v624 = vrcp.pop %v610
        %v625 = vrcp.pop %v613
        %v626 = vrcp.pop %v616
        %v627 = vrcp.pop %v619
        %v628 = vmul.f32 %v581, %v620
        %v629 = vmul.f32 %v583, %v621
        %v630 = vmul.f32 %v585, %v622
        %v631 = vmul.f32 %v587, %v623
        %v632 = vmul.f32 %v589, %v624
        %v633 = vmul.f32 %v591, %v625
        %v634 = vmul.f32 %v593, %v626
        %v635 = vmul.f32 %v595, %v627
        %v636 = vpack.c.bf16 %v629, %v628
        %v637 = vpack.c.bf16 %v631, %v630
        %v638 = vpack.c.bf16 %v633, %v632
        %v639 = vpack.c.bf16 %v635, %v634
        %v642 = vunpack.c.l.b16 %v302
        %v643 = vunpack.c.l.b16 %v303
        %v644 = vpack.c.b16 %v643, %v642
        %v647 = vsel %vm547, %v636, 0
        %649 = vmatprep.subr.bf16.mxu0 0
        %650 = vmatpush1.bf16.msra.mxu0 %v644
        %651 = vmatprep.subr.bf16.mxu0 0
        %652 = vmatpush1.bf16.msra.mxu0 0
        %653 = vmatprep.subr.bf16.mxu0 0
        %654 = vmatpush1.bf16.msra.mxu0 0
        %655 = vmatprep.subr.bf16.mxu0 0
        %656 = vmatpush1.bf16.msra.mxu0 0
        %657 = vmatprep.subr.bf16.mxu0 0
        %658 = vmatpush1.bf16.msra.mxu0 0
        %659 = vmatprep.subr.bf16.mxu0 0
        %660 = vmatpush1.bf16.msra.mxu0 0
        %661 = vmatprep.subr.bf16.mxu0 0
        %662 = vmatpush1.bf16.msra.mxu0 0
        %663 = vmatprep.subr.bf16.mxu0 0
        %664 = vmatpush1.bf16.msra.mxu0 0
        %665 = vmatprep.subr.bf16.mxu0 0
        %666 = vmatpush1.bf16.msra.mxu0 0
        %667 = vmatprep.subr.bf16.mxu0 0
        %668 = vmatpush1.bf16.msra.mxu0 0
        %669 = vmatprep.subr.bf16.mxu0 0
        %670 = vmatpush1.bf16.msra.mxu0 0
        %671 = vmatprep.subr.bf16.mxu0 0
        %672 = vmatpush1.bf16.msra.mxu0 0
        %673 = vmatprep.subr.bf16.mxu0 0
        %674 = vmatpush1.bf16.msra.mxu0 0
        %675 = vmatprep.subr.bf16.mxu0 0
        %676 = vmatpush1.bf16.msra.mxu0 0
        %677 = vmatprep.subr.bf16.mxu0 0
        %678 = vmatpush1.bf16.msra.mxu0 0
        %679 = vmatprep.subr.bf16.mxu0 0
        %680 = vmatpush1.bf16.msra.mxu0 0
        %681 = vmatprep.mubr.bf16.mxu0 0
        %682 = vmatmul.mubr.bf16.gmra.mrb[0].mxu0 %v647
        %v683 = vpop.f32.mrb[0].mxu0
        %v684 = vadd.f32 0.0, %v683
        %v685 = vpop.f32.mrb[0].mxu0
        %v686 = vpop.f32.mrb[0].mxu0
        %v687 = vadd.f32 0.0, %v686
        %v688 = vpop.f32.mrb[0].mxu0
        %689 = vdwg.mxu0
        %v692 = vunpack.c.l.b16 %v304
        %v693 = vunpack.c.l.b16 %v305
        %v694 = vpack.c.b16 %v693, %v692
        %v697 = vsel %vm547, %v637, 0
        %699 = vmatprep.subr.bf16.mxu0 0
        %700 = vmatpush1.bf16.msra.mxu0 %v694
        %701 = vmatprep.subr.bf16.mxu0 0
        %702 = vmatpush1.bf16.msra.mxu0 0
        %703 = vmatprep.subr.bf16.mxu0 0
        %704 = vmatpush1.bf16.msra.mxu0 0
        %705 = vmatprep.subr.bf16.mxu0 0
        %706 = vmatpush1.bf16.msra.mxu0 0
        %707 = vmatprep.subr.bf16.mxu0 0
        %708 = vmatpush1.bf16.msra.mxu0 0
        %709 = vmatprep.subr.bf16.mxu0 0
        %710 = vmatpush1.bf16.msra.mxu0 0
        %711 = vmatprep.subr.bf16.mxu0 0
        %712 = vmatpush1.bf16.msra.mxu0 0
        %713 = vmatprep.subr.bf16.mxu0 0
        %714 = vmatpush1.bf16.msra.mxu0 0
        %715 = vmatprep.subr.bf16.mxu0 0
        %716 = vmatpush1.bf16.msra.mxu0 0
        %717 = vmatprep.subr.bf16.mxu0 0
        %718 = vmatpush1.bf16.msra.mxu0 0
        %719 = vmatprep.subr.bf16.mxu0 0
        %720 = vmatpush1.bf16.msra.mxu0 0
        %721 = vmatprep.subr.bf16.mxu0 0
        %722 = vmatpush1.bf16.msra.mxu0 0
        %723 = vmatprep.subr.bf16.mxu0 0
        %724 = vmatpush1.bf16.msra.mxu0 0
        %725 = vmatprep.subr.bf16.mxu0 0
        %726 = vmatpush1.bf16.msra.mxu0 0
        %727 = vmatprep.subr.bf16.mxu0 0
        %728 = vmatpush1.bf16.msra.mxu0 0
        %729 = vmatprep.subr.bf16.mxu0 0
        %730 = vmatpush1.bf16.msra.mxu0 0
        %731 = vmatprep.mubr.bf16.mxu0 0
        %732 = vmatmul.mubr.bf16.gmra.mrb[0].mxu0 %v697
        %v733 = vpop.f32.mrb[0].mxu0
        %v734 = vadd.f32 0.0, %v733
        %v735 = vpop.f32.mrb[0].mxu0
        %v736 = vpop.f32.mrb[0].mxu0
        %v737 = vadd.f32 0.0, %v736
        %v738 = vpop.f32.mrb[0].mxu0
        %739 = vdwg.mxu0
        %v742 = vunpack.c.l.b16 %v306
        %v743 = vunpack.c.l.b16 %v307
        %v744 = vpack.c.b16 %v743, %v742
        %v747 = vsel %vm547, %v638, 0
        %749 = vmatprep.subr.bf16.mxu0 0
        %750 = vmatpush1.bf16.msra.mxu0 %v744
        %751 = vmatprep.subr.bf16.mxu0 0
        %752 = vmatpush1.bf16.msra.mxu0 0
        %753 = vmatprep.subr.bf16.mxu0 0
        %754 = vmatpush1.bf16.msra.mxu0 0
        %755 = vmatprep.subr.bf16.mxu0 0
        %756 = vmatpush1.bf16.msra.mxu0 0
        %757 = vmatprep.subr.bf16.mxu0 0
        %758 = vmatpush1.bf16.msra.mxu0 0
        %759 = vmatprep.subr.bf16.mxu0 0
        %760 = vmatpush1.bf16.msra.mxu0 0
        %761 = vmatprep.subr.bf16.mxu0 0
        %762 = vmatpush1.bf16.msra.mxu0 0
        %763 = vmatprep.subr.bf16.mxu0 0
        %764 = vmatpush1.bf16.msra.mxu0 0
        %765 = vmatprep.subr.bf16.mxu0 0
        %766 = vmatpush1.bf16.msra.mxu0 0
        %767 = vmatprep.subr.bf16.mxu0 0
        %768 = vmatpush1.bf16.msra.mxu0 0
        %769 = vmatprep.subr.bf16.mxu0 0
        %770 = vmatpush1.bf16.msra.mxu0 0
        %771 = vmatprep.subr.bf16.mxu0 0
        %772 = vmatpush1.bf16.msra.mxu0 0
        %773 = vmatprep.subr.bf16.mxu0 0
        %774 = vmatpush1.bf16.msra.mxu0 0
        %775 = vmatprep.subr.bf16.mxu0 0
        %776 = vmatpush1.bf16.msra.mxu0 0
        %777 = vmatprep.subr.bf16.mxu0 0
        %778 = vmatpush1.bf16.msra.mxu0 0
        %779 = vmatprep.subr.bf16.mxu0 0
        %780 = vmatpush1.bf16.msra.mxu0 0
        %781 = vmatprep.mubr.bf16.mxu0 0
        %782 = vmatmul.mubr.bf16.gmra.mrb[0].mxu0 %v747
        %v783 = vpop.f32.mrb[0].mxu0
        %v784 = vadd.f32 0.0, %v783
        %v785 = vpop.f32.mrb[0].mxu0
        %v786 = vpop.f32.mrb[0].mxu0
        %v787 = vadd.f32 0.0, %v786
        %v788 = vpop.f32.mrb[0].mxu0
        %789 = vdwg.mxu0
        %v792 = vunpack.c.l.b16 %v308
        %v793 = vunpack.c.l.b16 %v309
        %v794 = vpack.c.b16 %v793, %v792
        %v797 = vsel %vm547, %v639, 0
        %799 = vmatprep.subr.bf16.mxu0 0
        %800 = vmatpush1.bf16.msra.mxu0 %v794
        %801 = vmatprep.subr.bf16.mxu0 0
        %802 = vmatpush1.bf16.msra.mxu0 0
        %803 = vmatprep.subr.bf16.mxu0 0
        %804 = vmatpush1.bf16.msra.mxu0 0
        %805 = vmatprep.subr.bf16.mxu0 0
        %806 = vmatpush1.bf16.msra.mxu0 0
        %807 = vmatprep.subr.bf16.mxu0 0
        %808 = vmatpush1.bf16.msra.mxu0 0
        %809 = vmatprep.subr.bf16.mxu0 0
        %810 = vmatpush1.bf16.msra.mxu0 0
        %811 = vmatprep.subr.bf16.mxu0 0
        %812 = vmatpush1.bf16.msra.mxu0 0
        %813 = vmatprep.subr.bf16.mxu0 0
        %814 = vmatpush1.bf16.msra.mxu0 0
        %815 = vmatprep.subr.bf16.mxu0 0
        %816 = vmatpush1.bf16.msra.mxu0 0
        %817 = vmatprep.subr.bf16.mxu0 0
        %818 = vmatpush1.bf16.msra.mxu0 0
        %819 = vmatprep.subr.bf16.mxu0 0
        %820 = vmatpush1.bf16.msra.mxu0 0
        %821 = vmatprep.subr.bf16.mxu0 0
        %822 = vmatpush1.bf16.msra.mxu0 0
        %823 = vmatprep.subr.bf16.mxu0 0
        %824 = vmatpush1.bf16.msra.mxu0 0
        %825 = vmatprep.subr.bf16.mxu0 0
        %826 = vmatpush1.bf16.msra.mxu0 0
        %827 = vmatprep.subr.bf16.mxu0 0
        %828 = vmatpush1.bf16.msra.mxu0 0
        %829 = vmatprep.subr.bf16.mxu0 0
        %830 = vmatpush1.bf16.msra.mxu0 0
        %831 = vmatprep.mubr.bf16.mxu0 0
        %832 = vmatmul.mubr.bf16.gmra.mrb[0].mxu0 %v797
        %v833 = vpop.f32.mrb[0].mxu0
        %v834 = vadd.f32 0.0, %v833
        %v835 = vpop.f32.mrb[0].mxu0
        %v836 = vpop.f32.mrb[0].mxu0
        %v837 = vadd.f32 0.0, %v836
        %v838 = vpop.f32.mrb[0].mxu0
        %839 = vdwg.mxu0
        %v840 = vpack.c.bf16 %v687, %v684
        %v841 = vpack.c.bf16 %v737, %v734
        %v842 = vpack.c.bf16 %v787, %v784
        %v843 = vpack.c.bf16 %v837, %v834
        %v848 = vunpack.c.l.b16 %v840
        %v849 = vunpack.c.h.b16 %v840
        %v850 = vunpack.c.l.b16 %v841
        %v851 = vunpack.c.h.b16 %v841
        %v852 = vunpack.c.l.b16 %v842
        %v853 = vunpack.c.h.b16 %v842
        %v854 = vunpack.c.l.b16 %v843
        %v855 = vunpack.c.h.b16 %v843
        %v856 = vpack.c.b16 %v848, %v848
        %v857 = vpack.c.b16 %v849, %v849
        %v858 = vpack.c.b16 %v850, %v850
        %v859 = vpack.c.b16 %v851, %v851
        %v860 = vpack.c.b16 %v852, %v852
        %v861 = vpack.c.b16 %v853, %v853
        %v862 = vpack.c.b16 %v854, %v854
        %v863 = vpack.c.b16 %v855, %v855
        %vm872 = vcmask 257024
        %873 = vst.msk [vmem:[%s281] sm:$0xf] %vm872, %v856
        %874 = vst.msk [vmem:[%s281 + $0x4] sm:$0xf] %vm872, %v857
        %875 = vst.msk [vmem:[%s281 + $0x8] sm:$0xf] %vm872, %v858
        %876 = vst.msk [vmem:[%s281 + $0xc] sm:$0xf] %vm872, %v859
        %877 = vst.msk [vmem:[%s281 + $0x10] sm:$0xf] %vm872, %v860
        %878 = vst.msk [vmem:[%s281 + $0x14] sm:$0xf] %vm872, %v861
        %879 = vst.msk [vmem:[%s281 + $0x18] sm:$0xf] %vm872, %v862
        %880 = vst.msk [vmem:[%s281 + $0x1c] sm:$0xf] %vm872, %v863
        %s881 = smul.u32 4, %s13
        %p882 = scmp.lt.s32.totalorder %s881, 7
        %s883 = scalar_select %p882, %s881, 7
        %s884 = smul.addr %s883, 2
        %s885 = smul.addr %s884, 4
        %s886 = scalar_lea.vmem %s2, %s885
        // Predicated region
        $region70: #{maxsa_transformer_forward.4} parent=64 // pred_check
          %p887 = pneg %p78
        $region71: #{maxsa_transformer_forward.4} parent=64 // pred_check_branch
          %889 = sbr.rel (%p887) target = $region73
        $region72: #{maxsa_transformer_forward.4} parent=64 // pred_region
          %s890 = smul.u32 4, %s13
        $region73: #{maxsa_transformer_forward.4} parent=64 // pred_fallthru
          _
      $region65: #{maxsa_transformer_forward.4} parent=5 // pred_fallthru
        _
      %p891 = scmp.le.s32.totalorder 2, %s8
      // Predicated region
      $region74: #{maxsa_transformer_forward.4} parent=5 // pred_check
        %p892 = pneg %p891
      $region75: #{maxsa_transformer_forward.4} parent=5 // pred_check_branch
        %894 = sbr.rel (%p892) target = $region77
      $region76: #{maxsa_transformer_forward.4} parent=5 // pred_region
        %s895 = ssub.s32 %s8, 2
        // Predicated region
        $region78: #{maxsa_transformer_forward.4} parent=76 // pred_check
          %p896 = pneg %p84
        $region79: #{maxsa_transformer_forward.4} parent=76 // pred_check_branch
          %898 = sbr.rel (%p896) target = $region81
        $region80: #{maxsa_transformer_forward.4} parent=76 // pred_region
          %s899 = smul.u32 4, %s14
          %p900 = scmp.lt.s32.totalorder %s899, 7
          %s901 = scalar_select %p900, %s899, 7
          %s902 = smul.addr %s901, 2
          %s903 = smul.addr %s902, 4
          %s904 = scalar_lea.vmem %s2, %s903
        $region81: #{maxsa_transformer_forward.4} parent=76 // pred_fallthru
          _
      $region77: #{maxsa_transformer_forward.4} parent=5 // pred_fallthru
        _
    $region6: #{maxsa_transformer_forward.4} parent=1 // loop_footer
      %s12 = sadd.s32 1, %s8
    $region7: #{maxsa_transformer_forward.4} parent=1 // loop_footer_branch
      %7 = sbr.rel target = $region3
    $region8: #{maxsa_transformer_forward.4} parent=1 // loop_exit
      _

// kernel: maxsa_transformer_forward.3
$region0: #{maxsa_transformer_forward.3}
  #allocation0 [shape = 'u32[]', space=smem, size = 0x4, offset = 0x4, fixed_abs, tag = 'smem constant byte address 0x4 - core index']
  #allocation1 [shape = 'u32[144,128]{1,0:T(1,128)}', space=vmem, size = 0x12000, scoped, tag = 'internal scratch']
  %s0 = inlined_call_operand.vmem [shape: f32[128,32], index: 0, kind: input, shape index: {}]
  %s1 = inlined_call_operand.vmem [shape: f32[128,32], index: 1, kind: input, shape index: {}]
  %s2 = inlined_call_operand.vmem [shape: bf16[3,32,32], index: 2, kind: input, shape index: {}]
  %s3 = inlined_call_operand.vmem [shape: bf16[3,128,32], index: 3, kind: output, shape index: {}]
  %s4 = sld [smem:[#allocation0]]
  $region22: #{maxsa_transformer_forward.3} parent=0
    _
  %s6 = ssub.s32 1, %s4
  %s7 = scalar_select 0, %s6, %s4
  // Predicated region
  $region2: #{maxsa_transformer_forward.3} parent=0 // pred_check
    _
  $region3: #{maxsa_transformer_forward.3} parent=0 // pred_check_branch
    %9 = sbr.rel (0) target = $region5
  $region4: #{maxsa_transformer_forward.3} parent=0 // pred_region
    _
  $region5: #{maxsa_transformer_forward.3} parent=0 // pred_fallthru
    _
  // Predicated region
  $region6: #{maxsa_transformer_forward.3} parent=0 // pred_check
    _
  $region7: #{maxsa_transformer_forward.3} parent=0 // pred_check_branch
    %11 = sbr.rel (0) target = $region9
  $region8: #{maxsa_transformer_forward.3} parent=0 // pred_region
    _
  $region9: #{maxsa_transformer_forward.3} parent=0 // pred_fallthru
    _
  // Predicated region
  $region10: #{maxsa_transformer_forward.3} parent=0 // pred_check
    _
  $region11: #{maxsa_transformer_forward.3} parent=0 // pred_check_branch
    %13 = sbr.rel (0) target = $region13
  $region12: #{maxsa_transformer_forward.3} parent=0 // pred_region
    _
  $region13: #{maxsa_transformer_forward.3} parent=0 // pred_fallthru
    _
  %v15 = vld [vmem:[%s0] sm:$0xff]
  %v16 = vld [vmem:[%s0 + $0x8] sm:$0xff]
  %v17 = vld [vmem:[%s0 + $0x10] sm:$0xff]
  %v18 = vld [vmem:[%s0 + $0x18] sm:$0xff]
  %v19 = vld [vmem:[%s0 + $0x20] sm:$0xff]
  %v20 = vld [vmem:[%s0 + $0x28] sm:$0xff]
  %v21 = vld [vmem:[%s0 + $0x30] sm:$0xff]
  %v22 = vld [vmem:[%s0 + $0x38] sm:$0xff]
  %v23 = vld [vmem:[%s0 + $0x40] sm:$0xff]
  %v24 = vld [vmem:[%s0 + $0x48] sm:$0xff]
  %v25 = vld [vmem:[%s0 + $0x50] sm:$0xff]
  %v26 = vld [vmem:[%s0 + $0x58] sm:$0xff]
  %v27 = vld [vmem:[%s0 + $0x60] sm:$0xff]
  %v28 = vld [vmem:[%s0 + $0x68] sm:$0xff]
  %v29 = vld [vmem:[%s0 + $0x70] sm:$0xff]
  %v30 = vld [vmem:[%s0 + $0x78] sm:$0xff]
  %v31 = vpack.c.bf16 %v16, %v15
  %v32 = vpack.c.bf16 %v18, %v17
  %v33 = vpack.c.bf16 %v20, %v19
  %v34 = vpack.c.bf16 %v22, %v21
  %v35 = vpack.c.bf16 %v24, %v23
  %v36 = vpack.c.bf16 %v26, %v25
  %v37 = vpack.c.bf16 %v28, %v27
  %v38 = vpack.c.bf16 %v30, %v29
  %v39 = vld [vmem:[%s1] sm:$0xff]
  %v40 = vld [vmem:[%s1 + $0x8] sm:$0xff]
  %v41 = vld [vmem:[%s1 + $0x10] sm:$0xff]
  %v42 = vld [vmem:[%s1 + $0x18] sm:$0xff]
  %v43 = vld [vmem:[%s1 + $0x20] sm:$0xff]
  %v44 = vld [vmem:[%s1 + $0x28] sm:$0xff]
  %v45 = vld [vmem:[%s1 + $0x30] sm:$0xff]
  %v46 = vld [vmem:[%s1 + $0x38] sm:$0xff]
  %v47 = vld [vmem:[%s1 + $0x40] sm:$0xff]
  %v48 = vld [vmem:[%s1 + $0x48] sm:$0xff]
  %v49 = vld [vmem:[%s1 + $0x50] sm:$0xff]
  %v50 = vld [vmem:[%s1 + $0x58] sm:$0xff]
  %v51 = vld [vmem:[%s1 + $0x60] sm:$0xff]
  %v52 = vld [vmem:[%s1 + $0x68] sm:$0xff]
  %v53 = vld [vmem:[%s1 + $0x70] sm:$0xff]
  %v54 = vld [vmem:[%s1 + $0x78] sm:$0xff]
  %v55 = vpack.c.bf16 %v40, %v39
  %v56 = vpack.c.bf16 %v42, %v41
  %v57 = vpack.c.bf16 %v44, %v43
  %v58 = vpack.c.bf16 %v46, %v45
  %v59 = vpack.c.bf16 %v48, %v47
  %v60 = vpack.c.bf16 %v50, %v49
  %v61 = vpack.c.bf16 %v52, %v51
  %v62 = vpack.c.bf16 %v54, %v53
  %v63 = vld [vmem:[%s2] sm:$0xf]
  %v64 = vld [vmem:[%s2 + $0x4] sm:$0xf]
  %v65 = vld [vmem:[%s2 + $0x8] sm:$0xf]
  %v66 = vld [vmem:[%s2 + $0xc] sm:$0xf]
  %v71 = vunpack.c.l.b16 %v63
  %v72 = vunpack.c.l.b16 %v64
  %v73 = vunpack.c.l.b16 %v65
  %v74 = vunpack.c.l.b16 %v66
  %v75 = vpack.c.b16 %v72, %v71
  %v76 = vpack.c.b16 %v74, %v73
  %vm77 = vcmask 261120
  %v79 = vsel %vm77, %v31, 0
  %v82 = vsel %vm77, %v32, 0
  %v85 = vsel %vm77, %v33, 0
  %v88 = vsel %vm77, %v34, 0
  %v91 = vsel %vm77, %v35, 0
  %v94 = vsel %vm77, %v36, 0
  %v97 = vsel %vm77, %v37, 0
  %v100 = vsel %vm77, %v38, 0
  %v103 = vsel %vm77, %v75, 0
  %v106 = vsel %vm77, %v76, 0
  %108 = vmatprep.subr.bf16.mxu0 0
  %109 = vmatpush1.bf16.xpose.msra.mxu0 %v103
  %110 = vmatprep.subr.bf16.mxu0 0
  %111 = vmatpush1.bf16.xpose.msra.mxu0 %v106
  %112 = vmatprep.subr.bf16.mxu0 0
  %113 = vmatpush1.bf16.xpose.msra.mxu0 0
  %114 = vmatprep.subr.bf16.mxu0 0
  %115 = vmatpush1.bf16.xpose.msra.mxu0 0
  %116 = vmatprep.subr.bf16.mxu0 0
  %117 = vmatpush1.bf16.xpose.msra.mxu0 0
  %118 = vmatprep.subr.bf16.mxu0 0
  %119 = vmatpush1.bf16.xpose.msra.mxu0 0
  %120 = vmatprep.subr.bf16.mxu0 0
  %121 = vmatpush1.bf16.xpose.msra.mxu0 0
  %122 = vmatprep.subr.bf16.mxu0 0
  %123 = vmatpush1.bf16.xpose.msra.mxu0 0
  %124 = vmatprep.subr.bf16.mxu0 0
  %125 = vmatpush1.bf16.xpose.msra.mxu0 0
  %126 = vmatprep.subr.bf16.mxu0 0
  %127 = vmatpush1.bf16.xpose.msra.mxu0 0
  %128 = vmatprep.subr.bf16.mxu0 0
  %129 = vmatpush1.bf16.xpose.msra.mxu0 0
  %130 = vmatprep.subr.bf16.mxu0 0
  %131 = vmatpush1.bf16.xpose.msra.mxu0 0
  %132 = vmatprep.subr.bf16.mxu0 0
  %133 = vmatpush1.bf16.xpose.msra.mxu0 0
  %134 = vmatprep.subr.bf16.mxu0 0
  %135 = vmatpush1.bf16.xpose.msra.mxu0 0
  %136 = vmatprep.subr.bf16.mxu0 0
  %137 = vmatpush1.bf16.xpose.msra.mxu0 0
  %138 = vmatprep.subr.bf16.mxu0 0
  %139 = vmatpush1.bf16.xpose.msra.mxu0 0
  %140 = vmatprep.mubr.bf16.mxu0 0
  %141 = vmatmul.mubr.bf16.gmra.mrb[0].mxu0 %v79
  %v142 = vpop.f32.mrb[0].mxu0
  %v143 = vadd.f32 0.0, %v142
  %v144 = vpop.f32.mrb[0].mxu0
  %v145 = vpop.f32.mrb[0].mxu0
  %v146 = vadd.f32 0.0, %v145
  %v147 = vpop.f32.mrb[0].mxu0
  %148 = vmatprep.mubr.bf16.mxu0 0
  %149 = vmatmul.mubr.bf16.gmra.mrb[0].mxu0 %v82
  %v150 = vpop.f32.mrb[0].mxu0
  %v151 = vadd.f32 0.0, %v150
  %v152 = vpop.f32.mrb[0].mxu0
  %v153 = vpop.f32.mrb[0].mxu0
  %v154 = vadd.f32 0.0, %v153
  %v155 = vpop.f32.mrb[0].mxu0
  %156 = vmatprep.mubr.bf16.mxu0 0
  %157 = vmatmul.mubr.bf16.gmra.mrb[0].mxu0 %v85
  %v158 = vpop.f32.mrb[0].mxu0
  %v159 = vadd.f32 0.0, %v158
  %v160 = vpop.f32.mrb[0].mxu0
  %v161 = vpop.f32.mrb[0].mxu0
  %v162 = vadd.f32 0.0, %v161
  %v163 = vpop.f32.mrb[0].mxu0
  %164 = vmatprep.mubr.bf16.mxu0 0
  %165 = vmatmul.mubr.bf16.gmra.mrb[0].mxu0 %v88
  %v166 = vpop.f32.mrb[0].mxu0
  %v167 = vadd.f32 0.0, %v166
  %v168 = vpop.f32.mrb[0].mxu0
  %v169 = vpop.f32.mrb[0].mxu0
  %v170 = vadd.f32 0.0, %v169
  %v171 = vpop.f32.mrb[0].mxu0
  %172 = vmatprep.mubr.bf16.mxu0 0
  %173 = vmatmul.mubr.bf16.gmra.mrb[0].mxu0 %v91
  %v174 = vpop.f32.mrb[0].mxu0
  %v175 = vadd.f32 0.0, %v174
  %v176 = vpop.f32.mrb[0].mxu0
  %v177 = vpop.f32.mrb[0].mxu0
  %v178 = vadd.f32 0.0, %v177
  %v179 = vpop.f32.mrb[0].mxu0
  %180 = vmatprep.mubr.bf16.mxu0 0
  %181 = vmatmul.mubr.bf16.gmra.mrb[0].mxu0 %v94
  %v182 = vpop.f32.mrb[0].mxu0
  %v183 = vadd.f32 0.0, %v182
  %v184 = vpop.f32.mrb[0].mxu0
  %v185 = vpop.f32.mrb[0].mxu0
  %v186 = vadd.f32 0.0, %v185
  %v187 = vpop.f32.mrb[0].mxu0
  %188 = vmatprep.mubr.bf16.mxu0 0
  %189 = vmatmul.mubr.bf16.gmra.mrb[0].mxu0 %v97
  %v190 = vpop.f32.mrb[0].mxu0
  %v191 = vadd.f32 0.0, %v190
  %v192 = vpop.f32.mrb[0].mxu0
  %v193 = vpop.f32.mrb[0].mxu0
  %v194 = vadd.f32 0.0, %v193
  %v195 = vpop.f32.mrb[0].mxu0
  %196 = vmatprep.mubr.bf16.mxu0 0
  %197 = vmatmul.mubr.bf16.gmra.mrb[0].mxu0 %v100
  %v198 = vpop.f32.mrb[0].mxu0
  %v199 = vadd.f32 0.0, %v198
  %v200 = vpop.f32.mrb[0].mxu0
  %v201 = vpop.f32.mrb[0].mxu0
  %v202 = vadd.f32 0.0, %v201
  %v203 = vpop.f32.mrb[0].mxu0
  %204 = vdwg.mxu0
  %v205 = vpack.c.bf16 %v146, %v143
  %v206 = vpack.c.bf16 %v154, %v151
  %v207 = vpack.c.bf16 %v162, %v159
  %v208 = vpack.c.bf16 %v170, %v167
  %v209 = vpack.c.bf16 %v178, %v175
  %v210 = vpack.c.bf16 %v186, %v183
  %v211 = vpack.c.bf16 %v194, %v191
  %v212 = vpack.c.bf16 %v202, %v199
  %v221 = vunpack.c.l.b16 %v205
  %v222 = vunpack.c.h.b16 %v205
  %v223 = vunpack.c.l.b16 %v206
  %v224 = vunpack.c.h.b16 %v206
  %v225 = vunpack.c.l.b16 %v207
  %v226 = vunpack.c.h.b16 %v207
  %v227 = vunpack.c.l.b16 %v208
  %v228 = vunpack.c.h.b16 %v208
  %v229 = vunpack.c.l.b16 %v209
  %v230 = vunpack.c.h.b16 %v209
  %v231 = vunpack.c.l.b16 %v210
  %v232 = vunpack.c.h.b16 %v210
  %v233 = vunpack.c.l.b16 %v211
  %v234 = vunpack.c.h.b16 %v211
  %v235 = vunpack.c.l.b16 %v212
  %v236 = vunpack.c.h.b16 %v212
  %v237 = vpack.c.b16 %v221, %v221
  %v238 = vpack.c.b16 %v222, %v222
  %v239 = vpack.c.b16 %v223, %v223
  %v240 = vpack.c.b16 %v224, %v224
  %v241 = vpack.c.b16 %v225, %v225
  %v242 = vpack.c.b16 %v226, %v226
  %v243 = vpack.c.b16 %v227, %v227
  %v244 = vpack.c.b16 %v228, %v228
  %v245 = vpack.c.b16 %v229, %v229
  %v246 = vpack.c.b16 %v230, %v230
  %v247 = vpack.c.b16 %v231, %v231
  %v248 = vpack.c.b16 %v232, %v232
  %v249 = vpack.c.b16 %v233, %v233
  %v250 = vpack.c.b16 %v234, %v234
  %v251 = vpack.c.b16 %v235, %v235
  %v252 = vpack.c.b16 %v236, %v236
  %vm269 = vcmask 257024
  %270 = vst.msk [vmem:[%s3] sm:$0xf] %vm269, %v237
  %271 = vst.msk [vmem:[%s3 + $0x4] sm:$0xf] %vm269, %v238
  %272 = vst.msk [vmem:[%s3 + $0x8] sm:$0xf] %vm269, %v239
  %273 = vst.msk [vmem:[%s3 + $0xc] sm:$0xf] %vm269, %v240
  %274 = vst.msk [vmem:[%s3 + $0x10] sm:$0xf] %vm269, %v241
  %275 = vst.msk [vmem:[%s3 + $0x14] sm:$0xf] %vm269, %v242
  %276 = vst.msk [vmem:[%s3 + $0x18] sm:$0xf] %vm269, %v243
  %277 = vst.msk [vmem:[%s3 + $0x1c] sm:$0xf] %vm269, %v244
  %278 = vst.msk [vmem:[%s3 + $0x20] sm:$0xf] %vm269, %v245
  %279 = vst.msk [vmem:[%s3 + $0x24] sm:$0xf] %vm269, %v246
  %280 = vst.msk [vmem:[%s3 + $0x28] sm:$0xf] %vm269, %v247
  %281 = vst.msk [vmem:[%s3 + $0x2c] sm:$0xf] %vm269, %v248
  %282 = vst.msk [vmem:[%s3 + $0x30] sm:$0xf] %vm269, %v249
  %283 = vst.msk [vmem:[%s3 + $0x34] sm:$0xf] %vm269, %v250
  %284 = vst.msk [vmem:[%s3 + $0x38] sm:$0xf] %vm269, %v251
  %285 = vst.msk [vmem:[%s3 + $0x3c] sm:$0xf] %vm269, %v252
  %s286 = scalar_lea.vmem %s2, 16
  %v287 = vld [vmem:[%s286] sm:$0xf]
  %v288 = vld [vmem:[%s286 + $0x4] sm:$0xf]
  %v289 = vld [vmem:[%s286 + $0x8] sm:$0xf]
  %v290 = vld [vmem:[%s286 + $0xc] sm:$0xf]
  %v295 = vunpack.c.l.b16 %v287
  %v296 = vunpack.c.l.b16 %v288
  %v297 = vunpack.c.l.b16 %v289
  %v298 = vunpack.c.l.b16 %v290
  %v299 = vpack.c.b16 %v296, %v295
  %v300 = vpack.c.b16 %v298, %v297
  %v302 = vsel %vm77, %v55, 0
  %v305 = vsel %vm77, %v56, 0
  %v308 = vsel %vm77, %v57, 0
  %v311 = vsel %vm77, %v58, 0
  %v314 = vsel %vm77, %v59, 0
  %v317 = vsel %vm77, %v60, 0
  %v320 = vsel %vm77, %v61, 0
  %v323 = vsel %vm77, %v62, 0
  %v326 = vsel %vm77, %v299, 0
  %v329 = vsel %vm77, %v300, 0
  %331 = vmatprep.subr.bf16.mxu0 0
  %332 = vmatpush1.bf16.xpose.msra.mxu0 %v326
  %333 = vmatprep.subr.bf16.mxu0 0
  %334 = vmatpush1.bf16.xpose.msra.mxu0 %v329
  %335 = vmatprep.subr.bf16.mxu0 0
  %336 = vmatpush1.bf16.xpose.msra.mxu0 0
  %337 = vmatprep.subr.bf16.mxu0 0
  %338 = vmatpush1.bf16.xpose.msra.mxu0 0
  %339 = vmatprep.subr.bf16.mxu0 0
  %340 = vmatpush1.bf16.xpose.msra.mxu0 0
  %341 = vmatprep.subr.bf16.mxu0 0
  %342 = vmatpush1.bf16.xpose.msra.mxu0 0
  %343 = vmatprep.subr.bf16.mxu0 0
  %344 = vmatpush1.bf16.xpose.msra.mxu0 0
  %345 = vmatprep.subr.bf16.mxu0 0
  %346 = vmatpush1.bf16.xpose.msra.mxu0 0
  %347 = vmatprep.subr.bf16.mxu0 0
  %348 = vmatpush1.bf16.xpose.msra.mxu0 0
  %349 = vmatprep.subr.bf16.mxu0 0
  %350 = vmatpush1.bf16.xpose.msra.mxu0 0
  %351 = vmatprep.subr.bf16.mxu0 0
  %352 = vmatpush1.bf16.xpose.msra.mxu0 0
  %353 = vmatprep.subr.bf16.mxu0 0
  %354 = vmatpush1.bf16.xpose.msra.mxu0 0
  %355 = vmatprep.subr.bf16.mxu0 0
  %356 = vmatpush1.bf16.xpose.msra.mxu0 0
  %357 = vmatprep.subr.bf16.mxu0 0
  %358 = vmatpush1.bf16.xpose.msra.mxu0 0
  %359 = vmatprep.subr.bf16.mxu0 0
  %360 = vmatpush1.bf16.xpose.msra.mxu0 0
  %361 = vmatprep.subr.bf16.mxu0 0
  %362 = vmatpush1.bf16.xpose.msra.mxu0 0
  %363 = vmatprep.mubr.bf16.mxu0 0
  %364 = vmatmul.mubr.bf16.gmra.mrb[0].mxu0 %v302
  %v365 = vpop.f32.mrb[0].mxu0
  %v366 = vadd.f32 0.0, %v365
  %v367 = vpop.f32.mrb[0].mxu0
  %v368 = vpop.f32.mrb[0].mxu0
  %v369 = vadd.f32 0.0, %v368
  %v370 = vpop.f32.mrb[0].mxu0
  %371 = vmatprep.mubr.bf16.mxu0 0
  %372 = vmatmul.mubr.bf16.gmra.mrb[0].mxu0 %v305
  %v373 = vpop.f32.mrb[0].mxu0
  %v374 = vadd.f32 0.0, %v373
  %v375 = vpop.f32.mrb[0].mxu0
  %v376 = vpop.f32.mrb[0].mxu0
  %v377 = vadd.f32 0.0, %v376
  %v378 = vpop.f32.mrb[0].mxu0
  %379 = vmatprep.mubr.bf16.mxu0 0
  %380 = vmatmul.mubr.bf16.gmra.mrb[0].mxu0 %v308
  %v381 = vpop.f32.mrb[0].mxu0
  %v382 = vadd.f32 0.0, %v381
  %v383 = vpop.f32.mrb[0].mxu0
  %v384 = vpop.f32.mrb[0].mxu0
  %v385 = vadd.f32 0.0, %v384
  %v386 = vpop.f32.mrb[0].mxu0
  %387 = vmatprep.mubr.bf16.mxu0 0
  %388 = vmatmul.mubr.bf16.gmra.mrb[0].mxu0 %v311
  %v389 = vpop.f32.mrb[0].mxu0
  %v390 = vadd.f32 0.0, %v389
  %v391 = vpop.f32.mrb[0].mxu0
  %v392 = vpop.f32.mrb[0].mxu0
  %v393 = vadd.f32 0.0, %v392
  %v394 = vpop.f32.mrb[0].mxu0
  %395 = vmatprep.mubr.bf16.mxu0 0
  %396 = vmatmul.mubr.bf16.gmra.mrb[0].mxu0 %v314
  %v397 = vpop.f32.mrb[0].mxu0
  %v398 = vadd.f32 0.0, %v397
  %v399 = vpop.f32.mrb[0].mxu0
  %v400 = vpop.f32.mrb[0].mxu0
  %v401 = vadd.f32 0.0, %v400
  %v402 = vpop.f32.mrb[0].mxu0
  %403 = vmatprep.mubr.bf16.mxu0 0
  %404 = vmatmul.mubr.bf16.gmra.mrb[0].mxu0 %v317
  %v405 = vpop.f32.mrb[0].mxu0
  %v406 = vadd.f32 0.0, %v405
  %v407 = vpop.f32.mrb[0].mxu0
  %v408 = vpop.f32.mrb[0].mxu0
  %v409 = vadd.f32 0.0, %v408
  %v410 = vpop.f32.mrb[0].mxu0
  %411 = vmatprep.mubr.bf16.mxu0 0
  %412 = vmatmul.mubr.bf16.gmra.mrb[0].mxu0 %v320
  %v413 = vpop.f32.mrb[0].mxu0
  %v414 = vadd.f32 0.0, %v413
  %v415 = vpop.f32.mrb[0].mxu0
  %v416 = vpop.f32.mrb[0].mxu0
  %v417 = vadd.f32 0.0, %v416
  %v418 = vpop.f32.mrb[0].mxu0
  %419 = vmatprep.mubr.bf16.mxu0 0
  %420 = vmatmul.mubr.bf16.gmra.mrb[0].mxu0 %v323
  %v421 = vpop.f32.mrb[0].mxu0
  %v422 = vadd.f32 0.0, %v421
  %v423 = vpop.f32.mrb[0].mxu0
  %v424 = vpop.f32.mrb[0].mxu0
  %v425 = vadd.f32 0.0, %v424
  %v426 = vpop.f32.mrb[0].mxu0
  %427 = vdwg.mxu0
  %v428 = vpack.c.bf16 %v369, %v366
  %v429 = vpack.c.bf16 %v377, %v374
  %v430 = vpack.c.bf16 %v385, %v382
  %v431 = vpack.c.bf16 %v393, %v390
  %v432 = vpack.c.bf16 %v401, %v398
  %v433 = vpack.c.bf16 %v409, %v406
  %v434 = vpack.c.bf16 %v417, %v414
  %v435 = vpack.c.bf16 %v425, %v422
  %v444 = vunpack.c.l.b16 %v428
  %v445 = vunpack.c.h.b16 %v428
  %v446 = vunpack.c.l.b16 %v429
  %v447 = vunpack.c.h.b16 %v429
  %v448 = vunpack.c.l.b16 %v430
  %v449 = vunpack.c.h.b16 %v430
  %v450 = vunpack.c.l.b16 %v431
  %v451 = vunpack.c.h.b16 %v431
  %v452 = vunpack.c.l.b16 %v432
  %v453 = vunpack.c.h.b16 %v432
  %v454 = vunpack.c.l.b16 %v433
  %v455 = vunpack.c.h.b16 %v433
  %v456 = vunpack.c.l.b16 %v434
  %v457 = vunpack.c.h.b16 %v434
  %v458 = vunpack.c.l.b16 %v435
  %v459 = vunpack.c.h.b16 %v435
  %v460 = vpack.c.b16 %v444, %v444
  %v461 = vpack.c.b16 %v445, %v445
  %v462 = vpack.c.b16 %v446, %v446
  %v463 = vpack.c.b16 %v447, %v447
  %v464 = vpack.c.b16 %v448, %v448
  %v465 = vpack.c.b16 %v449, %v449
  %v466 = vpack.c.b16 %v450, %v450
  %v467 = vpack.c.b16 %v451, %v451
  %v468 = vpack.c.b16 %v452, %v452
  %v469 = vpack.c.b16 %v453, %v453
  %v470 = vpack.c.b16 %v454, %v454
  %v471 = vpack.c.b16 %v455, %v455
  %v472 = vpack.c.b16 %v456, %v456
  %v473 = vpack.c.b16 %v457, %v457
  %v474 = vpack.c.b16 %v458, %v458
  %v475 = vpack.c.b16 %v459, %v459
  %s492 = scalar_lea.vmem %s3, 64
  %493 = vst.msk [vmem:[%s492] sm:$0xf] %vm269, %v460
  %494 = vst.msk [vmem:[%s492 + $0x4] sm:$0xf] %vm269, %v461
  %495 = vst.msk [vmem:[%s492 + $0x8] sm:$0xf] %vm269, %v462
  %496 = vst.msk [vmem:[%s492 + $0xc] sm:$0xf] %vm269, %v463
  %497 = vst.msk [vmem:[%s492 + $0x10] sm:$0xf] %vm269, %v464
  %498 = vst.msk [vmem:[%s492 + $0x14] sm:$0xf] %vm269, %v465
  %499 = vst.msk [vmem:[%s492 + $0x18] sm:$0xf] %vm269, %v466
  %500 = vst.msk [vmem:[%s492 + $0x1c] sm:$0xf] %vm269, %v467
  %501 = vst.msk [vmem:[%s492 + $0x20] sm:$0xf] %vm269, %v468
  %502 = vst.msk [vmem:[%s492 + $0x24] sm:$0xf] %vm269, %v469
  %503 = vst.msk [vmem:[%s492 + $0x28] sm:$0xf] %vm269, %v470
  %504 = vst.msk [vmem:[%s492 + $0x2c] sm:$0xf] %vm269, %v471
  %505 = vst.msk [vmem:[%s492 + $0x30] sm:$0xf] %vm269, %v472
  %506 = vst.msk [vmem:[%s492 + $0x34] sm:$0xf] %vm269, %v473
  %507 = vst.msk [vmem:[%s492 + $0x38] sm:$0xf] %vm269, %v474
  %508 = vst.msk [vmem:[%s492 + $0x3c] sm:$0xf] %vm269, %v475
  %s509 = scalar_lea.vmem %s2, 32
  %v510 = vld [vmem:[%s509] sm:$0xf]
  %v511 = vld [vmem:[%s509 + $0x4] sm:$0xf]
  %v512 = vld [vmem:[%s509 + $0x8] sm:$0xf]
  %v513 = vld [vmem:[%s509 + $0xc] sm:$0xf]
  %v518 = vunpack.c.l.b16 %v510
  %v519 = vunpack.c.l.b16 %v511
  %v520 = vunpack.c.l.b16 %v512
  %v521 = vunpack.c.l.b16 %v513
  %v522 = vpack.c.b16 %v519, %v518
  %v523 = vpack.c.b16 %v521, %v520
  %v525 = vsel %vm77, %v522, 0
  %v528 = vsel %vm77, %v523, 0
  %530 = vmatprep.subr.bf16.mxu0 0
  %531 = vmatpush1.bf16.xpose.msra.mxu0 %v525
  %532 = vmatprep.subr.bf16.mxu0 0
  %533 = vmatpush1.bf16.xpose.msra.mxu0 %v528
  %534 = vmatprep.subr.bf16.mxu0 0
  %535 = vmatpush1.bf16.xpose.msra.mxu0 0
  %536 = vmatprep.subr.bf16.mxu0 0
  %537 = vmatpush1.bf16.xpose.msra.mxu0 0
  %538 = vmatprep.subr.bf16.mxu0 0
  %539 = vmatpush1.bf16.xpose.msra.mxu0 0
  %540 = vmatprep.subr.bf16.mxu0 0
  %541 = vmatpush1.bf16.xpose.msra.mxu0 0
  %542 = vmatprep.subr.bf16.mxu0 0
  %543 = vmatpush1.bf16.xpose.msra.mxu0 0
  %544 = vmatprep.subr.bf16.mxu0 0
  %545 = vmatpush1.bf16.xpose.msra.mxu0 0
  %546 = vmatprep.subr.bf16.mxu0 0
  %547 = vmatpush1.bf16.xpose.msra.mxu0 0
  %548 = vmatprep.subr.bf16.mxu0 0
  %549 = vmatpush1.bf16.xpose.msra.mxu0 0
  %550 = vmatprep.subr.bf16.mxu0 0
  %551 = vmatpush1.bf16.xpose.msra.mxu0 0
  %552 = vmatprep.subr.bf16.mxu0 0
  %553 = vmatpush1.bf16.xpose.msra.mxu0 0
  %554 = vmatprep.subr.bf16.mxu0 0
  %555 = vmatpush1.bf16.xpose.msra.mxu0 0
  %556 = vmatprep.subr.bf16.mxu0 0
  %557 = vmatpush1.bf16.xpose.msra.mxu0 0
  %558 = vmatprep.subr.bf16.mxu0 0
  %559 = vmatpush1.bf16.xpose.msra.mxu0 0
  %560 = vmatprep.subr.bf16.mxu0 0
  %561 = vmatpush1.bf16.xpose.msra.mxu0 0
  %562 = vmatprep.mubr.bf16.mxu0 0
  %563 = vmatmul.mubr.bf16.gmra.mrb[0].mxu0 %v302
  %v564 = vpop.f32.mrb[0].mxu0
  %v565 = vadd.f32 0.0, %v564
  %v566 = vpop.f32.mrb[0].mxu0
  %v567 = vpop.f32.mrb[0].mxu0
  %v568 = vadd.f32 0.0, %v567
  %v569 = vpop.f32.mrb[0].mxu0
  %570 = vmatprep.mubr.bf16.mxu0 0
  %571 = vmatmul.mubr.bf16.gmra.mrb[0].mxu0 %v305
  %v572 = vpop.f32.mrb[0].mxu0
  %v573 = vadd.f32 0.0, %v572
  %v574 = vpop.f32.mrb[0].mxu0
  %v575 = vpop.f32.mrb[0].mxu0
  %v576 = vadd.f32 0.0, %v575
  %v577 = vpop.f32.mrb[0].mxu0
  %578 = vmatprep.mubr.bf16.mxu0 0
  %579 = vmatmul.mubr.bf16.gmra.mrb[0].mxu0 %v308
  %v580 = vpop.f32.mrb[0].mxu0
  %v581 = vadd.f32 0.0, %v580
  %v582 = vpop.f32.mrb[0].mxu0
  %v583 = vpop.f32.mrb[0].mxu0
  %v584 = vadd.f32 0.0, %v583
  %v585 = vpop.f32.mrb[0].mxu0
  %586 = vmatprep.mubr.bf16.mxu0 0
  %587 = vmatmul.mubr.bf16.gmra.mrb[0].mxu0 %v311
  %v588 = vpop.f32.mrb[0].mxu0
  %v589 = vadd.f32 0.0, %v588
  %v590 = vpop.f32.mrb[0].mxu0
  %v591 = vpop.f32.mrb[0].mxu0
  %v592 = vadd.f32 0.0, %v591
  %v593 = vpop.f32.mrb[0].mxu0
  %594 = vmatprep.mubr.bf16.mxu0 0
  %595 = vmatmul.mubr.bf16.gmra.mrb[0].mxu0 %v314
  %v596 = vpop.f32.mrb[0].mxu0
  %v597 = vadd.f32 0.0, %v596
  %v598 = vpop.f32.mrb[0].mxu0
  %v599 = vpop.f32.mrb[0].mxu0
  %v600 = vadd.f32 0.0, %v599
  %v601 = vpop.f32.mrb[0].mxu0
  %602 = vmatprep.mubr.bf16.mxu0 0
  %603 = vmatmul.mubr.bf16.gmra.mrb[0].mxu0 %v317
  %v604 = vpop.f32.mrb[0].mxu0
  %v605 = vadd.f32 0.0, %v604
  %v606 = vpop.f32.mrb[0].mxu0
  %v607 = vpop.f32.mrb[0].mxu0
  %v608 = vadd.f32 0.0, %v607
  %v609 = vpop.f32.mrb[0].mxu0
  %610 = vmatprep.mubr.bf16.mxu0 0
  %611 = vmatmul.mubr.bf16.gmra.mrb[0].mxu0 %v320
  %v612 = vpop.f32.mrb[0].mxu0
  %v613 = vadd.f32 0.0, %v612
  %v614 = vpop.f32.mrb[0].mxu0
  %v615 = vpop.f32.mrb[0].mxu0
  %v616 = vadd.f32 0.0, %v615
  %v617 = vpop.f32.mrb[0].mxu0
  %618 = vmatprep.mubr.bf16.mxu0 0
  %619 = vmatmul.mubr.bf16.gmra.mrb[0].mxu0 %v323
  %v620 = vpop.f32.mrb[0].mxu0
  %v621 = vadd.f32 0.0, %v620
  %v622 = vpop.f32.mrb[0].mxu0
  %v623 = vpop.f32.mrb[0].mxu0
  %v624 = vadd.f32 0.0, %v623
  %v625 = vpop.f32.mrb[0].mxu0
  %626 = vdwg.mxu0
  %v627 = vpack.c.bf16 %v568, %v565
  %v628 = vpack.c.bf16 %v576, %v573
  %v629 = vpack.c.bf16 %v584, %v581
  %v630 = vpack.c.bf16 %v592, %v589
  %v631 = vpack.c.bf16 %v600, %v597
  %v632 = vpack.c.bf16 %v608, %v605
  %v633 = vpack.c.bf16 %v616, %v613
  %v634 = vpack.c.bf16 %v624, %v621
  %v643 = vunpack.c.l.b16 %v627
  %v644 = vunpack.c.h.b16 %v627
  %v645 = vunpack.c.l.b16 %v628
  %v646 = vunpack.c.h.b16 %v628
  %v647 = vunpack.c.l.b16 %v629
  %v648 = vunpack.c.h.b16 %v629
  %v649 = vunpack.c.l.b16 %v630
  %v650 = vunpack.c.h.b16 %v630
  %v651 = vunpack.c.l.b16 %v631
  %v652 = vunpack.c.h.b16 %v631
  %v653 = vunpack.c.l.b16 %v632
  %v654 = vunpack.c.h.b16 %v632
  %v655 = vunpack.c.l.b16 %v633
  %v656 = vunpack.c.h.b16 %v633
  %v657 = vunpack.c.l.b16 %v634
  %v658 = vunpack.c.h.b16 %v634
  %v659 = vpack.c.b16 %v643, %v643
  %v660 = vpack.c.b16 %v644, %v644
  %v661 = vpack.c.b16 %v645, %v645
  %v662 = vpack.c.b16 %v646, %v646
  %v663 = vpack.c.b16 %v647, %v647
  %v664 = vpack.c.b16 %v648, %v648
  %v665 = vpack.c.b16 %v649, %v649
  %v666 = vpack.c.b16 %v650, %v650
  %v667 = vpack.c.b16 %v651, %v651
  %v668 = vpack.c.b16 %v652, %v652
  %v669 = vpack.c.b16 %v653, %v653
  %v670 = vpack.c.b16 %v654, %v654
  %v671 = vpack.c.b16 %v655, %v655
  %v672 = vpack.c.b16 %v656, %v656
  %v673 = vpack.c.b16 %v657, %v657
  %v674 = vpack.c.b16 %v658, %v658
  %s691 = scalar_lea.vmem %s3, 128
  %692 = vst.msk [vmem:[%s691] sm:$0xf] %vm269, %v659
  %693 = vst.msk [vmem:[%s691 + $0x4] sm:$0xf] %vm269, %v660
  %694 = vst.msk [vmem:[%s691 + $0x8] sm:$0xf] %vm269, %v661
  %695 = vst.msk [vmem:[%s691 + $0xc] sm:$0xf] %vm269, %v662
  %696 = vst.msk [vmem:[%s691 + $0x10] sm:$0xf] %vm269, %v663
  %697 = vst.msk [vmem:[%s691 + $0x14] sm:$0xf] %vm269, %v664
  %698 = vst.msk [vmem:[%s691 + $0x18] sm:$0xf] %vm269, %v665
  %699 = vst.msk [vmem:[%s691 + $0x1c] sm:$0xf] %vm269, %v666
  %700 = vst.msk [vmem:[%s691 + $0x20] sm:$0xf] %vm269, %v667
  %701 = vst.msk [vmem:[%s691 + $0x24] sm:$0xf] %vm269, %v668
  %702 = vst.msk [vmem:[%s691 + $0x28] sm:$0xf] %vm269, %v669
  %703 = vst.msk [vmem:[%s691 + $0x2c] sm:$0xf] %vm269, %v670
  %704 = vst.msk [vmem:[%s691 + $0x30] sm:$0xf] %vm269, %v671
  %705 = vst.msk [vmem:[%s691 + $0x34] sm:$0xf] %vm269, %v672
  %706 = vst.msk [vmem:[%s691 + $0x38] sm:$0xf] %vm269, %v673
  %707 = vst.msk [vmem:[%s691 + $0x3c] sm:$0xf] %vm269, %v674
  // Predicated region
  $region14: #{maxsa_transformer_forward.3} parent=0 // pred_check
    _
  $region15: #{maxsa_transformer_forward.3} parent=0 // pred_check_branch
    %709 = sbr.rel (0) target = $region17
  $region16: #{maxsa_transformer_forward.3} parent=0 // pred_region
    _
  $region17: #{maxsa_transformer_forward.3} parent=0 // pred_fallthru
    _
  // Predicated region
  $region18: #{maxsa_transformer_forward.3} parent=0 // pred_check
    _
  $region19: #{maxsa_transformer_forward.3} parent=0 // pred_check_branch
    %711 = sbr.rel (0) target = $region21
  $region20: #{maxsa_transformer_forward.3} parent=0 // pred_region
    _
  $region21: #{maxsa_transformer_forward.3} parent=0 // pred_fallthru
    _

// kernel: maxsa_transformer_forward.5
$region0: #{maxsa_transformer_forward.5}
  #allocation0 [shape = 'u32[]', space=smem, size = 0x4, offset = 0x4, fixed_abs, tag = 'smem constant byte address 0x4 - core index']
  #allocation1 [shape = 'u32[144,128]{1,0:T(1,128)}', space=vmem, size = 0x12000, scoped, tag = 'internal scratch']
  %s0 = inlined_call_operand.vmem [shape: f32[128,32], index: 0, kind: input, shape index: {}]
  %s1 = inlined_call_operand.vmem [shape: bf16[128,32], index: 1, kind: input, shape index: {}]
  %s2 = inlined_call_operand.vmem [shape: bf16[32,32], index: 2, kind: input, shape index: {}]
  %s3 = inlined_call_operand.vmem [shape: f32[1,32], index: 3, kind: input, shape index: {}]
  %s4 = inlined_call_operand.vmem [shape: f32[1,32], index: 4, kind: input, shape index: {}]
  %s5 = inlined_call_operand.vmem [shape: bf16[256,32], index: 5, kind: input, shape index: {}]
  %s6 = inlined_call_operand.vmem [shape: bf16[256,32], index: 6, kind: input, shape index: {}]
  %s7 = inlined_call_operand.vmem [shape: bf16[256,32], index: 7, kind: input, shape index: {}]
  %s8 = inlined_call_operand.vmem [shape: f32[1,32], index: 8, kind: input, shape index: {}]
  %s9 = inlined_call_operand.vmem [shape: f32[1,32], index: 9, kind: input, shape index: {}]
  %s10 = inlined_call_operand.vmem [shape: f32[128,32], index: 10, kind: output, shape index: {}]
  %s11 = sld [smem:[#allocation0]]
  $region50: #{maxsa_transformer_forward.5} parent=0
    _
  %s13 = ssub.s32 1, %s11
  %s14 = scalar_select 0, %s13, %s11
  // Predicated region
  $region2: #{maxsa_transformer_forward.5} parent=0 // pred_check
    _
  $region3: #{maxsa_transformer_forward.5} parent=0 // pred_check_branch
    %16 = sbr.rel (0) target = $region5
  $region4: #{maxsa_transformer_forward.5} parent=0 // pred_region
    _
  $region5: #{maxsa_transformer_forward.5} parent=0 // pred_fallthru
    _
  // Predicated region
  $region6: #{maxsa_transformer_forward.5} parent=0 // pred_check
    _
  $region7: #{maxsa_transformer_forward.5} parent=0 // pred_check_branch
    %18 = sbr.rel (0) target = $region9
  $region8: #{maxsa_transformer_forward.5} parent=0 // pred_region
    _
  $region9: #{maxsa_transformer_forward.5} parent=0 // pred_fallthru
    _
  // Predicated region
  $region10: #{maxsa_transformer_forward.5} parent=0 // pred_check
    _
  $region11: #{maxsa_transformer_forward.5} parent=0 // pred_check_branch
    %20 = sbr.rel (0) target = $region13
  $region12: #{maxsa_transformer_forward.5} parent=0 // pred_region
    _
  $region13: #{maxsa_transformer_forward.5} parent=0 // pred_fallthru
    _
  // Predicated region
  $region14: #{maxsa_transformer_forward.5} parent=0 // pred_check
    _
  $region15: #{maxsa_transformer_forward.5} parent=0 // pred_check_branch
    %22 = sbr.rel (0) target = $region17
  $region16: #{maxsa_transformer_forward.5} parent=0 // pred_region
    _
  $region17: #{maxsa_transformer_forward.5} parent=0 // pred_fallthru
    _
  // Predicated region
  $region18: #{maxsa_transformer_forward.5} parent=0 // pred_check
    _
  $region19: #{maxsa_transformer_forward.5} parent=0 // pred_check_branch
    %24 = sbr.rel (0) target = $region21
  $region20: #{maxsa_transformer_forward.5} parent=0 // pred_region
    _
  $region21: #{maxsa_transformer_forward.5} parent=0 // pred_fallthru
    _
  // Predicated region
  $region22: #{maxsa_transformer_forward.5} parent=0 // pred_check
    _
  $region23: #{maxsa_transformer_forward.5} parent=0 // pred_check_branch
    %26 = sbr.rel (0) target = $region25
  $region24: #{maxsa_transformer_forward.5} parent=0 // pred_region
    _
  $region25: #{maxsa_transformer_forward.5} parent=0 // pred_fallthru
    _
  // Predicated region
  $region26: #{maxsa_transformer_forward.5} parent=0 // pred_check
    _
  $region27: #{maxsa_transformer_forward.5} parent=0 // pred_check_branch
    %28 = sbr.rel (0) target = $region29
  $region28: #{maxsa_transformer_forward.5} parent=0 // pred_region
    _
  $region29: #{maxsa_transformer_forward.5} parent=0 // pred_fallthru
    _
  // Predicated region
  $region30: #{maxsa_transformer_forward.5} parent=0 // pred_check
    _
  $region31: #{maxsa_transformer_forward.5} parent=0 // pred_check_branch
    %30 = sbr.rel (0) target = $region33
  $region32: #{maxsa_transformer_forward.5} parent=0 // pred_region
    _
  $region33: #{maxsa_transformer_forward.5} parent=0 // pred_fallthru
    _
  // Predicated region
  $region34: #{maxsa_transformer_forward.5} parent=0 // pred_check
    _
  $region35: #{maxsa_transformer_forward.5} parent=0 // pred_check_branch
    %32 = sbr.rel (0) target = $region37
  $region36: #{maxsa_transformer_forward.5} parent=0 // pred_region
    _
  $region37: #{maxsa_transformer_forward.5} parent=0 // pred_fallthru
    _
  // Predicated region
  $region38: #{maxsa_transformer_forward.5} parent=0 // pred_check
    _
  $region39: #{maxsa_transformer_forward.5} parent=0 // pred_check_branch
    %34 = sbr.rel (0) target = $region41
  $region40: #{maxsa_transformer_forward.5} parent=0 // pred_region
    _
  $region41: #{maxsa_transformer_forward.5} parent=0 // pred_fallthru
    _
  %v36 = vld [vmem:[%s0] sm:$0xff]
  %v37 = vld [vmem:[%s0 + $0x8] sm:$0xff]
  %v38 = vld [vmem:[%s0 + $0x10] sm:$0xff]
  %v39 = vld [vmem:[%s0 + $0x18] sm:$0xff]
  %v40 = vld [vmem:[%s0 + $0x20] sm:$0xff]
  %v41 = vld [vmem:[%s0 + $0x28] sm:$0xff]
  %v42 = vld [vmem:[%s0 + $0x30] sm:$0xff]
  %v43 = vld [vmem:[%s0 + $0x38] sm:$0xff]
  %v44 = vld [vmem:[%s0 + $0x40] sm:$0xff]
  %v45 = vld [vmem:[%s0 + $0x48] sm:$0xff]
  %v46 = vld [vmem:[%s0 + $0x50] sm:$0xff]
  %v47 = vld [vmem:[%s0 + $0x58] sm:$0xff]
  %v48 = vld [vmem:[%s0 + $0x60] sm:$0xff]
  %v49 = vld [vmem:[%s0 + $0x68] sm:$0xff]
  %v50 = vld [vmem:[%s0 + $0x70] sm:$0xff]
  %v51 = vld [vmem:[%s0 + $0x78] sm:$0xff]
  %v52 = vpack.c.bf16 %v37, %v36
  %v53 = vpack.c.bf16 %v39, %v38
  %v54 = vpack.c.bf16 %v41, %v40
  %v55 = vpack.c.bf16 %v43, %v42
  %v56 = vpack.c.bf16 %v45, %v44
  %v57 = vpack.c.bf16 %v47, %v46
  %v58 = vpack.c.bf16 %v49, %v48
  %v59 = vpack.c.bf16 %v51, %v50
  %v60 = vld [vmem:[%s1] sm:$0xf]
  %v61 = vld [vmem:[%s1 + $0x4] sm:$0xf]
  %v62 = vld [vmem:[%s1 + $0x8] sm:$0xf]
  %v63 = vld [vmem:[%s1 + $0xc] sm:$0xf]
  %v64 = vld [vmem:[%s1 + $0x10] sm:$0xf]
  %v65 = vld [vmem:[%s1 + $0x14] sm:$0xf]
  %v66 = vld [vmem:[%s1 + $0x18] sm:$0xf]
  %v67 = vld [vmem:[%s1 + $0x1c] sm:$0xf]
  %v68 = vld [vmem:[%s1 + $0x20] sm:$0xf]
  %v69 = vld [vmem:[%s1 + $0x24] sm:$0xf]
  %v70 = vld [vmem:[%s1 + $0x28] sm:$0xf]
  %v71 = vld [vmem:[%s1 + $0x2c] sm:$0xf]
  %v72 = vld [vmem:[%s1 + $0x30] sm:$0xf]
  %v73 = vld [vmem:[%s1 + $0x34] sm:$0xf]
  %v74 = vld [vmem:[%s1 + $0x38] sm:$0xf]
  %v75 = vld [vmem:[%s1 + $0x3c] sm:$0xf]
  %v76 = vld [vmem:[%s2] sm:$0xf]
  %v77 = vld [vmem:[%s2 + $0x4] sm:$0xf]
  %v78 = vld [vmem:[%s2 + $0x8] sm:$0xf]
  %v79 = vld [vmem:[%s2 + $0xc] sm:$0xf]
  %v96 = vunpack.c.l.b16 %v60
  %v97 = vunpack.c.l.b16 %v61
  %v98 = vunpack.c.l.b16 %v62
  %v99 = vunpack.c.l.b16 %v63
  %v100 = vunpack.c.l.b16 %v64
  %v101 = vunpack.c.l.b16 %v65
  %v102 = vunpack.c.l.b16 %v66
  %v103 = vunpack.c.l.b16 %v67
  %v104 = vunpack.c.l.b16 %v68
  %v105 = vunpack.c.l.b16 %v69
  %v106 = vunpack.c.l.b16 %v70
  %v107 = vunpack.c.l.b16 %v71
  %v108 = vunpack.c.l.b16 %v72
  %v109 = vunpack.c.l.b16 %v73
  %v110 = vunpack.c.l.b16 %v74
  %v111 = vunpack.c.l.b16 %v75
  %v112 = vpack.c.b16 %v97, %v96
  %v113 = vpack.c.b16 %v99, %v98
  %v114 = vpack.c.b16 %v101, %v100
  %v115 = vpack.c.b16 %v103, %v102
  %v116 = vpack.c.b16 %v105, %v104
  %v117 = vpack.c.b16 %v107, %v106
  %v118 = vpack.c.b16 %v109, %v108
  %v119 = vpack.c.b16 %v111, %v110
  %v124 = vunpack.c.l.b16 %v76
  %v125 = vunpack.c.l.b16 %v77
  %v126 = vunpack.c.l.b16 %v78
  %v127 = vunpack.c.l.b16 %v79
  %v128 = vpack.c.b16 %v125, %v124
  %v129 = vpack.c.b16 %v127, %v126
  %vm130 = vcmask 261120
  %v132 = vsel %vm130, %v112, 0
  %v135 = vsel %vm130, %v113, 0
  %v138 = vsel %vm130, %v114, 0
  %v141 = vsel %vm130, %v115, 0
  %v144 = vsel %vm130, %v116, 0
  %v147 = vsel %vm130, %v117, 0
  %v150 = vsel %vm130, %v118, 0
  %v153 = vsel %vm130, %v119, 0
  %v156 = vsel %vm130, %v128, 0
  %v159 = vsel %vm130, %v129, 0
  %161 = vmatprep.subr.bf16.mxu0 0
  %162 = vmatpush1.bf16.xpose.msra.mxu0 %v156
  %163 = vmatprep.subr.bf16.mxu0 0
  %164 = vmatpush1.bf16.xpose.msra.mxu0 %v159
  %165 = vmatprep.subr.bf16.mxu0 0
  %166 = vmatpush1.bf16.xpose.msra.mxu0 0
  %167 = vmatprep.subr.bf16.mxu0 0
  %168 = vmatpush1.bf16.xpose.msra.mxu0 0
  %169 = vmatprep.subr.bf16.mxu0 0
  %170 = vmatpush1.bf16.xpose.msra.mxu0 0
  %171 = vmatprep.subr.bf16.mxu0 0
  %172 = vmatpush1.bf16.xpose.msra.mxu0 0
  %173 = vmatprep.subr.bf16.mxu0 0
  %174 = vmatpush1.bf16.xpose.msra.mxu0 0
  %175 = vmatprep.subr.bf16.mxu0 0
  %176 = vmatpush1.bf16.xpose.msra.mxu0 0
  %177 = vmatprep.subr.bf16.mxu0 0
  %178 = vmatpush1.bf16.xpose.msra.mxu0 0
  %179 = vmatprep.subr.bf16.mxu0 0
  %180 = vmatpush1.bf16.xpose.msra.mxu0 0
  %181 = vmatprep.subr.bf16.mxu0 0
  %182 = vmatpush1.bf16.xpose.msra.mxu0 0
  %183 = vmatprep.subr.bf16.mxu0 0
  %184 = vmatpush1.bf16.xpose.msra.mxu0 0
  %185 = vmatprep.subr.bf16.mxu0 0
  %186 = vmatpush1.bf16.xpose.msra.mxu0 0
  %187 = vmatprep.subr.bf16.mxu0 0
  %188 = vmatpush1.bf16.xpose.msra.mxu0 0
  %189 = vmatprep.subr.bf16.mxu0 0
  %190 = vmatpush1.bf16.xpose.msra.mxu0 0
  %191 = vmatprep.subr.bf16.mxu0 0
  %192 = vmatpush1.bf16.xpose.msra.mxu0 0
  %193 = vmatprep.mubr.bf16.mxu0 0
  %194 = vmatmul.mubr.bf16.gmra.mrb[0].mxu0 %v132
  %v195 = vpop.f32.mrb[0].mxu0
  %v196 = vadd.f32 0.0, %v195
  %v197 = vpop.f32.mrb[0].mxu0
  %v198 = vpop.f32.mrb[0].mxu0
  %v199 = vadd.f32 0.0, %v198
  %v200 = vpop.f32.mrb[0].mxu0
  %201 = vmatprep.mubr.bf16.mxu0 0
  %202 = vmatmul.mubr.bf16.gmra.mrb[0].mxu0 %v135
  %v203 = vpop.f32.mrb[0].mxu0
  %v204 = vadd.f32 0.0, %v203
  %v205 = vpop.f32.mrb[0].mxu0
  %v206 = vpop.f32.mrb[0].mxu0
  %v207 = vadd.f32 0.0, %v206
  %v208 = vpop.f32.mrb[0].mxu0
  %209 = vmatprep.mubr.bf16.mxu0 0
  %210 = vmatmul.mubr.bf16.gmra.mrb[0].mxu0 %v138
  %v211 = vpop.f32.mrb[0].mxu0
  %v212 = vadd.f32 0.0, %v211
  %v213 = vpop.f32.mrb[0].mxu0
  %v214 = vpop.f32.mrb[0].mxu0
  %v215 = vadd.f32 0.0, %v214
  %v216 = vpop.f32.mrb[0].mxu0
  %217 = vmatprep.mubr.bf16.mxu0 0
  %218 = vmatmul.mubr.bf16.gmra.mrb[0].mxu0 %v141
  %v219 = vpop.f32.mrb[0].mxu0
  %v220 = vadd.f32 0.0, %v219
  %v221 = vpop.f32.mrb[0].mxu0
  %v222 = vpop.f32.mrb[0].mxu0
  %v223 = vadd.f32 0.0, %v222
  %v224 = vpop.f32.mrb[0].mxu0
  %225 = vmatprep.mubr.bf16.mxu0 0
  %226 = vmatmul.mubr.bf16.gmra.mrb[0].mxu0 %v144
  %v227 = vpop.f32.mrb[0].mxu0
  %v228 = vadd.f32 0.0, %v227
  %v229 = vpop.f32.mrb[0].mxu0
  %v230 = vpop.f32.mrb[0].mxu0
  %v231 = vadd.f32 0.0, %v230
  %v232 = vpop.f32.mrb[0].mxu0
  %233 = vmatprep.mubr.bf16.mxu0 0
  %234 = vmatmul.mubr.bf16.gmra.mrb[0].mxu0 %v147
  %v235 = vpop.f32.mrb[0].mxu0
  %v236 = vadd.f32 0.0, %v235
  %v237 = vpop.f32.mrb[0].mxu0
  %v238 = vpop.f32.mrb[0].mxu0
  %v239 = vadd.f32 0.0, %v238
  %v240 = vpop.f32.mrb[0].mxu0
  %241 = vmatprep.mubr.bf16.mxu0 0
  %242 = vmatmul.mubr.bf16.gmra.mrb[0].mxu0 %v150
  %v243 = vpop.f32.mrb[0].mxu0
  %v244 = vadd.f32 0.0, %v243
  %v245 = vpop.f32.mrb[0].mxu0
  %v246 = vpop.f32.mrb[0].mxu0
  %v247 = vadd.f32 0.0, %v246
  %v248 = vpop.f32.mrb[0].mxu0
  %249 = vmatprep.mubr.bf16.mxu0 0
  %250 = vmatmul.mubr.bf16.gmra.mrb[0].mxu0 %v153
  %v251 = vpop.f32.mrb[0].mxu0
  %v252 = vadd.f32 0.0, %v251
  %v253 = vpop.f32.mrb[0].mxu0
  %v254 = vpop.f32.mrb[0].mxu0
  %v255 = vadd.f32 0.0, %v254
  %v256 = vpop.f32.mrb[0].mxu0
  %257 = vdwg.mxu0
  %v258 = vld [vmem:[%s3] sm:$0x1]
  %v259 = vld [vmem:[%s4] sm:$0x1]
  %v260 = vsel %vm130, %v196, 0.0
  %261 = vadd.xlane.f32.xlu0 %v260
  %v262 = vpop.xlane.xlu0 %261
  %v263 = vsel %vm130, %v199, 0.0
  %264 = vadd.xlane.f32.xlu0 %v263
  %v265 = vpop.xlane.xlu0 %264
  %v266 = vsel %vm130, %v204, 0.0
  %267 = vadd.xlane.f32.xlu0 %v266
  %v268 = vpop.xlane.xlu0 %267
  %v269 = vsel %vm130, %v207, 0.0
  %270 = vadd.xlane.f32.xlu0 %v269
  %v271 = vpop.xlane.xlu0 %270
  %v272 = vsel %vm130, %v212, 0.0
  %273 = vadd.xlane.f32.xlu0 %v272
  %v274 = vpop.xlane.xlu0 %273
  %v275 = vsel %vm130, %v215, 0.0
  %276 = vadd.xlane.f32.xlu0 %v275
  %v277 = vpop.xlane.xlu0 %276
  %v278 = vsel %vm130, %v220, 0.0
  %279 = vadd.xlane.f32.xlu0 %v278
  %v280 = vpop.xlane.xlu0 %279
  %v281 = vsel %vm130, %v223, 0.0
  %282 = vadd.xlane.f32.xlu0 %v281
  %v283 = vpop.xlane.xlu0 %282
  %v284 = vsel %vm130, %v228, 0.0
  %285 = vadd.xlane.f32.xlu0 %v284
  %v286 = vpop.xlane.xlu0 %285
  %v287 = vsel %vm130, %v231, 0.0
  %288 = vadd.xlane.f32.xlu0 %v287
  %v289 = vpop.xlane.xlu0 %288
  %v290 = vsel %vm130, %v236, 0.0
  %291 = vadd.xlane.f32.xlu0 %v290
  %v292 = vpop.xlane.xlu0 %291
  %v293 = vsel %vm130, %v239, 0.0
  %294 = vadd.xlane.f32.xlu0 %v293
  %v295 = vpop.xlane.xlu0 %294
  %v296 = vsel %vm130, %v244, 0.0
  %297 = vadd.xlane.f32.xlu0 %v296
  %v298 = vpop.xlane.xlu0 %297
  %v299 = vsel %vm130, %v247, 0.0
  %300 = vadd.xlane.f32.xlu0 %v299
  %v301 = vpop.xlane.xlu0 %300
  %v302 = vsel %vm130, %v252, 0.0
  %303 = vadd.xlane.f32.xlu0 %v302
  %v304 = vpop.xlane.xlu0 %303
  %v305 = vsel %vm130, %v255, 0.0
  %306 = vadd.xlane.f32.xlu0 %v305
  %v307 = vpop.xlane.xlu0 %306
  %v308 = vrcp.pop 32.0
  %v309 = vmul.f32 %v262, %v308
  %v310 = vmul.f32 %v265, %v308
  %v311 = vmul.f32 %v268, %v308
  %v312 = vmul.f32 %v271, %v308
  %v313 = vmul.f32 %v274, %v308
  %v314 = vmul.f32 %v277, %v308
  %v315 = vmul.f32 %v280, %v308
  %v316 = vmul.f32 %v283, %v308
  %v317 = vmul.f32 %v286, %v308
  %v318 = vmul.f32 %v289, %v308
  %v319 = vmul.f32 %v292, %v308
  %v320 = vmul.f32 %v295, %v308
  %v321 = vmul.f32 %v298, %v308
  %v322 = vmul.f32 %v301, %v308
  %v323 = vmul.f32 %v304, %v308
  %v324 = vmul.f32 %v307, %v308
  %v325 = vsub.f32 %v196, %v309
  %v326 = vsub.f32 %v199, %v310
  %v327 = vsub.f32 %v204, %v311
  %v328 = vsub.f32 %v207, %v312
  %v329 = vsub.f32 %v212, %v313
  %v330 = vsub.f32 %v215, %v314
  %v331 = vsub.f32 %v220, %v315
  %v332 = vsub.f32 %v223, %v316
  %v333 = vsub.f32 %v228, %v317
  %v334 = vsub.f32 %v231, %v318
  %v335 = vsub.f32 %v236, %v319
  %v336 = vsub.f32 %v239, %v320
  %v337 = vsub.f32 %v244, %v321
  %v338 = vsub.f32 %v247, %v322
  %v339 = vsub.f32 %v252, %v323
  %v340 = vsub.f32 %v255, %v324
  %v341 = vmul.f32 %v325, %v325
  %v342 = vmul.f32 %v326, %v326
  %v343 = vmul.f32 %v327, %v327
  %v344 = vmul.f32 %v328, %v328
  %v345 = vmul.f32 %v329, %v329
  %v346 = vmul.f32 %v330, %v330
  %v347 = vmul.f32 %v331, %v331
  %v348 = vmul.f32 %v332, %v332
  %v349 = vmul.f32 %v333, %v333
  %v350 = vmul.f32 %v334, %v334
  %v351 = vmul.f32 %v335, %v335
  %v352 = vmul.f32 %v336, %v336
  %v353 = vmul.f32 %v337, %v337
  %v354 = vmul.f32 %v338, %v338
  %v355 = vmul.f32 %v339, %v339
  %v356 = vmul.f32 %v340, %v340
  %v357 = vsel %vm130, %v341, 0.0
  %358 = vadd.xlane.f32.xlu0 %v357
  %v359 = vpop.xlane.xlu0 %358
  %v360 = vsel %vm130, %v342, 0.0
  %361 = vadd.xlane.f32.xlu0 %v360
  %v362 = vpop.xlane.xlu0 %361
  %v363 = vsel %vm130, %v343, 0.0
  %364 = vadd.xlane.f32.xlu0 %v363
  %v365 = vpop.xlane.xlu0 %364
  %v366 = vsel %vm130, %v344, 0.0
  %367 = vadd.xlane.f32.xlu0 %v366
  %v368 = vpop.xlane.xlu0 %367
  %v369 = vsel %vm130, %v345, 0.0
  %370 = vadd.xlane.f32.xlu0 %v369
  %v371 = vpop.xlane.xlu0 %370
  %v372 = vsel %vm130, %v346, 0.0
  %373 = vadd.xlane.f32.xlu0 %v372
  %v374 = vpop.xlane.xlu0 %373
  %v375 = vsel %vm130, %v347, 0.0
  %376 = vadd.xlane.f32.xlu0 %v375
  %v377 = vpop.xlane.xlu0 %376
  %v378 = vsel %vm130, %v348, 0.0
  %379 = vadd.xlane.f32.xlu0 %v378
  %v380 = vpop.xlane.xlu0 %379
  %v381 = vsel %vm130, %v349, 0.0
  %382 = vadd.xlane.f32.xlu0 %v381
  %v383 = vpop.xlane.xlu0 %382
  %v384 = vsel %vm130, %v350, 0.0
  %385 = vadd.xlane.f32.xlu0 %v384
  %v386 = vpop.xlane.xlu0 %385
  %v387 = vsel %vm130, %v351, 0.0
  %388 = vadd.xlane.f32.xlu0 %v387
  %v389 = vpop.xlane.xlu0 %388
  %v390 = vsel %vm130, %v352, 0.0
  %391 = vadd.xlane.f32.xlu0 %v390
  %v392 = vpop.xlane.xlu0 %391
  %v393 = vsel %vm130, %v353, 0.0
  %394 = vadd.xlane.f32.xlu0 %v393
  %v395 = vpop.xlane.xlu0 %394
  %v396 = vsel %vm130, %v354, 0.0
  %397 = vadd.xlane.f32.xlu0 %v396
  %v398 = vpop.xlane.xlu0 %397
  %v399 = vsel %vm130, %v355, 0.0
  %400 = vadd.xlane.f32.xlu0 %v399
  %v401 = vpop.xlane.xlu0 %400
  %v402 = vsel %vm130, %v356, 0.0
  %403 = vadd.xlane.f32.xlu0 %v402
  %v404 = vpop.xlane.xlu0 %403
  %v405 = vmul.f32 %v359, %v308
  %v406 = vmul.f32 %v362, %v308
  %v407 = vmul.f32 %v365, %v308
  %v408 = vmul.f32 %v368, %v308
  %v409 = vmul.f32 %v371, %v308
  %v410 = vmul.f32 %v374, %v308
  %v411 = vmul.f32 %v377, %v308
  %v412 = vmul.f32 %v380, %v308
  %v413 = vmul.f32 %v383, %v308
  %v414 = vmul.f32 %v386, %v308
  %v415 = vmul.f32 %v389, %v308
  %v416 = vmul.f32 %v392, %v308
  %v417 = vmul.f32 %v395, %v308
  %v418 = vmul.f32 %v398, %v308
  %v419 = vmul.f32 %v401, %v308
  %v420 = vmul.f32 %v404, %v308
  %v421 = vadd.f32 %v405, 1e-05
  %v422 = vadd.f32 %v406, 1e-05
  %v423 = vadd.f32 %v407, 1e-05
  %v424 = vadd.f32 %v408, 1e-05
  %v425 = vadd.f32 %v409, 1e-05
  %v426 = vadd.f32 %v410, 1e-05
  %v427 = vadd.f32 %v411, 1e-05
  %v428 = vadd.f32 %v412, 1e-05
  %v429 = vadd.f32 %v413, 1e-05
  %v430 = vadd.f32 %v414, 1e-05
  %v431 = vadd.f32 %v415, 1e-05
  %v432 = vadd.f32 %v416, 1e-05
  %v433 = vadd.f32 %v417, 1e-05
  %v434 = vadd.f32 %v418, 1e-05
  %v435 = vadd.f32 %v419, 1e-05
  %v436 = vadd.f32 %v420, 1e-05
  %v437 = vrsqrt.pop %v421
  %v438 = vrsqrt.pop %v422
  %v439 = vrsqrt.pop %v423
  %v440 = vrsqrt.pop %v424
  %v441 = vrsqrt.pop %v425
  %v442 = vrsqrt.pop %v426
  %v443 = vrsqrt.pop %v427
  %v444 = vrsqrt.pop %v428
  %v445 = vrsqrt.pop %v429
  %v446 = vrsqrt.pop %v430
  %v447 = vrsqrt.pop %v431
  %v448 = vrsqrt.pop %v432
  %v449 = vrsqrt.pop %v433
  %v450 = vrsqrt.pop %v434
  %v451 = vrsqrt.pop %v435
  %v452 = vrsqrt.pop %v436
  %v453 = vmul.f32 %v325, %v437
  %v454 = vmul.f32 %v326, %v438
  %v455 = vmul.f32 %v327, %v439
  %v456 = vmul.f32 %v328, %v440
  %v457 = vmul.f32 %v329, %v441
  %v458 = vmul.f32 %v330, %v442
  %v459 = vmul.f32 %v331, %v443
  %v460 = vmul.f32 %v332, %v444
  %v461 = vmul.f32 %v333, %v445
  %v462 = vmul.f32 %v334, %v446
  %v463 = vmul.f32 %v335, %v447
  %v464 = vmul.f32 %v336, %v448
  %v465 = vmul.f32 %v337, %v449
  %v466 = vmul.f32 %v338, %v450
  %v467 = vmul.f32 %v339, %v451
  %v468 = vmul.f32 %v340, %v452
  %v470 = vlaneseq
  %v471 = vshrl.u32 %v470, 7
  %v472 = vsub.s32 0, %v471
  %v473 = vrot.slane %v258, %v472
  %v475 = vmul.f32 %v453, %v473
  %v476 = vmul.f32 %v454, %v473
  %v477 = vmul.f32 %v455, %v473
  %v478 = vmul.f32 %v456, %v473
  %v479 = vmul.f32 %v457, %v473
  %v480 = vmul.f32 %v458, %v473
  %v481 = vmul.f32 %v459, %v473
  %v482 = vmul.f32 %v460, %v473
  %v483 = vmul.f32 %v461, %v473
  %v484 = vmul.f32 %v462, %v473
  %v485 = vmul.f32 %v463, %v473
  %v486 = vmul.f32 %v464, %v473
  %v487 = vmul.f32 %v465, %v473
  %v488 = vmul.f32 %v466, %v473
  %v489 = vmul.f32 %v467, %v473
  %v490 = vmul.f32 %v468, %v473
  %v492 = vlaneseq
  %v493 = vshrl.u32 %v492, 7
  %v494 = vsub.s32 0, %v493
  %v495 = vrot.slane %v259, %v494
  %v497 = vadd.f32 %v475, %v495
  %v498 = vadd.f32 %v476, %v495
  %v499 = vadd.f32 %v477, %v495
  %v500 = vadd.f32 %v478, %v495
  %v501 = vadd.f32 %v479, %v495
  %v502 = vadd.f32 %v480, %v495
  %v503 = vadd.f32 %v481, %v495
  %v504 = vadd.f32 %v482, %v495
  %v505 = vadd.f32 %v483, %v495
  %v506 = vadd.f32 %v484, %v495
  %v507 = vadd.f32 %v485, %v495
  %v508 = vadd.f32 %v486, %v495
  %v509 = vadd.f32 %v487, %v495
  %v510 = vadd.f32 %v488, %v495
  %v511 = vadd.f32 %v489, %v495
  %v512 = vadd.f32 %v490, %v495
  %v513 = vpack.c.bf16 %v498, %v497
  %v514 = vpack.c.bf16 %v500, %v499
  %v515 = vpack.c.bf16 %v502, %v501
  %v516 = vpack.c.bf16 %v504, %v503
  %v517 = vpack.c.bf16 %v506, %v505
  %v518 = vpack.c.bf16 %v508, %v507
  %v519 = vpack.c.bf16 %v510, %v509
  %v520 = vpack.c.bf16 %v512, %v511
  %v521 = vld [vmem:[%s5] sm:$0xf]
  %v522 = vld [vmem:[%s5 + $0x4] sm:$0xf]
  %v523 = vld [vmem:[%s5 + $0x8] sm:$0xf]
  %v524 = vld [vmem:[%s5 + $0xc] sm:$0xf]
  %v525 = vld [vmem:[%s5 + $0x10] sm:$0xf]
  %v526 = vld [vmem:[%s5 + $0x14] sm:$0xf]
  %v527 = vld [vmem:[%s5 + $0x18] sm:$0xf]
  %v528 = vld [vmem:[%s5 + $0x1c] sm:$0xf]
  %v529 = vld [vmem:[%s5 + $0x20] sm:$0xf]
  %v530 = vld [vmem:[%s5 + $0x24] sm:$0xf]
  %v531 = vld [vmem:[%s5 + $0x28] sm:$0xf]
  %v532 = vld [vmem:[%s5 + $0x2c] sm:$0xf]
  %v533 = vld [vmem:[%s5 + $0x30] sm:$0xf]
  %v534 = vld [vmem:[%s5 + $0x34] sm:$0xf]
  %v535 = vld [vmem:[%s5 + $0x38] sm:$0xf]
  %v536 = vld [vmem:[%s5 + $0x3c] sm:$0xf]
  %v537 = vld [vmem:[%s5 + $0x40] sm:$0xf]
  %v538 = vld [vmem:[%s5 + $0x44] sm:$0xf]
  %v539 = vld [vmem:[%s5 + $0x48] sm:$0xf]
  %v540 = vld [vmem:[%s5 + $0x4c] sm:$0xf]
  %v541 = vld [vmem:[%s5 + $0x50] sm:$0xf]
  %v542 = vld [vmem:[%s5 + $0x54] sm:$0xf]
  %v543 = vld [vmem:[%s5 + $0x58] sm:$0xf]
  %v544 = vld [vmem:[%s5 + $0x5c] sm:$0xf]
  %v545 = vld [vmem:[%s5 + $0x60] sm:$0xf]
  %v546 = vld [vmem:[%s5 + $0x64] sm:$0xf]
  %v547 = vld [vmem:[%s5 + $0x68] sm:$0xf]
  %v548 = vld [vmem:[%s5 + $0x6c] sm:$0xf]
  %v549 = vld [vmem:[%s5 + $0x70] sm:$0xf]
  %v550 = vld [vmem:[%s5 + $0x74] sm:$0xf]
  %v551 = vld [vmem:[%s5 + $0x78] sm:$0xf]
  %v552 = vld [vmem:[%s5 + $0x7c] sm:$0xf]
  %v553 = vld [vmem:[%s6] sm:$0xf]
  %v554 = vld [vmem:[%s6 + $0x4] sm:$0xf]
  %v555 = vld [vmem:[%s6 + $0x8] sm:$0xf]
  %v556 = vld [vmem:[%s6 + $0xc] sm:$0xf]
  %v557 = vld [vmem:[%s6 + $0x10] sm:$0xf]
  %v558 = vld [vmem:[%s6 + $0x14] sm:$0xf]
  %v559 = vld [vmem:[%s6 + $0x18] sm:$0xf]
  %v560 = vld [vmem:[%s6 + $0x1c] sm:$0xf]
  %v561 = vld [vmem:[%s6 + $0x20] sm:$0xf]
  %v562 = vld [vmem:[%s6 + $0x24] sm:$0xf]
  %v563 = vld [vmem:[%s6 + $0x28] sm:$0xf]
  %v564 = vld [vmem:[%s6 + $0x2c] sm:$0xf]
  %v565 = vld [vmem:[%s6 + $0x30] sm:$0xf]
  %v566 = vld [vmem:[%s6 + $0x34] sm:$0xf]
  %v567 = vld [vmem:[%s6 + $0x38] sm:$0xf]
  %v568 = vld [vmem:[%s6 + $0x3c] sm:$0xf]
  %v569 = vld [vmem:[%s6 + $0x40] sm:$0xf]
  %v570 = vld [vmem:[%s6 + $0x44] sm:$0xf]
  %v571 = vld [vmem:[%s6 + $0x48] sm:$0xf]
  %v572 = vld [vmem:[%s6 + $0x4c] sm:$0xf]
  %v573 = vld [vmem:[%s6 + $0x50] sm:$0xf]
  %v574 = vld [vmem:[%s6 + $0x54] sm:$0xf]
  %v575 = vld [vmem:[%s6 + $0x58] sm:$0xf]
  %v576 = vld [vmem:[%s6 + $0x5c] sm:$0xf]
  %v577 = vld [vmem:[%s6 + $0x60] sm:$0xf]
  %v578 = vld [vmem:[%s6 + $0x64] sm:$0xf]
  %v579 = vld [vmem:[%s6 + $0x68] sm:$0xf]
  %v580 = vld [vmem:[%s6 + $0x6c] sm:$0xf]
  %v581 = vld [vmem:[%s6 + $0x70] sm:$0xf]
  %v582 = vld [vmem:[%s6 + $0x74] sm:$0xf]
  %v583 = vld [vmem:[%s6 + $0x78] sm:$0xf]
  %v584 = vld [vmem:[%s6 + $0x7c] sm:$0xf]
  %v617 = vunpack.c.l.b16 %v553
  %v618 = vunpack.c.l.b16 %v554
  %v619 = vunpack.c.l.b16 %v555
  %v620 = vunpack.c.l.b16 %v556
  %v621 = vunpack.c.l.b16 %v557
  %v622 = vunpack.c.l.b16 %v558
  %v623 = vunpack.c.l.b16 %v559
  %v624 = vunpack.c.l.b16 %v560
  %v625 = vunpack.c.l.b16 %v561
  %v626 = vunpack.c.l.b16 %v562
  %v627 = vunpack.c.l.b16 %v563
  %v628 = vunpack.c.l.b16 %v564
  %v629 = vunpack.c.l.b16 %v565
  %v630 = vunpack.c.l.b16 %v566
  %v631 = vunpack.c.l.b16 %v567
  %v632 = vunpack.c.l.b16 %v568
  %v633 = vunpack.c.l.b16 %v569
  %v634 = vunpack.c.l.b16 %v570
  %v635 = vunpack.c.l.b16 %v571
  %v636 = vunpack.c.l.b16 %v572
  %v637 = vunpack.c.l.b16 %v573
  %v638 = vunpack.c.l.b16 %v574
  %v639 = vunpack.c.l.b16 %v575
  %v640 = vunpack.c.l.b16 %v576
  %v641 = vunpack.c.l.b16 %v577
  %v642 = vunpack.c.l.b16 %v578
  %v643 = vunpack.c.l.b16 %v579
  %v644 = vunpack.c.l.b16 %v580
  %v645 = vunpack.c.l.b16 %v581
  %v646 = vunpack.c.l.b16 %v582
  %v647 = vunpack.c.l.b16 %v583
  %v648 = vunpack.c.l.b16 %v584
  %v649 = vpack.c.b16 %v618, %v617
  %v650 = vpack.c.b16 %v620, %v619
  %v651 = vpack.c.b16 %v622, %v621
  %v652 = vpack.c.b16 %v624, %v623
  %v653 = vpack.c.b16 %v626, %v625
  %v654 = vpack.c.b16 %v628, %v627
  %v655 = vpack.c.b16 %v630, %v629
  %v656 = vpack.c.b16 %v632, %v631
  %v657 = vpack.c.b16 %v634, %v633
  %v658 = vpack.c.b16 %v636, %v635
  %v659 = vpack.c.b16 %v638, %v637
  %v660 = vpack.c.b16 %v640, %v639
  %v661 = vpack.c.b16 %v642, %v641
  %v662 = vpack.c.b16 %v644, %v643
  %v663 = vpack.c.b16 %v646, %v645
  %v664 = vpack.c.b16 %v648, %v647
  %v666 = vsel %vm130, %v513, 0
  %v669 = vsel %vm130, %v514, 0
  %v672 = vsel %vm130, %v515, 0
  %v675 = vsel %vm130, %v516, 0
  %v678 = vsel %vm130, %v517, 0
  %v681 = vsel %vm130, %v518, 0
  %v684 = vsel %vm130, %v519, 0
  %v687 = vsel %vm130, %v520, 0
  %v690 = vsel %vm130, %v649, 0
  %v693 = vsel %vm130, %v650, 0
  %v696 = vsel %vm130, %v651, 0
  %v699 = vsel %vm130, %v652, 0
  %v702 = vsel %vm130, %v653, 0
  %v705 = vsel %vm130, %v654, 0
  %v708 = vsel %vm130, %v655, 0
  %v711 = vsel %vm130, %v656, 0
  %v714 = vsel %vm130, %v657, 0
  %v717 = vsel %vm130, %v658, 0
  %v720 = vsel %vm130, %v659, 0
  %v723 = vsel %vm130, %v660, 0
  %v726 = vsel %vm130, %v661, 0
  %v729 = vsel %vm130, %v662, 0
  %v732 = vsel %vm130, %v663, 0
  %v735 = vsel %vm130, %v664, 0
  %737 = vmatprep.subr.bf16.mxu0 0
  %738 = vmatpush1.bf16.xpose.msra.mxu0 %v690
  %739 = vmatprep.subr.bf16.mxu0 0
  %740 = vmatpush1.bf16.xpose.msra.mxu0 %v693
  %741 = vmatprep.subr.bf16.mxu0 0
  %742 = vmatpush1.bf16.xpose.msra.mxu0 %v696
  %743 = vmatprep.subr.bf16.mxu0 0
  %744 = vmatpush1.bf16.xpose.msra.mxu0 %v699
  %745 = vmatprep.subr.bf16.mxu0 0
  %746 = vmatpush1.bf16.xpose.msra.mxu0 %v702
  %747 = vmatprep.subr.bf16.mxu0 0
  %748 = vmatpush1.bf16.xpose.msra.mxu0 %v705
  %749 = vmatprep.subr.bf16.mxu0 0
  %750 = vmatpush1.bf16.xpose.msra.mxu0 %v708
  %751 = vmatprep.subr.bf16.mxu0 0
  %752 = vmatpush1.bf16.xpose.msra.mxu0 %v711
  %753 = vmatprep.subr.bf16.mxu0 0
  %754 = vmatpush1.bf16.xpose.msra.mxu0 %v714
  %755 = vmatprep.subr.bf16.mxu0 0
  %756 = vmatpush1.bf16.xpose.msra.mxu0 %v717
  %757 = vmatprep.subr.bf16.mxu0 0
  %758 = vmatpush1.bf16.xpose.msra.mxu0 %v720
  %759 = vmatprep.subr.bf16.mxu0 0
  %760 = vmatpush1.bf16.xpose.msra.mxu0 %v723
  %761 = vmatprep.subr.bf16.mxu0 0
  %762 = vmatpush1.bf16.xpose.msra.mxu0 %v726
  %763 = vmatprep.subr.bf16.mxu0 0
  %764 = vmatpush1.bf16.xpose.msra.mxu0 %v729
  %765 = vmatprep.subr.bf16.mxu0 0
  %766 = vmatpush1.bf16.xpose.msra.mxu0 %v732
  %767 = vmatprep.subr.bf16.mxu0 0
  %768 = vmatpush1.bf16.xpose.msra.mxu0 %v735
  %769 = vmatprep.mubr.bf16.mxu0 0
  %770 = vmatmul.mubr.bf16.gmra.mrb[0].mxu0 %v666
  %v771 = vpop.f32.mrb[0].mxu0
  %v772 = vadd.f32 0.0, %v771
  %v773 = vpop.f32.mrb[0].mxu0
  %v774 = vadd.f32 0.0, %v773
  %v775 = vpop.f32.mrb[0].mxu0
  %v776 = vadd.f32 0.0, %v775
  %v777 = vpop.f32.mrb[0].mxu0
  %v778 = vadd.f32 0.0, %v777
  %779 = vmatprep.mubr.bf16.mxu0 0
  %780 = vmatmul.mubr.bf16.gmra.mrb[0].mxu0 %v669
  %v781 = vpop.f32.mrb[0].mxu0
  %v782 = vadd.f32 0.0, %v781
  %v783 = vpop.f32.mrb[0].mxu0
  %v784 = vadd.f32 0.0, %v783
  %v785 = vpop.f32.mrb[0].mxu0
  %v786 = vadd.f32 0.0, %v785
  %v787 = vpop.f32.mrb[0].mxu0
  %v788 = vadd.f32 0.0, %v787
  %789 = vmatprep.mubr.bf16.mxu0 0
  %790 = vmatmul.mubr.bf16.gmra.mrb[0].mxu0 %v672
  %v791 = vpop.f32.mrb[0].mxu0
  %v792 = vadd.f32 0.0, %v791
  %v793 = vpop.f32.mrb[0].mxu0
  %v794 = vadd.f32 0.0, %v793
  %v795 = vpop.f32.mrb[0].mxu0
  %v796 = vadd.f32 0.0, %v795
  %v797 = vpop.f32.mrb[0].mxu0
  %v798 = vadd.f32 0.0, %v797
  %799 = vmatprep.mubr.bf16.mxu0 0
  %800 = vmatmul.mubr.bf16.gmra.mrb[0].mxu0 %v675
  %v801 = vpop.f32.mrb[0].mxu0
  %v802 = vadd.f32 0.0, %v801
  %v803 = vpop.f32.mrb[0].mxu0
  %v804 = vadd.f32 0.0, %v803
  %v805 = vpop.f32.mrb[0].mxu0
  %v806 = vadd.f32 0.0, %v805
  %v807 = vpop.f32.mrb[0].mxu0
  %v808 = vadd.f32 0.0, %v807
  %809 = vmatprep.mubr.bf16.mxu0 0
  %810 = vmatmul.mubr.bf16.gmra.mrb[0].mxu0 %v678
  %v811 = vpop.f32.mrb[0].mxu0
  %v812 = vadd.f32 0.0, %v811
  %v813 = vpop.f32.mrb[0].mxu0
  %v814 = vadd.f32 0.0, %v813
  %v815 = vpop.f32.mrb[0].mxu0
  %v816 = vadd.f32 0.0, %v815
  %v817 = vpop.f32.mrb[0].mxu0
  %v818 = vadd.f32 0.0, %v817
  %819 = vmatprep.mubr.bf16.mxu0 0
  %820 = vmatmul.mubr.bf16.gmra.mrb[0].mxu0 %v681
  %v821 = vpop.f32.mrb[0].mxu0
  %v822 = vadd.f32 0.0, %v821
  %v823 = vpop.f32.mrb[0].mxu0
  %v824 = vadd.f32 0.0, %v823
  %v825 = vpop.f32.mrb[0].mxu0
  %v826 = vadd.f32 0.0, %v825
  %v827 = vpop.f32.mrb[0].mxu0
  %v828 = vadd.f32 0.0, %v827
  %829 = vmatprep.mubr.bf16.mxu0 0
  %830 = vmatmul.mubr.bf16.gmra.mrb[0].mxu0 %v684
  %v831 = vpop.f32.mrb[0].mxu0
  %v832 = vadd.f32 0.0, %v831
  %v833 = vpop.f32.mrb[0].mxu0
  %v834 = vadd.f32 0.0, %v833
  %v835 = vpop.f32.mrb[0].mxu0
  %v836 = vadd.f32 0.0, %v835
  %v837 = vpop.f32.mrb[0].mxu0
  %v838 = vadd.f32 0.0, %v837
  %839 = vmatprep.mubr.bf16.mxu0 0
  %840 = vmatmul.mubr.bf16.gmra.mrb[0].mxu0 %v687
  %v841 = vpop.f32.mrb[0].mxu0
  %v842 = vadd.f32 0.0, %v841
  %v843 = vpop.f32.mrb[0].mxu0
  %v844 = vadd.f32 0.0, %v843
  %v845 = vpop.f32.mrb[0].mxu0
  %v846 = vadd.f32 0.0, %v845
  %v847 = vpop.f32.mrb[0].mxu0
  %v848 = vadd.f32 0.0, %v847
  %849 = vdwg.mxu0
  %v882 = vunpack.c.l.b16 %v521
  %v883 = vunpack.c.l.b16 %v522
  %v884 = vunpack.c.l.b16 %v523
  %v885 = vunpack.c.l.b16 %v524
  %v886 = vunpack.c.l.b16 %v525
  %v887 = vunpack.c.l.b16 %v526
  %v888 = vunpack.c.l.b16 %v527
  %v889 = vunpack.c.l.b16 %v528
  %v890 = vunpack.c.l.b16 %v529
  %v891 = vunpack.c.l.b16 %v530
  %v892 = vunpack.c.l.b16 %v531
  %v893 = vunpack.c.l.b16 %v532
  %v894 = vunpack.c.l.b16 %v533
  %v895 = vunpack.c.l.b16 %v534
  %v896 = vunpack.c.l.b16 %v535
  %v897 = vunpack.c.l.b16 %v536
  %v898 = vunpack.c.l.b16 %v537
  %v899 = vunpack.c.l.b16 %v538
  %v900 = vunpack.c.l.b16 %v539
  %v901 = vunpack.c.l.b16 %v540
  %v902 = vunpack.c.l.b16 %v541
  %v903 = vunpack.c.l.b16 %v542
  %v904 = vunpack.c.l.b16 %v543
  %v905 = vunpack.c.l.b16 %v544
  %v906 = vunpack.c.l.b16 %v545
  %v907 = vunpack.c.l.b16 %v546
  %v908 = vunpack.c.l.b16 %v547
  %v909 = vunpack.c.l.b16 %v548
  %v910 = vunpack.c.l.b16 %v549
  %v911 = vunpack.c.l.b16 %v550
  %v912 = vunpack.c.l.b16 %v551
  %v913 = vunpack.c.l.b16 %v552
  %v914 = vpack.c.b16 %v883, %v882
  %v915 = vpack.c.b16 %v885, %v884
  %v916 = vpack.c.b16 %v887, %v886
  %v917 = vpack.c.b16 %v889, %v888
  %v918 = vpack.c.b16 %v891, %v890
  %v919 = vpack.c.b16 %v893, %v892
  %v920 = vpack.c.b16 %v895, %v894
  %v921 = vpack.c.b16 %v897, %v896
  %v922 = vpack.c.b16 %v899, %v898
  %v923 = vpack.c.b16 %v901, %v900
  %v924 = vpack.c.b16 %v903, %v902
  %v925 = vpack.c.b16 %v905, %v904
  %v926 = vpack.c.b16 %v907, %v906
  %v927 = vpack.c.b16 %v909, %v908
  %v928 = vpack.c.b16 %v911, %v910
  %v929 = vpack.c.b16 %v913, %v912
  %v931 = vsel %vm130, %v52, 0
  %v934 = vsel %vm130, %v53, 0
  %v937 = vsel %vm130, %v54, 0
  %v940 = vsel %vm130, %v55, 0
  %v943 = vsel %vm130, %v56, 0
  %v946 = vsel %vm130, %v57, 0
  %v949 = vsel %vm130, %v58, 0
  %v952 = vsel %vm130, %v59, 0
  %v955 = vsel %vm130, %v914, 0
  %v958 = vsel %vm130, %v915, 0
  %v961 = vsel %vm130, %v916, 0
  %v964 = vsel %vm130, %v917, 0
  %v967 = vsel %vm130, %v918, 0
  %v970 = vsel %vm130, %v919, 0
  %v973 = vsel %vm130, %v920, 0
  %v976 = vsel %vm130, %v921, 0
  %v979 = vsel %vm130, %v922, 0
  %v982 = vsel %vm130, %v923, 0
  %v985 = vsel %vm130, %v924, 0
  %v988 = vsel %vm130, %v925, 0
  %v991 = vsel %vm130, %v926, 0
  %v994 = vsel %vm130, %v927, 0
  %v997 = vsel %vm130, %v928, 0
  %v1000 = vsel %vm130, %v929, 0
  %1002 = vmatprep.subr.bf16.mxu0 0
  %1003 = vmatpush1.bf16.xpose.msra.mxu0 %v955
  %1004 = vmatprep.subr.bf16.mxu0 0
  %1005 = vmatpush1.bf16.xpose.msra.mxu0 %v958
  %1006 = vmatprep.subr.bf16.mxu0 0
  %1007 = vmatpush1.bf16.xpose.msra.mxu0 %v961
  %1008 = vmatprep.subr.bf16.mxu0 0
  %1009 = vmatpush1.bf16.xpose.msra.mxu0 %v964
  %1010 = vmatprep.subr.bf16.mxu0 0
  %1011 = vmatpush1.bf16.xpose.msra.mxu0 %v967
  %1012 = vmatprep.subr.bf16.mxu0 0
  %1013 = vmatpush1.bf16.xpose.msra.mxu0 %v970
  %1014 = vmatprep.subr.bf16.mxu0 0
  %1015 = vmatpush1.bf16.xpose.msra.mxu0 %v973
  %1016 = vmatprep.subr.bf16.mxu0 0
  %1017 = vmatpush1.bf16.xpose.msra.mxu0 %v976
  %1018 = vmatprep.subr.bf16.mxu0 0
  %1019 = vmatpush1.bf16.xpose.msra.mxu0 %v979
  %1020 = vmatprep.subr.bf16.mxu0 0
  %1021 = vmatpush1.bf16.xpose.msra.mxu0 %v982
  %1022 = vmatprep.subr.bf16.mxu0 0
  %1023 = vmatpush1.bf16.xpose.msra.mxu0 %v985
  %1024 = vmatprep.subr.bf16.mxu0 0
  %1025 = vmatpush1.bf16.xpose.msra.mxu0 %v988
  %1026 = vmatprep.subr.bf16.mxu0 0
  %1027 = vmatpush1.bf16.xpose.msra.mxu0 %v991
  %1028 = vmatprep.subr.bf16.mxu0 0
  %1029 = vmatpush1.bf16.xpose.msra.mxu0 %v994
  %1030 = vmatprep.subr.bf16.mxu0 0
  %1031 = vmatpush1.bf16.xpose.msra.mxu0 %v997
  %1032 = vmatprep.subr.bf16.mxu0 0
  %1033 = vmatpush1.bf16.xpose.msra.mxu0 %v1000
  %1034 = vmatprep.mubr.bf16.mxu0 0
  %1035 = vmatmul.mubr.bf16.gmra.mrb[0].mxu0 %v931
  %v1036 = vpop.f32.mrb[0].mxu0
  %v1037 = vadd.f32 %v772, %v1036
  %v1038 = vpop.f32.mrb[0].mxu0
  %v1039 = vadd.f32 %v774, %v1038
  %v1040 = vpop.f32.mrb[0].mxu0
  %v1041 = vadd.f32 %v776, %v1040
  %v1042 = vpop.f32.mrb[0].mxu0
  %v1043 = vadd.f32 %v778, %v1042
  %1044 = vmatprep.mubr.bf16.mxu0 0
  %1045 = vmatmul.mubr.bf16.gmra.mrb[0].mxu0 %v934
  %v1046 = vpop.f32.mrb[0].mxu0
  %v1047 = vadd.f32 %v782, %v1046
  %v1048 = vpop.f32.mrb[0].mxu0
  %v1049 = vadd.f32 %v784, %v1048
  %v1050 = vpop.f32.mrb[0].mxu0
  %v1051 = vadd.f32 %v786, %v1050
  %v1052 = vpop.f32.mrb[0].mxu0
  %v1053 = vadd.f32 %v788, %v1052
  %1054 = vmatprep.mubr.bf16.mxu0 0
  %1055 = vmatmul.mubr.bf16.gmra.mrb[0].mxu0 %v937
  %v1056 = vpop.f32.mrb[0].mxu0
  %v1057 = vadd.f32 %v792, %v1056
  %v1058 = vpop.f32.mrb[0].mxu0
  %v1059 = vadd.f32 %v794, %v1058
  %v1060 = vpop.f32.mrb[0].mxu0
  %v1061 = vadd.f32 %v796, %v1060
  %v1062 = vpop.f32.mrb[0].mxu0
  %v1063 = vadd.f32 %v798, %v1062
  %1064 = vmatprep.mubr.bf16.mxu0 0
  %1065 = vmatmul.mubr.bf16.gmra.mrb[0].mxu0 %v940
  %v1066 = vpop.f32.mrb[0].mxu0
  %v1067 = vadd.f32 %v802, %v1066
  %v1068 = vpop.f32.mrb[0].mxu0
  %v1069 = vadd.f32 %v804, %v1068
  %v1070 = vpop.f32.mrb[0].mxu0
  %v1071 = vadd.f32 %v806, %v1070
  %v1072 = vpop.f32.mrb[0].mxu0
  %v1073 = vadd.f32 %v808, %v1072
  %1074 = vmatprep.mubr.bf16.mxu0 0
  %1075 = vmatmul.mubr.bf16.gmra.mrb[0].mxu0 %v943
  %v1076 = vpop.f32.mrb[0].mxu0
  %v1077 = vadd.f32 %v812, %v1076
  %v1078 = vpop.f32.mrb[0].mxu0
  %v1079 = vadd.f32 %v814, %v1078
  %v1080 = vpop.f32.mrb[0].mxu0
  %v1081 = vadd.f32 %v816, %v1080
  %v1082 = vpop.f32.mrb[0].mxu0
  %v1083 = vadd.f32 %v818, %v1082
  %1084 = vmatprep.mubr.bf16.mxu0 0
  %1085 = vmatmul.mubr.bf16.gmra.mrb[0].mxu0 %v946
  %v1086 = vpop.f32.mrb[0].mxu0
  %v1087 = vadd.f32 %v822, %v1086
  %v1088 = vpop.f32.mrb[0].mxu0
  %v1089 = vadd.f32 %v824, %v1088
  %v1090 = vpop.f32.mrb[0].mxu0
  %v1091 = vadd.f32 %v826, %v1090
  %v1092 = vpop.f32.mrb[0].mxu0
  %v1093 = vadd.f32 %v828, %v1092
  %1094 = vmatprep.mubr.bf16.mxu0 0
  %1095 = vmatmul.mubr.bf16.gmra.mrb[0].mxu0 %v949
  %v1096 = vpop.f32.mrb[0].mxu0
  %v1097 = vadd.f32 %v832, %v1096
  %v1098 = vpop.f32.mrb[0].mxu0
  %v1099 = vadd.f32 %v834, %v1098
  %v1100 = vpop.f32.mrb[0].mxu0
  %v1101 = vadd.f32 %v836, %v1100
  %v1102 = vpop.f32.mrb[0].mxu0
  %v1103 = vadd.f32 %v838, %v1102
  %1104 = vmatprep.mubr.bf16.mxu0 0
  %1105 = vmatmul.mubr.bf16.gmra.mrb[0].mxu0 %v952
  %v1106 = vpop.f32.mrb[0].mxu0
  %v1107 = vadd.f32 %v842, %v1106
  %v1108 = vpop.f32.mrb[0].mxu0
  %v1109 = vadd.f32 %v844, %v1108
  %v1110 = vpop.f32.mrb[0].mxu0
  %v1111 = vadd.f32 %v846, %v1110
  %v1112 = vpop.f32.mrb[0].mxu0
  %v1113 = vadd.f32 %v848, %v1112
  %1114 = vdwg.mxu0
  %v1115 = vmul.f32 %v1037, 0.5
  %v1116 = vmul.f32 %v1039, 0.5
  %v1117 = vmul.f32 %v1041, 0.5
  %v1118 = vmul.f32 %v1043, 0.5
  %v1119 = vmul.f32 %v1047, 0.5
  %v1120 = vmul.f32 %v1049, 0.5
  %v1121 = vmul.f32 %v1051, 0.5
  %v1122 = vmul.f32 %v1053, 0.5
  %v1123 = vmul.f32 %v1057, 0.5
  %v1124 = vmul.f32 %v1059, 0.5
  %v1125 = vmul.f32 %v1061, 0.5
  %v1126 = vmul.f32 %v1063, 0.5
  %v1127 = vmul.f32 %v1067, 0.5
  %v1128 = vmul.f32 %v1069, 0.5
  %v1129 = vmul.f32 %v1071, 0.5
  %v1130 = vmul.f32 %v1073, 0.5
  %v1131 = vmul.f32 %v1077, 0.5
  %v1132 = vmul.f32 %v1079, 0.5
  %v1133 = vmul.f32 %v1081, 0.5
  %v1134 = vmul.f32 %v1083, 0.5
  %v1135 = vmul.f32 %v1087, 0.5
  %v1136 = vmul.f32 %v1089, 0.5
  %v1137 = vmul.f32 %v1091, 0.5
  %v1138 = vmul.f32 %v1093, 0.5
  %v1139 = vmul.f32 %v1097, 0.5
  %v1140 = vmul.f32 %v1099, 0.5
  %v1141 = vmul.f32 %v1101, 0.5
  %v1142 = vmul.f32 %v1103, 0.5
  %v1143 = vmul.f32 %v1107, 0.5
  %v1144 = vmul.f32 %v1109, 0.5
  %v1145 = vmul.f32 %v1111, 0.5
  %v1146 = vmul.f32 %v1113, 0.5
  %v1147 = vmul.f32 %v1037, 0.70710677
  %v1148 = vmul.f32 %v1039, 0.70710677
  %v1149 = vmul.f32 %v1041, 0.70710677
  %v1150 = vmul.f32 %v1043, 0.70710677
  %v1151 = vmul.f32 %v1047, 0.70710677
  %v1152 = vmul.f32 %v1049, 0.70710677
  %v1153 = vmul.f32 %v1051, 0.70710677
  %v1154 = vmul.f32 %v1053, 0.70710677
  %v1155 = vmul.f32 %v1057, 0.70710677
  %v1156 = vmul.f32 %v1059, 0.70710677
  %v1157 = vmul.f32 %v1061, 0.70710677
  %v1158 = vmul.f32 %v1063, 0.70710677
  %v1159 = vmul.f32 %v1067, 0.70710677
  %v1160 = vmul.f32 %v1069, 0.70710677
  %v1161 = vmul.f32 %v1071, 0.70710677
  %v1162 = vmul.f32 %v1073, 0.70710677
  %v1163 = vmul.f32 %v1077, 0.70710677
  %v1164 = vmul.f32 %v1079, 0.70710677
  %v1165 = vmul.f32 %v1081, 0.70710677
  %v1166 = vmul.f32 %v1083, 0.70710677
  %v1167 = vmul.f32 %v1087, 0.70710677
  %v1168 = vmul.f32 %v1089, 0.70710677
  %v1169 = vmul.f32 %v1091, 0.70710677
  %v1170 = vmul.f32 %v1093, 0.70710677
  %v1171 = vmul.f32 %v1097, 0.70710677
  %v1172 = vmul.f32 %v1099, 0.70710677
  %v1173 = vmul.f32 %v1101, 0.70710677
  %v1174 = vmul.f32 %v1103, 0.70710677
  %v1175 = vmul.f32 %v1107, 0.70710677
  %v1176 = vmul.f32 %v1109, 0.70710677
  %v1177 = vmul.f32 %v1111, 0.70710677
  %v1178 = vmul.f32 %v1113, 0.70710677
  %v1179 = verf.f32.pop %v1147
  %v1180 = verf.f32.pop %v1148
  %v1181 = verf.f32.pop %v1149
  %v1182 = verf.f32.pop %v1150
  %v1183 = verf.f32.pop %v1151
  %v1184 = verf.f32.pop %v1152
  %v1185 = verf.f32.pop %v1153
  %v1186 = verf.f32.pop %v1154
  %v1187 = verf.f32.pop %v1155
  %v1188 = verf.f32.pop %v1156
  %v1189 = verf.f32.pop %v1157
  %v1190 = verf.f32.pop %v1158
  %v1191 = verf.f32.pop %v1159
  %v1192 = verf.f32.pop %v1160
  %v1193 = verf.f32.pop %v1161
  %v1194 = verf.f32.pop %v1162
  %v1195 = verf.f32.pop %v1163
  %v1196 = verf.f32.pop %v1164
  %v1197 = verf.f32.pop %v1165
  %v1198 = verf.f32.pop %v1166
  %v1199 = verf.f32.pop %v1167
  %v1200 = verf.f32.pop %v1168
  %v1201 = verf.f32.pop %v1169
  %v1202 = verf.f32.pop %v1170
  %v1203 = verf.f32.pop %v1171
  %v1204 = verf.f32.pop %v1172
  %v1205 = verf.f32.pop %v1173
  %v1206 = verf.f32.pop %v1174
  %v1207 = verf.f32.pop %v1175
  %v1208 = verf.f32.pop %v1176
  %v1209 = verf.f32.pop %v1177
  %v1210 = verf.f32.pop %v1178
  %v1211 = vadd.f32 %v1179, 1.0
  %v1212 = vadd.f32 %v1180, 1.0
  %v1213 = vadd.f32 %v1181, 1.0
  %v1214 = vadd.f32 %v1182, 1.0
  %v1215 = vadd.f32 %v1183, 1.0
  %v1216 = vadd.f32 %v1184, 1.0
  %v1217 = vadd.f32 %v1185, 1.0
  %v1218 = vadd.f32 %v1186, 1.0
  %v1219 = vadd.f32 %v1187, 1.0
  %v1220 = vadd.f32 %v1188, 1.0
  %v1221 = vadd.f32 %v1189, 1.0
  %v1222 = vadd.f32 %v1190, 1.0
  %v1223 = vadd.f32 %v1191, 1.0
  %v1224 = vadd.f32 %v1192, 1.0
  %v1225 = vadd.f32 %v1193, 1.0
  %v1226 = vadd.f32 %v1194, 1.0
  %v1227 = vadd.f32 %v1195, 1.0
  %v1228 = vadd.f32 %v1196, 1.0
  %v1229 = vadd.f32 %v1197, 1.0
  %v1230 = vadd.f32 %v1198, 1.0
  %v1231 = vadd.f32 %v1199, 1.0
  %v1232 = vadd.f32 %v1200, 1.0
  %v1233 = vadd.f32 %v1201, 1.0
  %v1234 = vadd.f32 %v1202, 1.0
  %v1235 = vadd.f32 %v1203, 1.0
  %v1236 = vadd.f32 %v1204, 1.0
  %v1237 = vadd.f32 %v1205, 1.0
  %v1238 = vadd.f32 %v1206, 1.0
  %v1239 = vadd.f32 %v1207, 1.0
  %v1240 = vadd.f32 %v1208, 1.0
  %v1241 = vadd.f32 %v1209, 1.0
  %v1242 = vadd.f32 %v1210, 1.0
  %v1243 = vmul.f32 %v1115, %v1211
  %v1244 = vmul.f32 %v1116, %v1212
  %v1245 = vmul.f32 %v1117, %v1213
  %v1246 = vmul.f32 %v1118, %v1214
  %v1247 = vmul.f32 %v1119, %v1215
  %v1248 = vmul.f32 %v1120, %v1216
  %v1249 = vmul.f32 %v1121, %v1217
  %v1250 = vmul.f32 %v1122, %v1218
  %v1251 = vmul.f32 %v1123, %v1219
  %v1252 = vmul.f32 %v1124, %v1220
  %v1253 = vmul.f32 %v1125, %v1221
  %v1254 = vmul.f32 %v1126, %v1222
  %v1255 = vmul.f32 %v1127, %v1223
  %v1256 = vmul.f32 %v1128, %v1224
  %v1257 = vmul.f32 %v1129, %v1225
  %v1258 = vmul.f32 %v1130, %v1226
  %v1259 = vmul.f32 %v1131, %v1227
  %v1260 = vmul.f32 %v1132, %v1228
  %v1261 = vmul.f32 %v1133, %v1229
  %v1262 = vmul.f32 %v1134, %v1230
  %v1263 = vmul.f32 %v1135, %v1231
  %v1264 = vmul.f32 %v1136, %v1232
  %v1265 = vmul.f32 %v1137, %v1233
  %v1266 = vmul.f32 %v1138, %v1234
  %v1267 = vmul.f32 %v1139, %v1235
  %v1268 = vmul.f32 %v1140, %v1236
  %v1269 = vmul.f32 %v1141, %v1237
  %v1270 = vmul.f32 %v1142, %v1238
  %v1271 = vmul.f32 %v1143, %v1239
  %v1272 = vmul.f32 %v1144, %v1240
  %v1273 = vmul.f32 %v1145, %v1241
  %v1274 = vmul.f32 %v1146, %v1242
  %v1275 = vld [vmem:[%s7] sm:$0xf]
  %v1276 = vld [vmem:[%s7 + $0x4] sm:$0xf]
  %v1277 = vld [vmem:[%s7 + $0x8] sm:$0xf]
  %v1278 = vld [vmem:[%s7 + $0xc] sm:$0xf]
  %v1279 = vld [vmem:[%s7 + $0x10] sm:$0xf]
  %v1280 = vld [vmem:[%s7 + $0x14] sm:$0xf]
  %v1281 = vld [vmem:[%s7 + $0x18] sm:$0xf]
  %v1282 = vld [vmem:[%s7 + $0x1c] sm:$0xf]
  %v1283 = vld [vmem:[%s7 + $0x20] sm:$0xf]
  %v1284 = vld [vmem:[%s7 + $0x24] sm:$0xf]
  %v1285 = vld [vmem:[%s7 + $0x28] sm:$0xf]
  %v1286 = vld [vmem:[%s7 + $0x2c] sm:$0xf]
  %v1287 = vld [vmem:[%s7 + $0x30] sm:$0xf]
  %v1288 = vld [vmem:[%s7 + $0x34] sm:$0xf]
  %v1289 = vld [vmem:[%s7 + $0x38] sm:$0xf]
  %v1290 = vld [vmem:[%s7 + $0x3c] sm:$0xf]
  %v1291 = vld [vmem:[%s7 + $0x40] sm:$0xf]
  %v1292 = vld [vmem:[%s7 + $0x44] sm:$0xf]
  %v1293 = vld [vmem:[%s7 + $0x48] sm:$0xf]
  %v1294 = vld [vmem:[%s7 + $0x4c] sm:$0xf]
  %v1295 = vld [vmem:[%s7 + $0x50] sm:$0xf]
  %v1296 = vld [vmem:[%s7 + $0x54] sm:$0xf]
  %v1297 = vld [vmem:[%s7 + $0x58] sm:$0xf]
  %v1298 = vld [vmem:[%s7 + $0x5c] sm:$0xf]
  %v1299 = vld [vmem:[%s7 + $0x60] sm:$0xf]
  %v1300 = vld [vmem:[%s7 + $0x64] sm:$0xf]
  %v1301 = vld [vmem:[%s7 + $0x68] sm:$0xf]
  %v1302 = vld [vmem:[%s7 + $0x6c] sm:$0xf]
  %v1303 = vld [vmem:[%s7 + $0x70] sm:$0xf]
  %v1304 = vld [vmem:[%s7 + $0x74] sm:$0xf]
  %v1305 = vld [vmem:[%s7 + $0x78] sm:$0xf]
  %v1306 = vld [vmem:[%s7 + $0x7c] sm:$0xf]
  %v1307 = vpack.c.bf16 %v1245, %v1243
  %v1308 = vpack.c.bf16 %v1246, %v1244
  %v1309 = vpack.c.bf16 %v1249, %v1247
  %v1310 = vpack.c.bf16 %v1250, %v1248
  %v1311 = vpack.c.bf16 %v1253, %v1251
  %v1312 = vpack.c.bf16 %v1254, %v1252
  %v1313 = vpack.c.bf16 %v1257, %v1255
  %v1314 = vpack.c.bf16 %v1258, %v1256
  %v1315 = vpack.c.bf16 %v1261, %v1259
  %v1316 = vpack.c.bf16 %v1262, %v1260
  %v1317 = vpack.c.bf16 %v1265, %v1263
  %v1318 = vpack.c.bf16 %v1266, %v1264
  %v1319 = vpack.c.bf16 %v1269, %v1267
  %v1320 = vpack.c.bf16 %v1270, %v1268
  %v1321 = vpack.c.bf16 %v1273, %v1271
  %v1322 = vpack.c.bf16 %v1274, %v1272
  %v1355 = vunpack.c.l.b16 %v1275
  %v1356 = vunpack.c.l.b16 %v1276
  %v1357 = vunpack.c.l.b16 %v1277
  %v1358 = vunpack.c.l.b16 %v1278
  %v1359 = vunpack.c.l.b16 %v1279
  %v1360 = vunpack.c.l.b16 %v1280
  %v1361 = vunpack.c.l.b16 %v1281
  %v1362 = vunpack.c.l.b16 %v1282
  %v1363 = vunpack.c.l.b16 %v1283
  %v1364 = vunpack.c.l.b16 %v1284
  %v1365 = vunpack.c.l.b16 %v1285
  %v1366 = vunpack.c.l.b16 %v1286
  %v1367 = vunpack.c.l.b16 %v1287
  %v1368 = vunpack.c.l.b16 %v1288
  %v1369 = vunpack.c.l.b16 %v1289
  %v1370 = vunpack.c.l.b16 %v1290
  %v1371 = vunpack.c.l.b16 %v1291
  %v1372 = vunpack.c.l.b16 %v1292
  %v1373 = vunpack.c.l.b16 %v1293
  %v1374 = vunpack.c.l.b16 %v1294
  %v1375 = vunpack.c.l.b16 %v1295
  %v1376 = vunpack.c.l.b16 %v1296
  %v1377 = vunpack.c.l.b16 %v1297
  %v1378 = vunpack.c.l.b16 %v1298
  %v1379 = vunpack.c.l.b16 %v1299
  %v1380 = vunpack.c.l.b16 %v1300
  %v1381 = vunpack.c.l.b16 %v1301
  %v1382 = vunpack.c.l.b16 %v1302
  %v1383 = vunpack.c.l.b16 %v1303
  %v1384 = vunpack.c.l.b16 %v1304
  %v1385 = vunpack.c.l.b16 %v1305
  %v1386 = vunpack.c.l.b16 %v1306
  %v1387 = vpack.c.b16 %v1356, %v1355
  %v1388 = vpack.c.b16 %v1358, %v1357
  %v1389 = vpack.c.b16 %v1360, %v1359
  %v1390 = vpack.c.b16 %v1362, %v1361
  %v1391 = vpack.c.b16 %v1364, %v1363
  %v1392 = vpack.c.b16 %v1366, %v1365
  %v1393 = vpack.c.b16 %v1368, %v1367
  %v1394 = vpack.c.b16 %v1370, %v1369
  %v1395 = vpack.c.b16 %v1372, %v1371
  %v1396 = vpack.c.b16 %v1374, %v1373
  %v1397 = vpack.c.b16 %v1376, %v1375
  %v1398 = vpack.c.b16 %v1378, %v1377
  %v1399 = vpack.c.b16 %v1380, %v1379
  %v1400 = vpack.c.b16 %v1382, %v1381
  %v1401 = vpack.c.b16 %v1384, %v1383
  %v1402 = vpack.c.b16 %v1386, %v1385
  %1419 = vmatprep.subr.bf16.mxu0 0
  %1420 = vmatpush1.bf16.msra.mxu0 %v1387
  %1421 = vmatprep.subr.bf16.mxu0 0
  %1422 = vmatpush1.bf16.msra.mxu0 %v1388
  %1423 = vmatprep.subr.bf16.mxu0 0
  %1424 = vmatpush1.bf16.msra.mxu0 %v1389
  %1425 = vmatprep.subr.bf16.mxu0 0
  %1426 = vmatpush1.bf16.msra.mxu0 %v1390
  %1427 = vmatprep.subr.bf16.mxu0 0
  %1428 = vmatpush1.bf16.msra.mxu0 %v1391
  %1429 = vmatprep.subr.bf16.mxu0 0
  %1430 = vmatpush1.bf16.msra.mxu0 %v1392
  %1431 = vmatprep.subr.bf16.mxu0 0
  %1432 = vmatpush1.bf16.msra.mxu0 %v1393
  %1433 = vmatprep.subr.bf16.mxu0 0
  %1434 = vmatpush1.bf16.msra.mxu0 %v1394
  %1435 = vmatprep.subr.bf16.mxu0 0
  %1436 = vmatpush1.bf16.msra.mxu0 %v1395
  %1437 = vmatprep.subr.bf16.mxu0 0
  %1438 = vmatpush1.bf16.msra.mxu0 %v1396
  %1439 = vmatprep.subr.bf16.mxu0 0
  %1440 = vmatpush1.bf16.msra.mxu0 %v1397
  %1441 = vmatprep.subr.bf16.mxu0 0
  %1442 = vmatpush1.bf16.msra.mxu0 %v1398
  %1443 = vmatprep.subr.bf16.mxu0 0
  %1444 = vmatpush1.bf16.msra.mxu0 %v1399
  %1445 = vmatprep.subr.bf16.mxu0 0
  %1446 = vmatpush1.bf16.msra.mxu0 %v1400
  %1447 = vmatprep.subr.bf16.mxu0 0
  %1448 = vmatpush1.bf16.msra.mxu0 %v1401
  %1449 = vmatprep.subr.bf16.mxu0 0
  %1450 = vmatpush1.bf16.msra.mxu0 %v1402
  %1451 = vmatprep.mubr.bf16.mxu0 %v1308
  %1452 = vmatmul.mubr.bf16.gmra.mrb[0].mxu0 %v1307
  %v1453 = vpop.f32.mrb[0].mxu0
  %v1454 = vadd.f32 0.0, %v1453
  %v1455 = vpop.f32.mrb[0].mxu0
  %v1456 = vpop.f32.mrb[0].mxu0
  %v1457 = vadd.f32 0.0, %v1456
  %v1458 = vpop.f32.mrb[0].mxu0
  %1459 = vmatprep.mubr.bf16.mxu0 %v1310
  %1460 = vmatmul.mubr.bf16.gmra.mrb[0].mxu0 %v1309
  %v1461 = vpop.f32.mrb[0].mxu0
  %v1462 = vadd.f32 0.0, %v1461
  %v1463 = vpop.f32.mrb[0].mxu0
  %v1464 = vpop.f32.mrb[0].mxu0
  %v1465 = vadd.f32 0.0, %v1464
  %v1466 = vpop.f32.mrb[0].mxu0
  %1467 = vmatprep.mubr.bf16.mxu0 %v1312
  %1468 = vmatmul.mubr.bf16.gmra.mrb[0].mxu0 %v1311
  %v1469 = vpop.f32.mrb[0].mxu0
  %v1470 = vadd.f32 0.0, %v1469
  %v1471 = vpop.f32.mrb[0].mxu0
  %v1472 = vpop.f32.mrb[0].mxu0
  %v1473 = vadd.f32 0.0, %v1472
  %v1474 = vpop.f32.mrb[0].mxu0
  %1475 = vmatprep.mubr.bf16.mxu0 %v1314
  %1476 = vmatmul.mubr.bf16.gmra.mrb[0].mxu0 %v1313
  %v1477 = vpop.f32.mrb[0].mxu0
  %v1478 = vadd.f32 0.0, %v1477
  %v1479 = vpop.f32.mrb[0].mxu0
  %v1480 = vpop.f32.mrb[0].mxu0
  %v1481 = vadd.f32 0.0, %v1480
  %v1482 = vpop.f32.mrb[0].mxu0
  %1483 = vmatprep.mubr.bf16.mxu0 %v1316
  %1484 = vmatmul.mubr.bf16.gmra.mrb[0].mxu0 %v1315
  %v1485 = vpop.f32.mrb[0].mxu0
  %v1486 = vadd.f32 0.0, %v1485
  %v1487 = vpop.f32.mrb[0].mxu0
  %v1488 = vpop.f32.mrb[0].mxu0
  %v1489 = vadd.f32 0.0, %v1488
  %v1490 = vpop.f32.mrb[0].mxu0
  %1491 = vmatprep.mubr.bf16.mxu0 %v1318
  %1492 = vmatmul.mubr.bf16.gmra.mrb[0].mxu0 %v1317
  %v1493 = vpop.f32.mrb[0].mxu0
  %v1494 = vadd.f32 0.0, %v1493
  %v1495 = vpop.f32.mrb[0].mxu0
  %v1496 = vpop.f32.mrb[0].mxu0
  %v1497 = vadd.f32 0.0, %v1496
  %v1498 = vpop.f32.mrb[0].mxu0
  %1499 = vmatprep.mubr.bf16.mxu0 %v1320
  %1500 = vmatmul.mubr.bf16.gmra.mrb[0].mxu0 %v1319
  %v1501 = vpop.f32.mrb[0].mxu0
  %v1502 = vadd.f32 0.0, %v1501
  %v1503 = vpop.f32.mrb[0].mxu0
  %v1504 = vpop.f32.mrb[0].mxu0
  %v1505 = vadd.f32 0.0, %v1504
  %v1506 = vpop.f32.mrb[0].mxu0
  %1507 = vmatprep.mubr.bf16.mxu0 %v1322
  %1508 = vmatmul.mubr.bf16.gmra.mrb[0].mxu0 %v1321
  %v1509 = vpop.f32.mrb[0].mxu0
  %v1510 = vadd.f32 0.0, %v1509
  %v1511 = vpop.f32.mrb[0].mxu0
  %v1512 = vpop.f32.mrb[0].mxu0
  %v1513 = vadd.f32 0.0, %v1512
  %v1514 = vpop.f32.mrb[0].mxu0
  %1515 = vdwg.mxu0
  %v1516 = vld [vmem:[%s8] sm:$0x1]
  %v1517 = vld [vmem:[%s9] sm:$0x1]
  %v1518 = vsel %vm130, %v1454, 0.0
  %1519 = vadd.xlane.f32.xlu0 %v1518
  %v1520 = vpop.xlane.xlu0 %1519
  %v1521 = vsel %vm130, %v1457, 0.0
  %1522 = vadd.xlane.f32.xlu0 %v1521
  %v1523 = vpop.xlane.xlu0 %1522
  %v1524 = vsel %vm130, %v1462, 0.0
  %1525 = vadd.xlane.f32.xlu0 %v1524
  %v1526 = vpop.xlane.xlu0 %1525
  %v1527 = vsel %vm130, %v1465, 0.0
  %1528 = vadd.xlane.f32.xlu0 %v1527
  %v1529 = vpop.xlane.xlu0 %1528
  %v1530 = vsel %vm130, %v1470, 0.0
  %1531 = vadd.xlane.f32.xlu0 %v1530
  %v1532 = vpop.xlane.xlu0 %1531
  %v1533 = vsel %vm130, %v1473, 0.0
  %1534 = vadd.xlane.f32.xlu0 %v1533
  %v1535 = vpop.xlane.xlu0 %1534
  %v1536 = vsel %vm130, %v1478, 0.0
  %1537 = vadd.xlane.f32.xlu0 %v1536
  %v1538 = vpop.xlane.xlu0 %1537
  %v1539 = vsel %vm130, %v1481, 0.0
  %1540 = vadd.xlane.f32.xlu0 %v1539
  %v1541 = vpop.xlane.xlu0 %1540
  %v1542 = vsel %vm130, %v1486, 0.0
  %1543 = vadd.xlane.f32.xlu0 %v1542
  %v1544 = vpop.xlane.xlu0 %1543
  %v1545 = vsel %vm130, %v1489, 0.0
  %1546 = vadd.xlane.f32.xlu0 %v1545
  %v1547 = vpop.xlane.xlu0 %1546
  %v1548 = vsel %vm130, %v1494, 0.0
  %1549 = vadd.xlane.f32.xlu0 %v1548
  %v1550 = vpop.xlane.xlu0 %1549
  %v1551 = vsel %vm130, %v1497, 0.0
  %1552 = vadd.xlane.f32.xlu0 %v1551
  %v1553 = vpop.xlane.xlu0 %1552
  %v1554 = vsel %vm130, %v1502, 0.0
  %1555 = vadd.xlane.f32.xlu0 %v1554
  %v1556 = vpop.xlane.xlu0 %1555
  %v1557 = vsel %vm130, %v1505, 0.0
  %1558 = vadd.xlane.f32.xlu0 %v1557
  %v1559 = vpop.xlane.xlu0 %1558
  %v1560 = vsel %vm130, %v1510, 0.0
  %1561 = vadd.xlane.f32.xlu0 %v1560
  %v1562 = vpop.xlane.xlu0 %1561
  %v1563 = vsel %vm130, %v1513, 0.0
  %1564 = vadd.xlane.f32.xlu0 %v1563
  %v1565 = vpop.xlane.xlu0 %1564
  %v1566 = vmul.f32 %v1520, %v308
  %v1567 = vmul.f32 %v1523, %v308
  %v1568 = vmul.f32 %v1526, %v308
  %v1569 = vmul.f32 %v1529, %v308
  %v1570 = vmul.f32 %v1532, %v308
  %v1571 = vmul.f32 %v1535, %v308
  %v1572 = vmul.f32 %v1538, %v308
  %v1573 = vmul.f32 %v1541, %v308
  %v1574 = vmul.f32 %v1544, %v308
  %v1575 = vmul.f32 %v1547, %v308
  %v1576 = vmul.f32 %v1550, %v308
  %v1577 = vmul.f32 %v1553, %v308
  %v1578 = vmul.f32 %v1556, %v308
  %v1579 = vmul.f32 %v1559, %v308
  %v1580 = vmul.f32 %v1562, %v308
  %v1581 = vmul.f32 %v1565, %v308
  %v1582 = vsub.f32 %v1454, %v1566
  %v1583 = vsub.f32 %v1457, %v1567
  %v1584 = vsub.f32 %v1462, %v1568
  %v1585 = vsub.f32 %v1465, %v1569
  %v1586 = vsub.f32 %v1470, %v1570
  %v1587 = vsub.f32 %v1473, %v1571
  %v1588 = vsub.f32 %v1478, %v1572
  %v1589 = vsub.f32 %v1481, %v1573
  %v1590 = vsub.f32 %v1486, %v1574
  %v1591 = vsub.f32 %v1489, %v1575
  %v1592 = vsub.f32 %v1494, %v1576
  %v1593 = vsub.f32 %v1497, %v1577
  %v1594 = vsub.f32 %v1502, %v1578
  %v1595 = vsub.f32 %v1505, %v1579
  %v1596 = vsub.f32 %v1510, %v1580
  %v1597 = vsub.f32 %v1513, %v1581
  %v1598 = vmul.f32 %v1582, %v1582
  %v1599 = vmul.f32 %v1583, %v1583
  %v1600 = vmul.f32 %v1584, %v1584
  %v1601 = vmul.f32 %v1585, %v1585
  %v1602 = vmul.f32 %v1586, %v1586
  %v1603 = vmul.f32 %v1587, %v1587
  %v1604 = vmul.f32 %v1588, %v1588
  %v1605 = vmul.f32 %v1589, %v1589
  %v1606 = vmul.f32 %v1590, %v1590
  %v1607 = vmul.f32 %v1591, %v1591
  %v1608 = vmul.f32 %v1592, %v1592
  %v1609 = vmul.f32 %v1593, %v1593
  %v1610 = vmul.f32 %v1594, %v1594
  %v1611 = vmul.f32 %v1595, %v1595
  %v1612 = vmul.f32 %v1596, %v1596
  %v1613 = vmul.f32 %v1597, %v1597
  %v1614 = vsel %vm130, %v1598, 0.0
  %1615 = vadd.xlane.f32.xlu0 %v1614
  %v1616 = vpop.xlane.xlu0 %1615
  %v1617 = vsel %vm130, %v1599, 0.0
  %1618 = vadd.xlane.f32.xlu0 %v1617
  %v1619 = vpop.xlane.xlu0 %1618
  %v1620 = vsel %vm130, %v1600, 0.0
  %1621 = vadd.xlane.f32.xlu0 %v1620
  %v1622 = vpop.xlane.xlu0 %1621
  %v1623 = vsel %vm130, %v1601, 0.0
  %1624 = vadd.xlane.f32.xlu0 %v1623
  %v1625 = vpop.xlane.xlu0 %1624
  %v1626 = vsel %vm130, %v1602, 0.0
  %1627 = vadd.xlane.f32.xlu0 %v1626
  %v1628 = vpop.xlane.xlu0 %1627
  %v1629 = vsel %vm130, %v1603, 0.0
  %1630 = vadd.xlane.f32.xlu0 %v1629
  %v1631 = vpop.xlane.xlu0 %1630
  %v1632 = vsel %vm130, %v1604, 0.0
  %1633 = vadd.xlane.f32.xlu0 %v1632
  %v1634 = vpop.xlane.xlu0 %1633
  %v1635 = vsel %vm130, %v1605, 0.0
  %1636 = vadd.xlane.f32.xlu0 %v1635
  %v1637 = vpop.xlane.xlu0 %1636
  %v1638 = vsel %vm130, %v1606, 0.0
  %1639 = vadd.xlane.f32.xlu0 %v1638
  %v1640 = vpop.xlane.xlu0 %1639
  %v1641 = vsel %vm130, %v1607, 0.0
  %1642 = vadd.xlane.f32.xlu0 %v1641
  %v1643 = vpop.xlane.xlu0 %1642
  %v1644 = vsel %vm130, %v1608, 0.0
  %1645 = vadd.xlane.f32.xlu0 %v1644
  %v1646 = vpop.xlane.xlu0 %1645
  %v1647 = vsel %vm130, %v1609, 0.0
  %1648 = vadd.xlane.f32.xlu0 %v1647
  %v1649 = vpop.xlane.xlu0 %1648
  %v1650 = vsel %vm130, %v1610, 0.0
  %1651 = vadd.xlane.f32.xlu0 %v1650
  %v1652 = vpop.xlane.xlu0 %1651
  %v1653 = vsel %vm130, %v1611, 0.0
  %1654 = vadd.xlane.f32.xlu0 %v1653
  %v1655 = vpop.xlane.xlu0 %1654
  %v1656 = vsel %vm130, %v1612, 0.0
  %1657 = vadd.xlane.f32.xlu0 %v1656
  %v1658 = vpop.xlane.xlu0 %1657
  %v1659 = vsel %vm130, %v1613, 0.0
  %1660 = vadd.xlane.f32.xlu0 %v1659
  %v1661 = vpop.xlane.xlu0 %1660
  %v1662 = vmul.f32 %v1616, %v308
  %v1663 = vmul.f32 %v1619, %v308
  %v1664 = vmul.f32 %v1622, %v308
  %v1665 = vmul.f32 %v1625, %v308
  %v1666 = vmul.f32 %v1628, %v308
  %v1667 = vmul.f32 %v1631, %v308
  %v1668 = vmul.f32 %v1634, %v308
  %v1669 = vmul.f32 %v1637, %v308
  %v1670 = vmul.f32 %v1640, %v308
  %v1671 = vmul.f32 %v1643, %v308
  %v1672 = vmul.f32 %v1646, %v308
  %v1673 = vmul.f32 %v1649, %v308
  %v1674 = vmul.f32 %v1652, %v308
  %v1675 = vmul.f32 %v1655, %v308
  %v1676 = vmul.f32 %v1658, %v308
  %v1677 = vmul.f32 %v1661, %v308
  %v1678 = vadd.f32 %v1662, 1e-05
  %v1679 = vadd.f32 %v1663, 1e-05
  %v1680 = vadd.f32 %v1664, 1e-05
  %v1681 = vadd.f32 %v1665, 1e-05
  %v1682 = vadd.f32 %v1666, 1e-05
  %v1683 = vadd.f32 %v1667, 1e-05
  %v1684 = vadd.f32 %v1668, 1e-05
  %v1685 = vadd.f32 %v1669, 1e-05
  %v1686 = vadd.f32 %v1670, 1e-05
  %v1687 = vadd.f32 %v1671, 1e-05
  %v1688 = vadd.f32 %v1672, 1e-05
  %v1689 = vadd.f32 %v1673, 1e-05
  %v1690 = vadd.f32 %v1674, 1e-05
  %v1691 = vadd.f32 %v1675, 1e-05
  %v1692 = vadd.f32 %v1676, 1e-05
  %v1693 = vadd.f32 %v1677, 1e-05
  %v1694 = vrsqrt.pop %v1678
  %v1695 = vrsqrt.pop %v1679
  %v1696 = vrsqrt.pop %v1680
  %v1697 = vrsqrt.pop %v1681
  %v1698 = vrsqrt.pop %v1682
  %v1699 = vrsqrt.pop %v1683
  %v1700 = vrsqrt.pop %v1684
  %v1701 = vrsqrt.pop %v1685
  %v1702 = vrsqrt.pop %v1686
  %v1703 = vrsqrt.pop %v1687
  %v1704 = vrsqrt.pop %v1688
  %v1705 = vrsqrt.pop %v1689
  %v1706 = vrsqrt.pop %v1690
  %v1707 = vrsqrt.pop %v1691
  %v1708 = vrsqrt.pop %v1692
  %v1709 = vrsqrt.pop %v1693
  %v1710 = vmul.f32 %v1582, %v1694
  %v1711 = vmul.f32 %v1583, %v1695
  %v1712 = vmul.f32 %v1584, %v1696
  %v1713 = vmul.f32 %v1585, %v1697
  %v1714 = vmul.f32 %v1586, %v1698
  %v1715 = vmul.f32 %v1587, %v1699
  %v1716 = vmul.f32 %v1588, %v1700
  %v1717 = vmul.f32 %v1589, %v1701
  %v1718 = vmul.f32 %v1590, %v1702
  %v1719 = vmul.f32 %v1591, %v1703
  %v1720 = vmul.f32 %v1592, %v1704
  %v1721 = vmul.f32 %v1593, %v1705
  %v1722 = vmul.f32 %v1594, %v1706
  %v1723 = vmul.f32 %v1595, %v1707
  %v1724 = vmul.f32 %v1596, %v1708
  %v1725 = vmul.f32 %v1597, %v1709
  %v1727 = vlaneseq
  %v1728 = vshrl.u32 %v1727, 7
  %v1729 = vsub.s32 0, %v1728
  %v1730 = vrot.slane %v1516, %v1729
  %v1732 = vmul.f32 %v1710, %v1730
  %v1733 = vmul.f32 %v1711, %v1730
  %v1734 = vmul.f32 %v1712, %v1730
  %v1735 = vmul.f32 %v1713, %v1730
  %v1736 = vmul.f32 %v1714, %v1730
  %v1737 = vmul.f32 %v1715, %v1730
  %v1738 = vmul.f32 %v1716, %v1730
  %v1739 = vmul.f32 %v1717, %v1730
  %v1740 = vmul.f32 %v1718, %v1730
  %v1741 = vmul.f32 %v1719, %v1730
  %v1742 = vmul.f32 %v1720, %v1730
  %v1743 = vmul.f32 %v1721, %v1730
  %v1744 = vmul.f32 %v1722, %v1730
  %v1745 = vmul.f32 %v1723, %v1730
  %v1746 = vmul.f32 %v1724, %v1730
  %v1747 = vmul.f32 %v1725, %v1730
  %v1749 = vlaneseq
  %v1750 = vshrl.u32 %v1749, 7
  %v1751 = vsub.s32 0, %v1750
  %v1752 = vrot.slane %v1517, %v1751
  %v1754 = vadd.f32 %v1732, %v1752
  %v1755 = vadd.f32 %v1733, %v1752
  %v1756 = vadd.f32 %v1734, %v1752
  %v1757 = vadd.f32 %v1735, %v1752
  %v1758 = vadd.f32 %v1736, %v1752
  %v1759 = vadd.f32 %v1737, %v1752
  %v1760 = vadd.f32 %v1738, %v1752
  %v1761 = vadd.f32 %v1739, %v1752
  %v1762 = vadd.f32 %v1740, %v1752
  %v1763 = vadd.f32 %v1741, %v1752
  %v1764 = vadd.f32 %v1742, %v1752
  %v1765 = vadd.f32 %v1743, %v1752
  %v1766 = vadd.f32 %v1744, %v1752
  %v1767 = vadd.f32 %v1745, %v1752
  %v1768 = vadd.f32 %v1746, %v1752
  %v1769 = vadd.f32 %v1747, %v1752
  %v1770 = vadd.f32 %v36, %v1754
  %v1771 = vadd.f32 %v37, %v1755
  %v1772 = vadd.f32 %v38, %v1756
  %v1773 = vadd.f32 %v39, %v1757
  %v1774 = vadd.f32 %v40, %v1758
  %v1775 = vadd.f32 %v41, %v1759
  %v1776 = vadd.f32 %v42, %v1760
  %v1777 = vadd.f32 %v43, %v1761
  %v1778 = vadd.f32 %v44, %v1762
  %v1779 = vadd.f32 %v45, %v1763
  %v1780 = vadd.f32 %v46, %v1764
  %v1781 = vadd.f32 %v47, %v1765
  %v1782 = vadd.f32 %v48, %v1766
  %v1783 = vadd.f32 %v49, %v1767
  %v1784 = vadd.f32 %v50, %v1768
  %v1785 = vadd.f32 %v51, %v1769
  %1786 = vst.msk [vmem:[%s10] sm:$0xff] %vm130, %v1770
  %1787 = vst.msk [vmem:[%s10 + $0x8] sm:$0xff] %vm130, %v1771
  %1788 = vst.msk [vmem:[%s10 + $0x10] sm:$0xff] %vm130, %v1772
  %1789 = vst.msk [vmem:[%s10 + $0x18] sm:$0xff] %vm130, %v1773
  %1790 = vst.msk [vmem:[%s10 + $0x20] sm:$0xff] %vm130, %v1774
  %1791 = vst.msk [vmem:[%s10 + $0x28] sm:$0xff] %vm130, %v1775
  %1792 = vst.msk [vmem:[%s10 + $0x30] sm:$0xff] %vm130, %v1776
  %1793 = vst.msk [vmem:[%s10 + $0x38] sm:$0xff] %vm130, %v1777
  %1794 = vst.msk [vmem:[%s10 + $0x40] sm:$0xff] %vm130, %v1778
  %1795 = vst.msk [vmem:[%s10 + $0x48] sm:$0xff] %vm130, %v1779
  %1796 = vst.msk [vmem:[%s10 + $0x50] sm:$0xff] %vm130, %v1780
  %1797 = vst.msk [vmem:[%s10 + $0x58] sm:$0xff] %vm130, %v1781
  %1798 = vst.msk [vmem:[%s10 + $0x60] sm:$0xff] %vm130, %v1782
  %1799 = vst.msk [vmem:[%s10 + $0x68] sm:$0xff] %vm130, %v1783
  %1800 = vst.msk [vmem:[%s10 + $0x70] sm:$0xff] %vm130, %v1784
  %1801 = vst.msk [vmem:[%s10 + $0x78] sm:$0xff] %vm130, %v1785
  // Predicated region
  $region42: #{maxsa_transformer_forward.5} parent=0 // pred_check
    _
  $region43: #{maxsa_transformer_forward.5} parent=0 // pred_check_branch
    %1803 = sbr.rel (0) target = $region45
  $region44: #{maxsa_transformer_forward.5} parent=0 // pred_region
    _
  $region45: #{maxsa_transformer_forward.5} parent=0 // pred_fallthru
    _
  // Predicated region
  $region46: #{maxsa_transformer_forward.5} parent=0 // pred_check
    _
  $region47: #{maxsa_transformer_forward.5} parent=0 // pred_check_branch
    %1805 = sbr.rel (0) target = $region49
  $region48: #{maxsa_transformer_forward.5} parent=0 // pred_region
    _
  $region49: #{maxsa_transformer_forward.5} parent=0 // pred_fallthru
    _

</llo_original>
